<compile_context>
chip_gen: v6e
topology: v6e:2x2x1
jax: 0.10.0
libtpu: 0.0.40
codegen_flags: <defaults>
</compile_context>

<pallas_src>
import jax
import jax.numpy as jnp
from jax.experimental import pallas as pl
from jax.experimental.pallas import tpu as pltpu

EMB_DIMS = 32
H1 = 512
H2 = 64
BN_EPS = 1e-5


def volume_block_kernel(x_ref, w1_ref, s1_ref, t1_ref,
                        w2_ref, s2_ref, t2_ref, w3_ref, b3_ref, o_ref):
    # x_ref: (D, tile_n) bf16 -- batch on lanes, features on sublanes.
    xT = x_ref[...]

    # Layer 1: Linear (no bias, bf16 MXU) -> folded BN (f32) -> ReLU
    h1 = jnp.dot(w1_ref[...], xT, preferred_element_type=jnp.float32)   # (H1, tn)
    h1 = jnp.maximum(h1 * s1_ref[...] + t1_ref[...], 0.0)

    # Dropout: identity (eval mode)

    # Layer 2: Linear (bias folded into shift, bf16 MXU) -> folded BN -> ReLU
    h2 = jnp.dot(w2_ref[...], h1.astype(jnp.bfloat16),
                 preferred_element_type=jnp.float32)                    # (H2, tn)
    h2 = jnp.maximum(h2 * s2_ref[...] + t2_ref[...], 0.0)

    # Dropout: identity (eval mode)

    # Layer 3: 1-wide Linear as VPU multiply + sublane reduction (lane-dense
    # (1, tile_n) result; avoids an M=1 MXU push), then ReLU + 1e-6.
    h3 = jnp.sum(h2 * w3_ref[...], axis=0, keepdims=True) + b3_ref[...]  # (1, tn)
    o_ref[...] = (jnp.maximum(h3, 0.0) + 1e-6).astype(o_ref.dtype)


def prepare_params(params):
    """Fold BN (inference), fold linear2 bias, cast weights to bf16.

    Call once (or under jit) and reuse the result for every forward pass.
    """
    (w1, g1, be1, m1, v1,
     w2, b2, g2, be2, m2, v2,
     w3, b3) = params

    inv1 = jax.lax.rsqrt(v1 + BN_EPS)
    s1 = (g1 * inv1).reshape(H1, 1).astype(jnp.float32)
    t1 = (be1 - m1 * g1 * inv1).reshape(H1, 1).astype(jnp.float32)

    inv2 = jax.lax.rsqrt(v2 + BN_EPS)
    s2 = (g2 * inv2).reshape(H2, 1).astype(jnp.float32)
    # linear2 bias folded into the BN shift: (b2 - m2) * scale + beta
    t2 = ((b2 - m2) * g2 * inv2 + be2).reshape(H2, 1).astype(jnp.float32)

    w1b = w1.astype(jnp.bfloat16)                       # (H1, D)
    w2b = w2.astype(jnp.bfloat16)                       # (H2, H1)
    w3c = w3.reshape(H2, 1).astype(jnp.float32)         # (H2, 1)
    b3s = b3.reshape(1, 1).astype(jnp.float32)          # (1, 1)
    return (w1b, s1, t1, w2b, s2, t2, w3c, b3s)


def volume_block(x, prepared, *, tile_n=512):
    """x: (N, emb_dims) float32. Returns (N, 1) float32."""
    N, D = x.shape
    (w1b, s1, t1, w2b, s2, t2, w3c, b3s) = prepared

    n_tiles = pl.cdiv(N, tile_n)
    n_pad = n_tiles * tile_n

    # Batch on the lane axis; zero-pad ragged tail (padded rows sliced off).
    xT = x.T.astype(jnp.bfloat16)                       # (D, N)
    if n_pad != N:
        xT = jnp.pad(xT, ((0, 0), (0, n_pad - N)))

    def const(shape):
        return pl.BlockSpec(shape, lambda i: (0, 0))

    param_bytes = (w1b.size * 2 + w2b.size * 2
                   + (s1.size + t1.size + s2.size + t2.size + w3c.size + b3s.size) * 4)
    cost = pl.CostEstimate(
        flops=2 * n_pad * (D * H1 + H1 * H2 + H2),
        transcendentals=0,
        bytes_accessed=n_pad * D * 2 + n_pad * 4 + param_bytes,
    )

    out = pl.pallas_call(
        volume_block_kernel,
        out_shape=jax.ShapeDtypeStruct((1, n_pad), jnp.float32),
        grid_spec=pltpu.PrefetchScalarGridSpec(
            num_scalar_prefetch=0,
            grid=(n_tiles,),
            in_specs=[
                pl.BlockSpec((D, tile_n), lambda i: (0, i)),   # x^T tile
                const((H1, D)),                                # W1 (bf16)
                const((H1, 1)), const((H1, 1)),                # s1, t1
                const((H2, H1)),                               # W2 (bf16)
                const((H2, 1)), const((H2, 1)),                # s2, t2 (b2 folded)
                const((H2, 1)),                                # W3 column
                const((1, 1)),                                 # b3
            ],
            out_specs=pl.BlockSpec((1, tile_n), lambda i: (0, i)),
        ),
        compiler_params=pltpu.CompilerParams(
            dimension_semantics=("parallel",)),
        cost_estimate=cost,
    )(xT, w1b, s1, t1, w2b, s2, t2, w3c, b3s)

    return out.reshape(n_pad, 1)[:N]


def init_params(key):
    ks = jax.random.split(key, 10)
    scale = 0.05
    w1 = scale * jax.random.normal(ks[0], (H1, EMB_DIMS), jnp.float32)
    g1 = 1.0 + 0.1 * jax.random.normal(ks[1], (H1,), jnp.float32)
    be1 = 0.1 * jax.random.normal(ks[2], (H1,), jnp.float32)
    m1 = 0.1 * jax.random.normal(ks[3], (H1,), jnp.float32)
    v1 = jnp.abs(1.0 + 0.1 * jax.random.normal(ks[4], (H1,), jnp.float32))

    w2 = scale * jax.random.normal(ks[5], (H2, H1), jnp.float32)
    b2 = 0.1 * jax.random.normal(ks[6], (H2,), jnp.float32)
    g2 = jnp.ones((H2,), jnp.float32)
    be2 = jnp.zeros((H2,), jnp.float32)
    m2 = jnp.zeros((H2,), jnp.float32)
    v2 = jnp.ones((H2,), jnp.float32)

    w3 = scale * jax.random.normal(ks[7], (1, H2), jnp.float32)
    b3 = 0.1 * jax.random.normal(ks[8], (1,), jnp.float32)
    return (w1, g1, be1, m1, v1, w2, b2, g2, be2, m2, v2, w3, b3)


def reference(x, params):
    (w1, g1, be1, m1, v1, w2, b2, g2, be2, m2, v2, w3, b3) = params
    h = x @ w1.T
    h = (h - m1) / jnp.sqrt(v1 + BN_EPS) * g1 + be1
    h = jnp.maximum(h, 0.0)
    h = h @ w2.T + b2
    h = (h - m2) / jnp.sqrt(v2 + BN_EPS) * g2 + be2
    h = jnp.maximum(h, 0.0)
    h = h @ w3.T + b3
    return jnp.maximum(h, 0.0) + 1e-6


if __name__ == "__main__":
    key = jax.random.PRNGKey(0)
    kx, kp = jax.random.split(key)
    N = 200  # deliberately not a multiple of tile_n -> exercises padding
    x = jax.random.normal(kx, (N, EMB_DIMS), jnp.float32)
    params = init_params(kp)
    prepared = prepare_params(params)

    out = jax.block_until_ready(volume_block(x, prepared))              # grid=(1,)
    out_multi = jax.block_until_ready(volume_block(x, prepared, tile_n=128))  # grid=(2,)

    ref = reference(x, params)
    assert out.shape == (N, 1)
    for o in (out, out_multi):
        err = float(jnp.max(jnp.abs(o - ref)))
        assert jnp.allclose(o, ref, atol=2e-2, rtol=2e-2), f"max abs err {err}"
    print("KERNEL_OK")
</pallas_src>

<mosaic_0001>
module attributes {stable_mosaic.version = 11 : i64} {
  func.func @volume_block_kernel(%arg0: i32, %arg1: memref<32x512xbf16, #tpu.memory_space<vmem>>, %arg2: memref<512x32xbf16, #tpu.memory_space<vmem>>, %arg3: memref<512x1xf32, #tpu.memory_space<vmem>>, %arg4: memref<512x1xf32, #tpu.memory_space<vmem>>, %arg5: memref<64x512xbf16, #tpu.memory_space<vmem>>, %arg6: memref<64x1xf32, #tpu.memory_space<vmem>>, %arg7: memref<64x1xf32, #tpu.memory_space<vmem>>, %arg8: memref<64x1xf32, #tpu.memory_space<vmem>>, %arg9: memref<1x1xf32, #tpu.memory_space<vmem>>, %arg10: memref<1x512xf32, #tpu.memory_space<vmem>>) attributes {dimension_semantics = [#tpu.dimension_semantics<parallel>], iteration_bounds = array<i64: 1>, scalar_prefetch = 0 : i64, scratch_operands = 0 : i64, tpu.core_type = #tpu.core_type<tc>, window_params = [{transform_indices = @transform_0, window_bounds = array<i64: 32, 512>}, {pipeline_mode = #tpu.pipeline_mode<synchronous>, transform_indices = @transform_1, window_bounds = array<i64: 512, 32>}, {pipeline_mode = #tpu.pipeline_mode<synchronous>, transform_indices = @transform_2, window_bounds = array<i64: 512, 1>}, {pipeline_mode = #tpu.pipeline_mode<synchronous>, transform_indices = @transform_3, window_bounds = array<i64: 512, 1>}, {pipeline_mode = #tpu.pipeline_mode<synchronous>, transform_indices = @transform_4, window_bounds = array<i64: 64, 512>}, {pipeline_mode = #tpu.pipeline_mode<synchronous>, transform_indices = @transform_5, window_bounds = array<i64: 64, 1>}, {pipeline_mode = #tpu.pipeline_mode<synchronous>, transform_indices = @transform_6, window_bounds = array<i64: 64, 1>}, {pipeline_mode = #tpu.pipeline_mode<synchronous>, transform_indices = @transform_7, window_bounds = array<i64: 64, 1>}, {pipeline_mode = #tpu.pipeline_mode<synchronous>, transform_indices = @transform_8, window_bounds = array<i64: 1, 1>}, {transform_indices = @transform_9, window_bounds = array<i64: 1, 512>}]} {
    %c0 = arith.constant 0 : index
    %c0_0 = arith.constant 0 : index
    %0 = vector.load %arg1[%c0, %c0_0] : memref<32x512xbf16, #tpu.memory_space<vmem>>, vector<32x512xbf16>
    %c0_1 = arith.constant 0 : index
    %c0_2 = arith.constant 0 : index
    %1 = vector.load %arg2[%c0_1, %c0_2] : memref<512x32xbf16, #tpu.memory_space<vmem>>, vector<512x32xbf16>
    %cst = arith.constant dense<0.000000e+00> : vector<512x512xf32>
    %2 = tpu.matmul %1, %0, %cst {dimension_numbers = #tpu.dot_dimension_numbers<[1], [0], [0], [1], [0, 0, 1, 1], [], []>} : vector<512x32xbf16>, vector<32x512xbf16>, vector<512x512xf32> -> vector<512x512xf32>
    %c0_3 = arith.constant 0 : index
    %c0_4 = arith.constant 0 : index
    %3 = vector.load %arg3[%c0_3, %c0_4] : memref<512x1xf32, #tpu.memory_space<vmem>>, vector<512x1xf32>
    %4 = vector.broadcast %3 : vector<512x1xf32> to vector<512x512xf32>
    %5 = arith.mulf %2, %4 : vector<512x512xf32>
    %c0_5 = arith.constant 0 : index
    %c0_6 = arith.constant 0 : index
    %6 = vector.load %arg4[%c0_5, %c0_6] : memref<512x1xf32, #tpu.memory_space<vmem>>, vector<512x1xf32>
    %7 = vector.broadcast %6 : vector<512x1xf32> to vector<512x512xf32>
    %8 = arith.addf %5, %7 : vector<512x512xf32>
    %cst_7 = arith.constant 0.000000e+00 : f32
    %9 = vector.broadcast %cst_7 : f32 to vector<512x512xf32>
    %10 = arith.maximumf %8, %9 : vector<512x512xf32>
    %c0_8 = arith.constant 0 : index
    %c0_9 = arith.constant 0 : index
    %11 = vector.load %arg5[%c0_8, %c0_9] : memref<64x512xbf16, #tpu.memory_space<vmem>>, vector<64x512xbf16>
    %12 = arith.truncf %10 : vector<512x512xf32> to vector<512x512xbf16>
    %cst_10 = arith.constant dense<0.000000e+00> : vector<64x512xf32>
    %13 = tpu.matmul %11, %12, %cst_10 {dimension_numbers = #tpu.dot_dimension_numbers<[1], [0], [0], [1], [0, 0, 1, 1], [], []>} : vector<64x512xbf16>, vector<512x512xbf16>, vector<64x512xf32> -> vector<64x512xf32>
    %c0_11 = arith.constant 0 : index
    %c0_12 = arith.constant 0 : index
    %14 = vector.load %arg6[%c0_11, %c0_12] : memref<64x1xf32, #tpu.memory_space<vmem>>, vector<64x1xf32>
    %15 = vector.broadcast %14 : vector<64x1xf32> to vector<64x512xf32>
    %16 = arith.mulf %13, %15 : vector<64x512xf32>
    %c0_13 = arith.constant 0 : index
    %c0_14 = arith.constant 0 : index
    %17 = vector.load %arg7[%c0_13, %c0_14] : memref<64x1xf32, #tpu.memory_space<vmem>>, vector<64x1xf32>
    %18 = vector.broadcast %17 : vector<64x1xf32> to vector<64x512xf32>
    %19 = arith.addf %16, %18 : vector<64x512xf32>
    %cst_15 = arith.constant 0.000000e+00 : f32
    %20 = vector.broadcast %cst_15 : f32 to vector<64x512xf32>
    %21 = arith.maximumf %19, %20 : vector<64x512xf32>
    %c0_16 = arith.constant 0 : index
    %c0_17 = arith.constant 0 : index
    %22 = vector.load %arg8[%c0_16, %c0_17] : memref<64x1xf32, #tpu.memory_space<vmem>>, vector<64x1xf32>
    %23 = vector.broadcast %22 : vector<64x1xf32> to vector<64x512xf32>
    %24 = arith.mulf %21, %23 : vector<64x512xf32>
    %cst_18 = arith.constant dense<0.000000e+00> : vector<512xf32>
    %25 = vector.multi_reduction <add>, %24, %cst_18 [0] : vector<64x512xf32> to vector<512xf32>
    %26 = vector.shape_cast %25 : vector<512xf32> to vector<1x512xf32>
    %c0_19 = arith.constant 0 : index
    %c0_20 = arith.constant 0 : index
    %27 = vector.load %arg9[%c0_19, %c0_20] : memref<1x1xf32, #tpu.memory_space<vmem>>, vector<1x1xf32>
    %28 = vector.broadcast %27 : vector<1x1xf32> to vector<1x512xf32>
    %29 = arith.addf %26, %28 : vector<1x512xf32>
    %cst_21 = arith.constant 0.000000e+00 : f32
    %30 = vector.broadcast %cst_21 : f32 to vector<1x512xf32>
    %31 = arith.maximumf %29, %30 : vector<1x512xf32>
    %cst_22 = arith.constant 9.99999997E-7 : f32
    %32 = vector.broadcast %cst_22 : f32 to vector<1x512xf32>
    %33 = arith.addf %31, %32 : vector<1x512xf32>
    %c0_23 = arith.constant 0 : index
    %c0_24 = arith.constant 0 : index
    %34 = vector.load %arg10[%c0_23, %c0_24] : memref<1x512xf32, #tpu.memory_space<vmem>>, vector<1x512xf32>
    tpu.vector_store %arg10[%c0_23, %c0_24], %33 {strides = array<i32>} : memref<1x512xf32, #tpu.memory_space<vmem>>, vector<1x512xf32>,
    return
  }
  func.func @transform_0(%arg0: i32) -> (i32, i32) {
    %c0_i32 = arith.constant 0 : i32
    %c0_i32_0 = arith.constant 0 : i32
    return %c0_i32, %arg0 : i32, i32
  }
  func.func @transform_1(%arg0: i32) -> (i32, i32) {
    %c0_i32 = arith.constant 0 : i32
    %c0_i32_0 = arith.constant 0 : i32
    %c0_i32_1 = arith.constant 0 : i32
    return %c0_i32, %c0_i32_0 : i32, i32
  }
  func.func @transform_2(%arg0: i32) -> (i32, i32) {
    %c0_i32 = arith.constant 0 : i32
    %c0_i32_0 = arith.constant 0 : i32
    %c0_i32_1 = arith.constant 0 : i32
    return %c0_i32, %c0_i32_0 : i32, i32
  }
  func.func @transform_3(%arg0: i32) -> (i32, i32) {
    %c0_i32 = arith.constant 0 : i32
    %c0_i32_0 = arith.constant 0 : i32
    %c0_i32_1 = arith.constant 0 : i32
    return %c0_i32, %c0_i32_0 : i32, i32
  }
  func.func @transform_4(%arg0: i32) -> (i32, i32) {
    %c0_i32 = arith.constant 0 : i32
    %c0_i32_0 = arith.constant 0 : i32
    %c0_i32_1 = arith.constant 0 : i32
    return %c0_i32, %c0_i32_0 : i32, i32
  }
  func.func @transform_5(%arg0: i32) -> (i32, i32) {
    %c0_i32 = arith.constant 0 : i32
    %c0_i32_0 = arith.constant 0 : i32
    %c0_i32_1 = arith.constant 0 : i32
    return %c0_i32, %c0_i32_0 : i32, i32
  }
  func.func @transform_6(%arg0: i32) -> (i32, i32) {
    %c0_i32 = arith.constant 0 : i32
    %c0_i32_0 = arith.constant 0 : i32
    %c0_i32_1 = arith.constant 0 : i32
    return %c0_i32, %c0_i32_0 : i32, i32
  }
  func.func @transform_7(%arg0: i32) -> (i32, i32) {
    %c0_i32 = arith.constant 0 : i32
    %c0_i32_0 = arith.constant 0 : i32
    %c0_i32_1 = arith.constant 0 : i32
    return %c0_i32, %c0_i32_0 : i32, i32
  }
  func.func @transform_8(%arg0: i32) -> (i32, i32) {
    %c0_i32 = arith.constant 0 : i32
    %c0_i32_0 = arith.constant 0 : i32
    %c0_i32_1 = arith.constant 0 : i32
    return %c0_i32, %c0_i32_0 : i32, i32
  }
  func.func @transform_9(%arg0: i32) -> (i32, i32) {
    %c0_i32 = arith.constant 0 : i32
    %c0_i32_0 = arith.constant 0 : i32
    return %c0_i32, %arg0 : i32, i32
  }
}

</mosaic_0001>

<llo_original>
// kernel: tpu_custom_call.1
$region0: #{tpu_custom_call.1}
  #allocation0 [shape = 'u32[]', space=smem, size = 0x4, offset = 0x4, fixed_abs, tag = 'smem constant byte address 0x4 - core index']
  #allocation1 [shape = 'u32[144,128]{1,0:T(1,128)}', space=vmem, size = 0x12000, scoped, tag = 'internal scratch']
  #allocation2 [shape = 'f32[1,1]{1,0:T(1,128)S(1)}', space=vmem, size = 0x200, scoped, tag = 'scoped memory for tpu_custom_call.1']
  %s0 = inlined_call_operand.vmem [shape: bf16[32,512], index: 0, kind: input, shape index: {}]
  %s1 = inlined_call_operand.vmem [shape: bf16[512,32], index: 1, kind: input, shape index: {}]
  %s2 = inlined_call_operand.vmem [shape: f32[512,1], index: 2, kind: input, shape index: {}]
  %s3 = inlined_call_operand.vmem [shape: f32[512,1], index: 3, kind: input, shape index: {}]
  %s4 = inlined_call_operand.vmem [shape: bf16[64,512], index: 4, kind: input, shape index: {}]
  %s5 = inlined_call_operand.vmem [shape: f32[64,1], index: 5, kind: input, shape index: {}]
  %s6 = inlined_call_operand.vmem [shape: f32[64,1], index: 6, kind: input, shape index: {}]
  %s7 = inlined_call_operand.vmem [shape: f32[64,1], index: 7, kind: input, shape index: {}]
  %s8 = inlined_call_operand.<no memory space> [shape: f32[1,1], index: 8, kind: input, shape index: {}]
  %s9 = inlined_call_operand.hbm [shape: f32[1,512], index: 9, kind: output, shape index: {}]
  %s10 = sld [smem:[#allocation0]]
  $region46: #{tpu_custom_call.1} parent=0
    _
  %s12 = ssub.s32 1, %s10
  %s13 = scalar_select 0, %s12, %s10
  %v14 = vstv %s8
  %15 = vst [vmem:[#allocation2] sm:$0x1] %v14
  $region1: #{tpu_custom_call.1} parent=0
    #allocation3 [shape = 'u8[2048]{0}', space=vmem, size = 0x800, scoped, tag = 'output window, operand 0, single buffered']
    #allocation4 [shape = 's32[1]{0}', space=sflag, size = 0x4, scoped, tag = 'scoped memory for tpu_custom_call.1']
    %16 = vsyncpa [#allocation4], 0
    // Predicated region
    $region2: #{tpu_custom_call.1} parent=1 // pred_check
      _
    $region3: #{tpu_custom_call.1} parent=1 // pred_check_branch
      %18 = sbr.rel (0) target = $region5
    $region4: #{tpu_custom_call.1} parent=1 // pred_region
      _
    $region5: #{tpu_custom_call.1} parent=1 // pred_fallthru
      _
    // Predicated region
    $region6: #{tpu_custom_call.1} parent=1 // pred_check
      _
    $region7: #{tpu_custom_call.1} parent=1 // pred_check_branch
      %20 = sbr.rel (0) target = $region9
    $region8: #{tpu_custom_call.1} parent=1 // pred_region
      _
    $region9: #{tpu_custom_call.1} parent=1 // pred_fallthru
      _
    // Predicated region
    $region10: #{tpu_custom_call.1} parent=1 // pred_check
      _
    $region11: #{tpu_custom_call.1} parent=1 // pred_check_branch
      %22 = sbr.rel (0) target = $region13
    $region12: #{tpu_custom_call.1} parent=1 // pred_region
      _
    $region13: #{tpu_custom_call.1} parent=1 // pred_fallthru
      _
    // Predicated region
    $region14: #{tpu_custom_call.1} parent=1 // pred_check
      _
    $region15: #{tpu_custom_call.1} parent=1 // pred_check_branch
      %24 = sbr.rel (0) target = $region17
    $region16: #{tpu_custom_call.1} parent=1 // pred_region
      _
    $region17: #{tpu_custom_call.1} parent=1 // pred_fallthru
      _
    // Predicated region
    $region18: #{tpu_custom_call.1} parent=1 // pred_check
      _
    $region19: #{tpu_custom_call.1} parent=1 // pred_check_branch
      %26 = sbr.rel (0) target = $region21
    $region20: #{tpu_custom_call.1} parent=1 // pred_region
      _
    $region21: #{tpu_custom_call.1} parent=1 // pred_fallthru
      _
    // Predicated region
    $region22: #{tpu_custom_call.1} parent=1 // pred_check
      _
    $region23: #{tpu_custom_call.1} parent=1 // pred_check_branch
      %28 = sbr.rel (0) target = $region25
    $region24: #{tpu_custom_call.1} parent=1 // pred_region
      _
    $region25: #{tpu_custom_call.1} parent=1 // pred_fallthru
      _
    // Predicated region
    $region26: #{tpu_custom_call.1} parent=1 // pred_check
      _
    $region27: #{tpu_custom_call.1} parent=1 // pred_check_branch
      %30 = sbr.rel (0) target = $region29
    $region28: #{tpu_custom_call.1} parent=1 // pred_region
      _
    $region29: #{tpu_custom_call.1} parent=1 // pred_fallthru
      _
    // Predicated region
    $region30: #{tpu_custom_call.1} parent=1 // pred_check
      _
    $region31: #{tpu_custom_call.1} parent=1 // pred_check_branch
      %32 = sbr.rel (0) target = $region33
    $region32: #{tpu_custom_call.1} parent=1 // pred_region
      _
    $region33: #{tpu_custom_call.1} parent=1 // pred_fallthru
      _
    // Predicated region
    $region34: #{tpu_custom_call.1} parent=1 // pred_check
      _
    $region35: #{tpu_custom_call.1} parent=1 // pred_check_branch
      %34 = sbr.rel (0) target = $region37
    $region36: #{tpu_custom_call.1} parent=1 // pred_region
      _
    $region37: #{tpu_custom_call.1} parent=1 // pred_fallthru
      _
    %v36 = vld [vmem:[%s0] sm:$0xff]
    %v37 = vld [vmem:[%s0 + $0x8] sm:$0xff]
    %v38 = vld [vmem:[%s0 + $0x10] sm:$0xff]
    %v39 = vld [vmem:[%s0 + $0x18] sm:$0xff]
    %v40 = vld [vmem:[%s0 + $0x20] sm:$0xff]
    %v41 = vld [vmem:[%s0 + $0x28] sm:$0xff]
    %v42 = vld [vmem:[%s0 + $0x30] sm:$0xff]
    %v43 = vld [vmem:[%s0 + $0x38] sm:$0xff]
    %v44 = vld [vmem:[%s1] sm:$0xf]
    %v45 = vld [vmem:[%s1 + $0x4] sm:$0xf]
    %v46 = vld [vmem:[%s1 + $0x8] sm:$0xf]
    %v47 = vld [vmem:[%s1 + $0xc] sm:$0xf]
    %v48 = vld [vmem:[%s1 + $0x10] sm:$0xf]
    %v49 = vld [vmem:[%s1 + $0x14] sm:$0xf]
    %v50 = vld [vmem:[%s1 + $0x18] sm:$0xf]
    %v51 = vld [vmem:[%s1 + $0x1c] sm:$0xf]
    %v52 = vld [vmem:[%s1 + $0x20] sm:$0xf]
    %v53 = vld [vmem:[%s1 + $0x24] sm:$0xf]
    %v54 = vld [vmem:[%s1 + $0x28] sm:$0xf]
    %v55 = vld [vmem:[%s1 + $0x2c] sm:$0xf]
    %v56 = vld [vmem:[%s1 + $0x30] sm:$0xf]
    %v57 = vld [vmem:[%s1 + $0x34] sm:$0xf]
    %v58 = vld [vmem:[%s1 + $0x38] sm:$0xf]
    %v59 = vld [vmem:[%s1 + $0x3c] sm:$0xf]
    %v60 = vld [vmem:[%s1 + $0x40] sm:$0xf]
    %v61 = vld [vmem:[%s1 + $0x44] sm:$0xf]
    %v62 = vld [vmem:[%s1 + $0x48] sm:$0xf]
    %v63 = vld [vmem:[%s1 + $0x4c] sm:$0xf]
    %v64 = vld [vmem:[%s1 + $0x50] sm:$0xf]
    %v65 = vld [vmem:[%s1 + $0x54] sm:$0xf]
    %v66 = vld [vmem:[%s1 + $0x58] sm:$0xf]
    %v67 = vld [vmem:[%s1 + $0x5c] sm:$0xf]
    %v68 = vld [vmem:[%s1 + $0x60] sm:$0xf]
    %v69 = vld [vmem:[%s1 + $0x64] sm:$0xf]
    %v70 = vld [vmem:[%s1 + $0x68] sm:$0xf]
    %v71 = vld [vmem:[%s1 + $0x6c] sm:$0xf]
    %v72 = vld [vmem:[%s1 + $0x70] sm:$0xf]
    %v73 = vld [vmem:[%s1 + $0x74] sm:$0xf]
    %v74 = vld [vmem:[%s1 + $0x78] sm:$0xf]
    %v75 = vld [vmem:[%s1 + $0x7c] sm:$0xf]
    %v76 = vld [vmem:[%s1 + $0x80] sm:$0xf]
    %v77 = vld [vmem:[%s1 + $0x84] sm:$0xf]
    %v78 = vld [vmem:[%s1 + $0x88] sm:$0xf]
    %v79 = vld [vmem:[%s1 + $0x8c] sm:$0xf]
    %v80 = vld [vmem:[%s1 + $0x90] sm:$0xf]
    %v81 = vld [vmem:[%s1 + $0x94] sm:$0xf]
    %v82 = vld [vmem:[%s1 + $0x98] sm:$0xf]
    %v83 = vld [vmem:[%s1 + $0x9c] sm:$0xf]
    %v84 = vld [vmem:[%s1 + $0xa0] sm:$0xf]
    %v85 = vld [vmem:[%s1 + $0xa4] sm:$0xf]
    %v86 = vld [vmem:[%s1 + $0xa8] sm:$0xf]
    %v87 = vld [vmem:[%s1 + $0xac] sm:$0xf]
    %v88 = vld [vmem:[%s1 + $0xb0] sm:$0xf]
    %v89 = vld [vmem:[%s1 + $0xb4] sm:$0xf]
    %v90 = vld [vmem:[%s1 + $0xb8] sm:$0xf]
    %v91 = vld [vmem:[%s1 + $0xbc] sm:$0xf]
    %v92 = vld [vmem:[%s1 + $0xc0] sm:$0xf]
    %v93 = vld [vmem:[%s1 + $0xc4] sm:$0xf]
    %v94 = vld [vmem:[%s1 + $0xc8] sm:$0xf]
    %v95 = vld [vmem:[%s1 + $0xcc] sm:$0xf]
    %v96 = vld [vmem:[%s1 + $0xd0] sm:$0xf]
    %v97 = vld [vmem:[%s1 + $0xd4] sm:$0xf]
    %v98 = vld [vmem:[%s1 + $0xd8] sm:$0xf]
    %v99 = vld [vmem:[%s1 + $0xdc] sm:$0xf]
    %v100 = vld [vmem:[%s1 + $0xe0] sm:$0xf]
    %v101 = vld [vmem:[%s1 + $0xe4] sm:$0xf]
    %v102 = vld [vmem:[%s1 + $0xe8] sm:$0xf]
    %v103 = vld [vmem:[%s1 + $0xec] sm:$0xf]
    %v104 = vld [vmem:[%s1 + $0xf0] sm:$0xf]
    %v105 = vld [vmem:[%s1 + $0xf4] sm:$0xf]
    %v106 = vld [vmem:[%s1 + $0xf8] sm:$0xf]
    %v107 = vld [vmem:[%s1 + $0xfc] sm:$0xf]
    %v172 = vunpack.c.l.b16 %v44
    %v173 = vunpack.c.l.b16 %v45
    %v174 = vunpack.c.l.b16 %v46
    %v175 = vunpack.c.l.b16 %v47
    %v176 = vunpack.c.l.b16 %v48
    %v177 = vunpack.c.l.b16 %v49
    %v178 = vunpack.c.l.b16 %v50
    %v179 = vunpack.c.l.b16 %v51
    %v180 = vunpack.c.l.b16 %v52
    %v181 = vunpack.c.l.b16 %v53
    %v182 = vunpack.c.l.b16 %v54
    %v183 = vunpack.c.l.b16 %v55
    %v184 = vunpack.c.l.b16 %v56
    %v185 = vunpack.c.l.b16 %v57
    %v186 = vunpack.c.l.b16 %v58
    %v187 = vunpack.c.l.b16 %v59
    %v188 = vunpack.c.l.b16 %v60
    %v189 = vunpack.c.l.b16 %v61
    %v190 = vunpack.c.l.b16 %v62
    %v191 = vunpack.c.l.b16 %v63
    %v192 = vunpack.c.l.b16 %v64
    %v193 = vunpack.c.l.b16 %v65
    %v194 = vunpack.c.l.b16 %v66
    %v195 = vunpack.c.l.b16 %v67
    %v196 = vunpack.c.l.b16 %v68
    %v197 = vunpack.c.l.b16 %v69
    %v198 = vunpack.c.l.b16 %v70
    %v199 = vunpack.c.l.b16 %v71
    %v200 = vunpack.c.l.b16 %v72
    %v201 = vunpack.c.l.b16 %v73
    %v202 = vunpack.c.l.b16 %v74
    %v203 = vunpack.c.l.b16 %v75
    %v204 = vunpack.c.l.b16 %v76
    %v205 = vunpack.c.l.b16 %v77
    %v206 = vunpack.c.l.b16 %v78
    %v207 = vunpack.c.l.b16 %v79
    %v208 = vunpack.c.l.b16 %v80
    %v209 = vunpack.c.l.b16 %v81
    %v210 = vunpack.c.l.b16 %v82
    %v211 = vunpack.c.l.b16 %v83
    %v212 = vunpack.c.l.b16 %v84
    %v213 = vunpack.c.l.b16 %v85
    %v214 = vunpack.c.l.b16 %v86
    %v215 = vunpack.c.l.b16 %v87
    %v216 = vunpack.c.l.b16 %v88
    %v217 = vunpack.c.l.b16 %v89
    %v218 = vunpack.c.l.b16 %v90
    %v219 = vunpack.c.l.b16 %v91
    %v220 = vunpack.c.l.b16 %v92
    %v221 = vunpack.c.l.b16 %v93
    %v222 = vunpack.c.l.b16 %v94
    %v223 = vunpack.c.l.b16 %v95
    %v224 = vunpack.c.l.b16 %v96
    %v225 = vunpack.c.l.b16 %v97
    %v226 = vunpack.c.l.b16 %v98
    %v227 = vunpack.c.l.b16 %v99
    %v228 = vunpack.c.l.b16 %v100
    %v229 = vunpack.c.l.b16 %v101
    %v230 = vunpack.c.l.b16 %v102
    %v231 = vunpack.c.l.b16 %v103
    %v232 = vunpack.c.l.b16 %v104
    %v233 = vunpack.c.l.b16 %v105
    %v234 = vunpack.c.l.b16 %v106
    %v235 = vunpack.c.l.b16 %v107
    %v236 = vpack.c.b16 %v173, %v172
    %v237 = vpack.c.b16 %v175, %v174
    %v238 = vpack.c.b16 %v177, %v176
    %v239 = vpack.c.b16 %v179, %v178
    %v240 = vpack.c.b16 %v181, %v180
    %v241 = vpack.c.b16 %v183, %v182
    %v242 = vpack.c.b16 %v185, %v184
    %v243 = vpack.c.b16 %v187, %v186
    %v244 = vpack.c.b16 %v189, %v188
    %v245 = vpack.c.b16 %v191, %v190
    %v246 = vpack.c.b16 %v193, %v192
    %v247 = vpack.c.b16 %v195, %v194
    %v248 = vpack.c.b16 %v197, %v196
    %v249 = vpack.c.b16 %v199, %v198
    %v250 = vpack.c.b16 %v201, %v200
    %v251 = vpack.c.b16 %v203, %v202
    %v252 = vpack.c.b16 %v205, %v204
    %v253 = vpack.c.b16 %v207, %v206
    %v254 = vpack.c.b16 %v209, %v208
    %v255 = vpack.c.b16 %v211, %v210
    %v256 = vpack.c.b16 %v213, %v212
    %v257 = vpack.c.b16 %v215, %v214
    %v258 = vpack.c.b16 %v217, %v216
    %v259 = vpack.c.b16 %v219, %v218
    %v260 = vpack.c.b16 %v221, %v220
    %v261 = vpack.c.b16 %v223, %v222
    %v262 = vpack.c.b16 %v225, %v224
    %v263 = vpack.c.b16 %v227, %v226
    %v264 = vpack.c.b16 %v229, %v228
    %v265 = vpack.c.b16 %v231, %v230
    %v266 = vpack.c.b16 %v233, %v232
    %v267 = vpack.c.b16 %v235, %v234
    %v276 = vunpack.c.l.b16 %v36
    %v277 = vunpack.c.h.b16 %v36
    %v278 = vunpack.c.l.b16 %v37
    %v279 = vunpack.c.h.b16 %v37
    %v280 = vunpack.c.l.b16 %v38
    %v281 = vunpack.c.h.b16 %v38
    %v282 = vunpack.c.l.b16 %v39
    %v283 = vunpack.c.h.b16 %v39
    %v284 = vunpack.c.l.b16 %v40
    %v285 = vunpack.c.h.b16 %v40
    %v286 = vunpack.c.l.b16 %v41
    %v287 = vunpack.c.h.b16 %v41
    %v288 = vunpack.c.l.b16 %v42
    %v289 = vunpack.c.h.b16 %v42
    %v290 = vunpack.c.l.b16 %v43
    %v291 = vunpack.c.h.b16 %v43
    %v292 = vpack.c.b16 %v280, %v276
    %v293 = vpack.c.b16 %v281, %v277
    %v294 = vpack.c.b16 %v282, %v278
    %v295 = vpack.c.b16 %v283, %v279
    %v296 = vpack.c.b16 %v288, %v284
    %v297 = vpack.c.b16 %v289, %v285
    %v298 = vpack.c.b16 %v290, %v286
    %v299 = vpack.c.b16 %v291, %v287
    %vm308 = vcmask 261120
    %v310 = vsel %vm308, %v236, 0
    %v313 = vsel %vm308, %v237, 0
    %v316 = vsel %vm308, %v238, 0
    %v319 = vsel %vm308, %v239, 0
    %v322 = vsel %vm308, %v240, 0
    %v325 = vsel %vm308, %v241, 0
    %v328 = vsel %vm308, %v242, 0
    %v331 = vsel %vm308, %v243, 0
    %v334 = vsel %vm308, %v244, 0
    %v337 = vsel %vm308, %v245, 0
    %v340 = vsel %vm308, %v246, 0
    %v343 = vsel %vm308, %v247, 0
    %v346 = vsel %vm308, %v248, 0
    %v349 = vsel %vm308, %v249, 0
    %v352 = vsel %vm308, %v250, 0
    %v355 = vsel %vm308, %v251, 0
    %v358 = vsel %vm308, %v252, 0
    %v361 = vsel %vm308, %v253, 0
    %v364 = vsel %vm308, %v254, 0
    %v367 = vsel %vm308, %v255, 0
    %v370 = vsel %vm308, %v256, 0
    %v373 = vsel %vm308, %v257, 0
    %v376 = vsel %vm308, %v258, 0
    %v379 = vsel %vm308, %v259, 0
    %v382 = vsel %vm308, %v260, 0
    %v385 = vsel %vm308, %v261, 0
    %v388 = vsel %vm308, %v262, 0
    %v391 = vsel %vm308, %v263, 0
    %v394 = vsel %vm308, %v264, 0
    %v397 = vsel %vm308, %v265, 0
    %v400 = vsel %vm308, %v266, 0
    %v403 = vsel %vm308, %v267, 0
    %405 = vmatprep.subr.bf16.mxu0 0
    %406 = vmatpush1.bf16.msra.mxu0 0
    %407 = vmatprep.subr.bf16.mxu0 0
    %408 = vmatpush1.bf16.msra.mxu0 0
    %409 = vmatprep.subr.bf16.mxu0 0
    %410 = vmatpush1.bf16.msra.mxu0 0
    %411 = vmatprep.subr.bf16.mxu0 0
    %412 = vmatpush1.bf16.msra.mxu0 0
    %413 = vmatprep.subr.bf16.mxu0 0
    %414 = vmatpush1.bf16.msra.mxu0 0
    %415 = vmatprep.subr.bf16.mxu0 0
    %416 = vmatpush1.bf16.msra.mxu0 0
    %417 = vmatprep.subr.bf16.mxu0 %v297
    %418 = vmatpush1.bf16.msra.mxu0 %v296
    %419 = vmatprep.subr.bf16.mxu0 %v293
    %420 = vmatpush1.bf16.msra.mxu0 %v292
    %421 = vmatprep.subr.bf16.mxu0 0
    %422 = vmatpush2.bf16.msra.mxu0 0
    %423 = vmatprep.subr.bf16.mxu0 0
    %424 = vmatpush2.bf16.msra.mxu0 0
    %425 = vmatprep.subr.bf16.mxu0 0
    %426 = vmatpush2.bf16.msra.mxu0 0
    %427 = vmatprep.subr.bf16.mxu0 0
    %428 = vmatpush2.bf16.msra.mxu0 0
    %429 = vmatprep.subr.bf16.mxu0 0
    %430 = vmatpush2.bf16.msra.mxu0 0
    %431 = vmatprep.subr.bf16.mxu0 0
    %432 = vmatpush2.bf16.msra.mxu0 0
    %433 = vmatprep.subr.bf16.mxu0 0
    %434 = vmatpush2.bf16.msra.mxu0 0
    %435 = vmatprep.subr.bf16.mxu0 0
    %436 = vmatpush2.bf16.msra.mxu0 0
    %437 = vmatprep.mubr.bf16.mxu0 0
    %438 = vmatmul.mubr.bf16.gmra.mxu0 %v310
    %v439 = vpop.f32.mrf.mxu0
    %v440 = vadd.f32 0.0, %v439
    %v441 = vpop.f32.mrf.mxu0
    %v442 = vadd.f32 0.0, %v441
    %v443 = vpop.f32.mrf.mxu0
    %v444 = vadd.f32 0.0, %v443
    %v445 = vpop.f32.mrf.mxu0
    %v446 = vadd.f32 0.0, %v445
    %447 = vmatprep.mubr.bf16.mxu0 0
    %448 = vmatmul.mubr.bf16.gmra.mxu0 %v313
    %v449 = vpop.f32.mrf.mxu0
    %v450 = vadd.f32 0.0, %v449
    %v451 = vpop.f32.mrf.mxu0
    %v452 = vadd.f32 0.0, %v451
    %v453 = vpop.f32.mrf.mxu0
    %v454 = vadd.f32 0.0, %v453
    %v455 = vpop.f32.mrf.mxu0
    %v456 = vadd.f32 0.0, %v455
    %457 = vmatprep.mubr.bf16.mxu0 0
    %458 = vmatmul.mubr.bf16.gmra.mxu0 %v316
    %v459 = vpop.f32.mrf.mxu0
    %v460 = vadd.f32 0.0, %v459
    %v461 = vpop.f32.mrf.mxu0
    %v462 = vadd.f32 0.0, %v461
    %v463 = vpop.f32.mrf.mxu0
    %v464 = vadd.f32 0.0, %v463
    %v465 = vpop.f32.mrf.mxu0
    %v466 = vadd.f32 0.0, %v465
    %467 = vmatprep.mubr.bf16.mxu0 0
    %468 = vmatmul.mubr.bf16.gmra.mxu0 %v319
    %v469 = vpop.f32.mrf.mxu0
    %v470 = vadd.f32 0.0, %v469
    %v471 = vpop.f32.mrf.mxu0
    %v472 = vadd.f32 0.0, %v471
    %v473 = vpop.f32.mrf.mxu0
    %v474 = vadd.f32 0.0, %v473
    %v475 = vpop.f32.mrf.mxu0
    %v476 = vadd.f32 0.0, %v475
    %477 = vmatprep.mubr.bf16.mxu0 0
    %478 = vmatmul.mubr.bf16.gmra.mxu0 %v322
    %v479 = vpop.f32.mrf.mxu0
    %v480 = vadd.f32 0.0, %v479
    %v481 = vpop.f32.mrf.mxu0
    %v482 = vadd.f32 0.0, %v481
    %v483 = vpop.f32.mrf.mxu0
    %v484 = vadd.f32 0.0, %v483
    %v485 = vpop.f32.mrf.mxu0
    %v486 = vadd.f32 0.0, %v485
    %487 = vmatprep.mubr.bf16.mxu0 0
    %488 = vmatmul.mubr.bf16.gmra.mxu0 %v325
    %v489 = vpop.f32.mrf.mxu0
    %v490 = vadd.f32 0.0, %v489
    %v491 = vpop.f32.mrf.mxu0
    %v492 = vadd.f32 0.0, %v491
    %v493 = vpop.f32.mrf.mxu0
    %v494 = vadd.f32 0.0, %v493
    %v495 = vpop.f32.mrf.mxu0
    %v496 = vadd.f32 0.0, %v495
    %497 = vmatprep.mubr.bf16.mxu0 0
    %498 = vmatmul.mubr.bf16.gmra.mxu0 %v328
    %v499 = vpop.f32.mrf.mxu0
    %v500 = vadd.f32 0.0, %v499
    %v501 = vpop.f32.mrf.mxu0
    %v502 = vadd.f32 0.0, %v501
    %v503 = vpop.f32.mrf.mxu0
    %v504 = vadd.f32 0.0, %v503
    %v505 = vpop.f32.mrf.mxu0
    %v506 = vadd.f32 0.0, %v505
    %507 = vmatprep.mubr.bf16.mxu0 0
    %508 = vmatmul.mubr.bf16.gmra.mxu0 %v331
    %v509 = vpop.f32.mrf.mxu0
    %v510 = vadd.f32 0.0, %v509
    %v511 = vpop.f32.mrf.mxu0
    %v512 = vadd.f32 0.0, %v511
    %v513 = vpop.f32.mrf.mxu0
    %v514 = vadd.f32 0.0, %v513
    %v515 = vpop.f32.mrf.mxu0
    %v516 = vadd.f32 0.0, %v515
    %517 = vmatprep.mubr.bf16.mxu0 0
    %518 = vmatmul.mubr.bf16.gmra.mxu0 %v334
    %v519 = vpop.f32.mrf.mxu0
    %v520 = vadd.f32 0.0, %v519
    %v521 = vpop.f32.mrf.mxu0
    %v522 = vadd.f32 0.0, %v521
    %v523 = vpop.f32.mrf.mxu0
    %v524 = vadd.f32 0.0, %v523
    %v525 = vpop.f32.mrf.mxu0
    %v526 = vadd.f32 0.0, %v525
    %527 = vmatprep.mubr.bf16.mxu0 0
    %528 = vmatmul.mubr.bf16.gmra.mxu0 %v337
    %v529 = vpop.f32.mrf.mxu0
    %v530 = vadd.f32 0.0, %v529
    %v531 = vpop.f32.mrf.mxu0
    %v532 = vadd.f32 0.0, %v531
    %v533 = vpop.f32.mrf.mxu0
    %v534 = vadd.f32 0.0, %v533
    %v535 = vpop.f32.mrf.mxu0
    %v536 = vadd.f32 0.0, %v535
    %537 = vmatprep.mubr.bf16.mxu0 0
    %538 = vmatmul.mubr.bf16.gmra.mxu0 %v340
    %v539 = vpop.f32.mrf.mxu0
    %v540 = vadd.f32 0.0, %v539
    %v541 = vpop.f32.mrf.mxu0
    %v542 = vadd.f32 0.0, %v541
    %v543 = vpop.f32.mrf.mxu0
    %v544 = vadd.f32 0.0, %v543
    %v545 = vpop.f32.mrf.mxu0
    %v546 = vadd.f32 0.0, %v545
    %547 = vmatprep.mubr.bf16.mxu0 0
    %548 = vmatmul.mubr.bf16.gmra.mxu0 %v343
    %v549 = vpop.f32.mrf.mxu0
    %v550 = vadd.f32 0.0, %v549
    %v551 = vpop.f32.mrf.mxu0
    %v552 = vadd.f32 0.0, %v551
    %v553 = vpop.f32.mrf.mxu0
    %v554 = vadd.f32 0.0, %v553
    %v555 = vpop.f32.mrf.mxu0
    %v556 = vadd.f32 0.0, %v555
    %557 = vmatprep.mubr.bf16.mxu0 0
    %558 = vmatmul.mubr.bf16.gmra.mxu0 %v346
    %v559 = vpop.f32.mrf.mxu0
    %v560 = vadd.f32 0.0, %v559
    %v561 = vpop.f32.mrf.mxu0
    %v562 = vadd.f32 0.0, %v561
    %v563 = vpop.f32.mrf.mxu0
    %v564 = vadd.f32 0.0, %v563
    %v565 = vpop.f32.mrf.mxu0
    %v566 = vadd.f32 0.0, %v565
    %567 = vmatprep.mubr.bf16.mxu0 0
    %568 = vmatmul.mubr.bf16.gmra.mxu0 %v349
    %v569 = vpop.f32.mrf.mxu0
    %v570 = vadd.f32 0.0, %v569
    %v571 = vpop.f32.mrf.mxu0
    %v572 = vadd.f32 0.0, %v571
    %v573 = vpop.f32.mrf.mxu0
    %v574 = vadd.f32 0.0, %v573
    %v575 = vpop.f32.mrf.mxu0
    %v576 = vadd.f32 0.0, %v575
    %577 = vmatprep.mubr.bf16.mxu0 0
    %578 = vmatmul.mubr.bf16.gmra.mxu0 %v352
    %v579 = vpop.f32.mrf.mxu0
    %v580 = vadd.f32 0.0, %v579
    %v581 = vpop.f32.mrf.mxu0
    %v582 = vadd.f32 0.0, %v581
    %v583 = vpop.f32.mrf.mxu0
    %v584 = vadd.f32 0.0, %v583
    %v585 = vpop.f32.mrf.mxu0
    %v586 = vadd.f32 0.0, %v585
    %587 = vmatprep.mubr.bf16.mxu0 0
    %588 = vmatmul.mubr.bf16.gmra.mxu0 %v355
    %v589 = vpop.f32.mrf.mxu0
    %v590 = vadd.f32 0.0, %v589
    %v591 = vpop.f32.mrf.mxu0
    %v592 = vadd.f32 0.0, %v591
    %v593 = vpop.f32.mrf.mxu0
    %v594 = vadd.f32 0.0, %v593
    %v595 = vpop.f32.mrf.mxu0
    %v596 = vadd.f32 0.0, %v595
    %597 = vmatprep.mubr.bf16.mxu0 0
    %598 = vmatmul.mubr.bf16.gmra.mxu0 %v358
    %v599 = vpop.f32.mrf.mxu0
    %v600 = vadd.f32 0.0, %v599
    %v601 = vpop.f32.mrf.mxu0
    %v602 = vadd.f32 0.0, %v601
    %v603 = vpop.f32.mrf.mxu0
    %v604 = vadd.f32 0.0, %v603
    %v605 = vpop.f32.mrf.mxu0
    %v606 = vadd.f32 0.0, %v605
    %607 = vmatprep.mubr.bf16.mxu0 0
    %608 = vmatmul.mubr.bf16.gmra.mxu0 %v361
    %v609 = vpop.f32.mrf.mxu0
    %v610 = vadd.f32 0.0, %v609
    %v611 = vpop.f32.mrf.mxu0
    %v612 = vadd.f32 0.0, %v611
    %v613 = vpop.f32.mrf.mxu0
    %v614 = vadd.f32 0.0, %v613
    %v615 = vpop.f32.mrf.mxu0
    %v616 = vadd.f32 0.0, %v615
    %617 = vmatprep.mubr.bf16.mxu0 0
    %618 = vmatmul.mubr.bf16.gmra.mxu0 %v364
    %v619 = vpop.f32.mrf.mxu0
    %v620 = vadd.f32 0.0, %v619
    %v621 = vpop.f32.mrf.mxu0
    %v622 = vadd.f32 0.0, %v621
    %v623 = vpop.f32.mrf.mxu0
    %v624 = vadd.f32 0.0, %v623
    %v625 = vpop.f32.mrf.mxu0
    %v626 = vadd.f32 0.0, %v625
    %627 = vmatprep.mubr.bf16.mxu0 0
    %628 = vmatmul.mubr.bf16.gmra.mxu0 %v367
    %v629 = vpop.f32.mrf.mxu0
    %v630 = vadd.f32 0.0, %v629
    %v631 = vpop.f32.mrf.mxu0
    %v632 = vadd.f32 0.0, %v631
    %v633 = vpop.f32.mrf.mxu0
    %v634 = vadd.f32 0.0, %v633
    %v635 = vpop.f32.mrf.mxu0
    %v636 = vadd.f32 0.0, %v635
    %637 = vmatprep.mubr.bf16.mxu0 0
    %638 = vmatmul.mubr.bf16.gmra.mxu0 %v370
    %v639 = vpop.f32.mrf.mxu0
    %v640 = vadd.f32 0.0, %v639
    %v641 = vpop.f32.mrf.mxu0
    %v642 = vadd.f32 0.0, %v641
    %v643 = vpop.f32.mrf.mxu0
    %v644 = vadd.f32 0.0, %v643
    %v645 = vpop.f32.mrf.mxu0
    %v646 = vadd.f32 0.0, %v645
    %647 = vmatprep.mubr.bf16.mxu0 0
    %648 = vmatmul.mubr.bf16.gmra.mxu0 %v373
    %v649 = vpop.f32.mrf.mxu0
    %v650 = vadd.f32 0.0, %v649
    %v651 = vpop.f32.mrf.mxu0
    %v652 = vadd.f32 0.0, %v651
    %v653 = vpop.f32.mrf.mxu0
    %v654 = vadd.f32 0.0, %v653
    %v655 = vpop.f32.mrf.mxu0
    %v656 = vadd.f32 0.0, %v655
    %657 = vmatprep.mubr.bf16.mxu0 0
    %658 = vmatmul.mubr.bf16.gmra.mxu0 %v376
    %v659 = vpop.f32.mrf.mxu0
    %v660 = vadd.f32 0.0, %v659
    %v661 = vpop.f32.mrf.mxu0
    %v662 = vadd.f32 0.0, %v661
    %v663 = vpop.f32.mrf.mxu0
    %v664 = vadd.f32 0.0, %v663
    %v665 = vpop.f32.mrf.mxu0
    %v666 = vadd.f32 0.0, %v665
    %667 = vmatprep.mubr.bf16.mxu0 0
    %668 = vmatmul.mubr.bf16.gmra.mxu0 %v379
    %v669 = vpop.f32.mrf.mxu0
    %v670 = vadd.f32 0.0, %v669
    %v671 = vpop.f32.mrf.mxu0
    %v672 = vadd.f32 0.0, %v671
    %v673 = vpop.f32.mrf.mxu0
    %v674 = vadd.f32 0.0, %v673
    %v675 = vpop.f32.mrf.mxu0
    %v676 = vadd.f32 0.0, %v675
    %677 = vmatprep.mubr.bf16.mxu0 0
    %678 = vmatmul.mubr.bf16.gmra.mxu0 %v382
    %v679 = vpop.f32.mrf.mxu0
    %v680 = vadd.f32 0.0, %v679
    %v681 = vpop.f32.mrf.mxu0
    %v682 = vadd.f32 0.0, %v681
    %v683 = vpop.f32.mrf.mxu0
    %v684 = vadd.f32 0.0, %v683
    %v685 = vpop.f32.mrf.mxu0
    %v686 = vadd.f32 0.0, %v685
    %687 = vmatprep.mubr.bf16.mxu0 0
    %688 = vmatmul.mubr.bf16.gmra.mxu0 %v385
    %v689 = vpop.f32.mrf.mxu0
    %v690 = vadd.f32 0.0, %v689
    %v691 = vpop.f32.mrf.mxu0
    %v692 = vadd.f32 0.0, %v691
    %v693 = vpop.f32.mrf.mxu0
    %v694 = vadd.f32 0.0, %v693
    %v695 = vpop.f32.mrf.mxu0
    %v696 = vadd.f32 0.0, %v695
    %697 = vmatprep.mubr.bf16.mxu0 0
    %698 = vmatmul.mubr.bf16.gmra.mxu0 %v388
    %v699 = vpop.f32.mrf.mxu0
    %v700 = vadd.f32 0.0, %v699
    %v701 = vpop.f32.mrf.mxu0
    %v702 = vadd.f32 0.0, %v701
    %v703 = vpop.f32.mrf.mxu0
    %v704 = vadd.f32 0.0, %v703
    %v705 = vpop.f32.mrf.mxu0
    %v706 = vadd.f32 0.0, %v705
    %707 = vmatprep.mubr.bf16.mxu0 0
    %708 = vmatmul.mubr.bf16.gmra.mxu0 %v391
    %v709 = vpop.f32.mrf.mxu0
    %v710 = vadd.f32 0.0, %v709
    %v711 = vpop.f32.mrf.mxu0
    %v712 = vadd.f32 0.0, %v711
    %v713 = vpop.f32.mrf.mxu0
    %v714 = vadd.f32 0.0, %v713
    %v715 = vpop.f32.mrf.mxu0
    %v716 = vadd.f32 0.0, %v715
    %717 = vmatprep.mubr.bf16.mxu0 0
    %718 = vmatmul.mubr.bf16.gmra.mxu0 %v394
    %v719 = vpop.f32.mrf.mxu0
    %v720 = vadd.f32 0.0, %v719
    %v721 = vpop.f32.mrf.mxu0
    %v722 = vadd.f32 0.0, %v721
    %v723 = vpop.f32.mrf.mxu0
    %v724 = vadd.f32 0.0, %v723
    %v725 = vpop.f32.mrf.mxu0
    %v726 = vadd.f32 0.0, %v725
    %727 = vmatprep.mubr.bf16.mxu0 0
    %728 = vmatmul.mubr.bf16.gmra.mxu0 %v397
    %v729 = vpop.f32.mrf.mxu0
    %v730 = vadd.f32 0.0, %v729
    %v731 = vpop.f32.mrf.mxu0
    %v732 = vadd.f32 0.0, %v731
    %v733 = vpop.f32.mrf.mxu0
    %v734 = vadd.f32 0.0, %v733
    %v735 = vpop.f32.mrf.mxu0
    %v736 = vadd.f32 0.0, %v735
    %737 = vmatprep.mubr.bf16.mxu0 0
    %738 = vmatmul.mubr.bf16.gmra.mxu0 %v400
    %v739 = vpop.f32.mrf.mxu0
    %v740 = vadd.f32 0.0, %v739
    %v741 = vpop.f32.mrf.mxu0
    %v742 = vadd.f32 0.0, %v741
    %v743 = vpop.f32.mrf.mxu0
    %v744 = vadd.f32 0.0, %v743
    %v745 = vpop.f32.mrf.mxu0
    %v746 = vadd.f32 0.0, %v745
    %747 = vmatprep.mubr.bf16.mxu0 0
    %748 = vmatmul.mubr.bf16.gmra.mxu0 %v403
    %v749 = vpop.f32.mrf.mxu0
    %v750 = vadd.f32 0.0, %v749
    %v751 = vpop.f32.mrf.mxu0
    %v752 = vadd.f32 0.0, %v751
    %v753 = vpop.f32.mrf.mxu0
    %v754 = vadd.f32 0.0, %v753
    %v755 = vpop.f32.mrf.mxu0
    %v756 = vadd.f32 0.0, %v755
    %757 = vdwg.mxu0
    %758 = vmatprep.subr.bf16.mxu0 0
    %759 = vmatpush1.bf16.msra.mxu0 0
    %760 = vmatprep.subr.bf16.mxu0 0
    %761 = vmatpush1.bf16.msra.mxu0 0
    %762 = vmatprep.subr.bf16.mxu0 0
    %763 = vmatpush1.bf16.msra.mxu0 0
    %764 = vmatprep.subr.bf16.mxu0 0
    %765 = vmatpush1.bf16.msra.mxu0 0
    %766 = vmatprep.subr.bf16.mxu0 0
    %767 = vmatpush1.bf16.msra.mxu0 0
    %768 = vmatprep.subr.bf16.mxu0 0
    %769 = vmatpush1.bf16.msra.mxu0 0
    %770 = vmatprep.subr.bf16.mxu0 %v299
    %771 = vmatpush1.bf16.msra.mxu0 %v298
    %772 = vmatprep.subr.bf16.mxu0 %v295
    %773 = vmatpush1.bf16.msra.mxu0 %v294
    %774 = vmatprep.subr.bf16.mxu0 0
    %775 = vmatpush2.bf16.msra.mxu0 0
    %776 = vmatprep.subr.bf16.mxu0 0
    %777 = vmatpush2.bf16.msra.mxu0 0
    %778 = vmatprep.subr.bf16.mxu0 0
    %779 = vmatpush2.bf16.msra.mxu0 0
    %780 = vmatprep.subr.bf16.mxu0 0
    %781 = vmatpush2.bf16.msra.mxu0 0
    %782 = vmatprep.subr.bf16.mxu0 0
    %783 = vmatpush2.bf16.msra.mxu0 0
    %784 = vmatprep.subr.bf16.mxu0 0
    %785 = vmatpush2.bf16.msra.mxu0 0
    %786 = vmatprep.subr.bf16.mxu0 0
    %787 = vmatpush2.bf16.msra.mxu0 0
    %788 = vmatprep.subr.bf16.mxu0 0
    %789 = vmatpush2.bf16.msra.mxu0 0
    %790 = vmatprep.mubr.bf16.mxu0 0
    %791 = vmatmul.mubr.bf16.gmra.mxu0 %v310
    %v792 = vpop.f32.mrf.mxu0
    %v793 = vadd.f32 0.0, %v792
    %v794 = vpop.f32.mrf.mxu0
    %v795 = vadd.f32 0.0, %v794
    %v796 = vpop.f32.mrf.mxu0
    %v797 = vadd.f32 0.0, %v796
    %v798 = vpop.f32.mrf.mxu0
    %v799 = vadd.f32 0.0, %v798
    %800 = vmatprep.mubr.bf16.mxu0 0
    %801 = vmatmul.mubr.bf16.gmra.mxu0 %v313
    %v802 = vpop.f32.mrf.mxu0
    %v803 = vadd.f32 0.0, %v802
    %v804 = vpop.f32.mrf.mxu0
    %v805 = vadd.f32 0.0, %v804
    %v806 = vpop.f32.mrf.mxu0
    %v807 = vadd.f32 0.0, %v806
    %v808 = vpop.f32.mrf.mxu0
    %v809 = vadd.f32 0.0, %v808
    %810 = vmatprep.mubr.bf16.mxu0 0
    %811 = vmatmul.mubr.bf16.gmra.mxu0 %v316
    %v812 = vpop.f32.mrf.mxu0
    %v813 = vadd.f32 0.0, %v812
    %v814 = vpop.f32.mrf.mxu0
    %v815 = vadd.f32 0.0, %v814
    %v816 = vpop.f32.mrf.mxu0
    %v817 = vadd.f32 0.0, %v816
    %v818 = vpop.f32.mrf.mxu0
    %v819 = vadd.f32 0.0, %v818
    %820 = vmatprep.mubr.bf16.mxu0 0
    %821 = vmatmul.mubr.bf16.gmra.mxu0 %v319
    %v822 = vpop.f32.mrf.mxu0
    %v823 = vadd.f32 0.0, %v822
    %v824 = vpop.f32.mrf.mxu0
    %v825 = vadd.f32 0.0, %v824
    %v826 = vpop.f32.mrf.mxu0
    %v827 = vadd.f32 0.0, %v826
    %v828 = vpop.f32.mrf.mxu0
    %v829 = vadd.f32 0.0, %v828
    %830 = vmatprep.mubr.bf16.mxu0 0
    %831 = vmatmul.mubr.bf16.gmra.mxu0 %v322
    %v832 = vpop.f32.mrf.mxu0
    %v833 = vadd.f32 0.0, %v832
    %v834 = vpop.f32.mrf.mxu0
    %v835 = vadd.f32 0.0, %v834
    %v836 = vpop.f32.mrf.mxu0
    %v837 = vadd.f32 0.0, %v836
    %v838 = vpop.f32.mrf.mxu0
    %v839 = vadd.f32 0.0, %v838
    %840 = vmatprep.mubr.bf16.mxu0 0
    %841 = vmatmul.mubr.bf16.gmra.mxu0 %v325
    %v842 = vpop.f32.mrf.mxu0
    %v843 = vadd.f32 0.0, %v842
    %v844 = vpop.f32.mrf.mxu0
    %v845 = vadd.f32 0.0, %v844
    %v846 = vpop.f32.mrf.mxu0
    %v847 = vadd.f32 0.0, %v846
    %v848 = vpop.f32.mrf.mxu0
    %v849 = vadd.f32 0.0, %v848
    %850 = vmatprep.mubr.bf16.mxu0 0
    %851 = vmatmul.mubr.bf16.gmra.mxu0 %v328
    %v852 = vpop.f32.mrf.mxu0
    %v853 = vadd.f32 0.0, %v852
    %v854 = vpop.f32.mrf.mxu0
    %v855 = vadd.f32 0.0, %v854
    %v856 = vpop.f32.mrf.mxu0
    %v857 = vadd.f32 0.0, %v856
    %v858 = vpop.f32.mrf.mxu0
    %v859 = vadd.f32 0.0, %v858
    %860 = vmatprep.mubr.bf16.mxu0 0
    %861 = vmatmul.mubr.bf16.gmra.mxu0 %v331
    %v862 = vpop.f32.mrf.mxu0
    %v863 = vadd.f32 0.0, %v862
    %v864 = vpop.f32.mrf.mxu0
    %v865 = vadd.f32 0.0, %v864
    %v866 = vpop.f32.mrf.mxu0
    %v867 = vadd.f32 0.0, %v866
    %v868 = vpop.f32.mrf.mxu0
    %v869 = vadd.f32 0.0, %v868
    %870 = vmatprep.mubr.bf16.mxu0 0
    %871 = vmatmul.mubr.bf16.gmra.mxu0 %v334
    %v872 = vpop.f32.mrf.mxu0
    %v873 = vadd.f32 0.0, %v872
    %v874 = vpop.f32.mrf.mxu0
    %v875 = vadd.f32 0.0, %v874
    %v876 = vpop.f32.mrf.mxu0
    %v877 = vadd.f32 0.0, %v876
    %v878 = vpop.f32.mrf.mxu0
    %v879 = vadd.f32 0.0, %v878
    %880 = vmatprep.mubr.bf16.mxu0 0
    %881 = vmatmul.mubr.bf16.gmra.mxu0 %v337
    %v882 = vpop.f32.mrf.mxu0
    %v883 = vadd.f32 0.0, %v882
    %v884 = vpop.f32.mrf.mxu0
    %v885 = vadd.f32 0.0, %v884
    %v886 = vpop.f32.mrf.mxu0
    %v887 = vadd.f32 0.0, %v886
    %v888 = vpop.f32.mrf.mxu0
    %v889 = vadd.f32 0.0, %v888
    %890 = vmatprep.mubr.bf16.mxu0 0
    %891 = vmatmul.mubr.bf16.gmra.mxu0 %v340
    %v892 = vpop.f32.mrf.mxu0
    %v893 = vadd.f32 0.0, %v892
    %v894 = vpop.f32.mrf.mxu0
    %v895 = vadd.f32 0.0, %v894
    %v896 = vpop.f32.mrf.mxu0
    %v897 = vadd.f32 0.0, %v896
    %v898 = vpop.f32.mrf.mxu0
    %v899 = vadd.f32 0.0, %v898
    %900 = vmatprep.mubr.bf16.mxu0 0
    %901 = vmatmul.mubr.bf16.gmra.mxu0 %v343
    %v902 = vpop.f32.mrf.mxu0
    %v903 = vadd.f32 0.0, %v902
    %v904 = vpop.f32.mrf.mxu0
    %v905 = vadd.f32 0.0, %v904
    %v906 = vpop.f32.mrf.mxu0
    %v907 = vadd.f32 0.0, %v906
    %v908 = vpop.f32.mrf.mxu0
    %v909 = vadd.f32 0.0, %v908
    %910 = vmatprep.mubr.bf16.mxu0 0
    %911 = vmatmul.mubr.bf16.gmra.mxu0 %v346
    %v912 = vpop.f32.mrf.mxu0
    %v913 = vadd.f32 0.0, %v912
    %v914 = vpop.f32.mrf.mxu0
    %v915 = vadd.f32 0.0, %v914
    %v916 = vpop.f32.mrf.mxu0
    %v917 = vadd.f32 0.0, %v916
    %v918 = vpop.f32.mrf.mxu0
    %v919 = vadd.f32 0.0, %v918
    %920 = vmatprep.mubr.bf16.mxu0 0
    %921 = vmatmul.mubr.bf16.gmra.mxu0 %v349
    %v922 = vpop.f32.mrf.mxu0
    %v923 = vadd.f32 0.0, %v922
    %v924 = vpop.f32.mrf.mxu0
    %v925 = vadd.f32 0.0, %v924
    %v926 = vpop.f32.mrf.mxu0
    %v927 = vadd.f32 0.0, %v926
    %v928 = vpop.f32.mrf.mxu0
    %v929 = vadd.f32 0.0, %v928
    %930 = vmatprep.mubr.bf16.mxu0 0
    %931 = vmatmul.mubr.bf16.gmra.mxu0 %v352
    %v932 = vpop.f32.mrf.mxu0
    %v933 = vadd.f32 0.0, %v932
    %v934 = vpop.f32.mrf.mxu0
    %v935 = vadd.f32 0.0, %v934
    %v936 = vpop.f32.mrf.mxu0
    %v937 = vadd.f32 0.0, %v936
    %v938 = vpop.f32.mrf.mxu0
    %v939 = vadd.f32 0.0, %v938
    %940 = vmatprep.mubr.bf16.mxu0 0
    %941 = vmatmul.mubr.bf16.gmra.mxu0 %v355
    %v942 = vpop.f32.mrf.mxu0
    %v943 = vadd.f32 0.0, %v942
    %v944 = vpop.f32.mrf.mxu0
    %v945 = vadd.f32 0.0, %v944
    %v946 = vpop.f32.mrf.mxu0
    %v947 = vadd.f32 0.0, %v946
    %v948 = vpop.f32.mrf.mxu0
    %v949 = vadd.f32 0.0, %v948
    %950 = vmatprep.mubr.bf16.mxu0 0
    %951 = vmatmul.mubr.bf16.gmra.mxu0 %v358
    %v952 = vpop.f32.mrf.mxu0
    %v953 = vadd.f32 0.0, %v952
    %v954 = vpop.f32.mrf.mxu0
    %v955 = vadd.f32 0.0, %v954
    %v956 = vpop.f32.mrf.mxu0
    %v957 = vadd.f32 0.0, %v956
    %v958 = vpop.f32.mrf.mxu0
    %v959 = vadd.f32 0.0, %v958
    %960 = vmatprep.mubr.bf16.mxu0 0
    %961 = vmatmul.mubr.bf16.gmra.mxu0 %v361
    %v962 = vpop.f32.mrf.mxu0
    %v963 = vadd.f32 0.0, %v962
    %v964 = vpop.f32.mrf.mxu0
    %v965 = vadd.f32 0.0, %v964
    %v966 = vpop.f32.mrf.mxu0
    %v967 = vadd.f32 0.0, %v966
    %v968 = vpop.f32.mrf.mxu0
    %v969 = vadd.f32 0.0, %v968
    %970 = vmatprep.mubr.bf16.mxu0 0
    %971 = vmatmul.mubr.bf16.gmra.mxu0 %v364
    %v972 = vpop.f32.mrf.mxu0
    %v973 = vadd.f32 0.0, %v972
    %v974 = vpop.f32.mrf.mxu0
    %v975 = vadd.f32 0.0, %v974
    %v976 = vpop.f32.mrf.mxu0
    %v977 = vadd.f32 0.0, %v976
    %v978 = vpop.f32.mrf.mxu0
    %v979 = vadd.f32 0.0, %v978
    %980 = vmatprep.mubr.bf16.mxu0 0
    %981 = vmatmul.mubr.bf16.gmra.mxu0 %v367
    %v982 = vpop.f32.mrf.mxu0
    %v983 = vadd.f32 0.0, %v982
    %v984 = vpop.f32.mrf.mxu0
    %v985 = vadd.f32 0.0, %v984
    %v986 = vpop.f32.mrf.mxu0
    %v987 = vadd.f32 0.0, %v986
    %v988 = vpop.f32.mrf.mxu0
    %v989 = vadd.f32 0.0, %v988
    %990 = vmatprep.mubr.bf16.mxu0 0
    %991 = vmatmul.mubr.bf16.gmra.mxu0 %v370
    %v992 = vpop.f32.mrf.mxu0
    %v993 = vadd.f32 0.0, %v992
    %v994 = vpop.f32.mrf.mxu0
    %v995 = vadd.f32 0.0, %v994
    %v996 = vpop.f32.mrf.mxu0
    %v997 = vadd.f32 0.0, %v996
    %v998 = vpop.f32.mrf.mxu0
    %v999 = vadd.f32 0.0, %v998
    %1000 = vmatprep.mubr.bf16.mxu0 0
    %1001 = vmatmul.mubr.bf16.gmra.mxu0 %v373
    %v1002 = vpop.f32.mrf.mxu0
    %v1003 = vadd.f32 0.0, %v1002
    %v1004 = vpop.f32.mrf.mxu0
    %v1005 = vadd.f32 0.0, %v1004
    %v1006 = vpop.f32.mrf.mxu0
    %v1007 = vadd.f32 0.0, %v1006
    %v1008 = vpop.f32.mrf.mxu0
    %v1009 = vadd.f32 0.0, %v1008
    %1010 = vmatprep.mubr.bf16.mxu0 0
    %1011 = vmatmul.mubr.bf16.gmra.mxu0 %v376
    %v1012 = vpop.f32.mrf.mxu0
    %v1013 = vadd.f32 0.0, %v1012
    %v1014 = vpop.f32.mrf.mxu0
    %v1015 = vadd.f32 0.0, %v1014
    %v1016 = vpop.f32.mrf.mxu0
    %v1017 = vadd.f32 0.0, %v1016
    %v1018 = vpop.f32.mrf.mxu0
    %v1019 = vadd.f32 0.0, %v1018
    %1020 = vmatprep.mubr.bf16.mxu0 0
    %1021 = vmatmul.mubr.bf16.gmra.mxu0 %v379
    %v1022 = vpop.f32.mrf.mxu0
    %v1023 = vadd.f32 0.0, %v1022
    %v1024 = vpop.f32.mrf.mxu0
    %v1025 = vadd.f32 0.0, %v1024
    %v1026 = vpop.f32.mrf.mxu0
    %v1027 = vadd.f32 0.0, %v1026
    %v1028 = vpop.f32.mrf.mxu0
    %v1029 = vadd.f32 0.0, %v1028
    %1030 = vmatprep.mubr.bf16.mxu0 0
    %1031 = vmatmul.mubr.bf16.gmra.mxu0 %v382
    %v1032 = vpop.f32.mrf.mxu0
    %v1033 = vadd.f32 0.0, %v1032
    %v1034 = vpop.f32.mrf.mxu0
    %v1035 = vadd.f32 0.0, %v1034
    %v1036 = vpop.f32.mrf.mxu0
    %v1037 = vadd.f32 0.0, %v1036
    %v1038 = vpop.f32.mrf.mxu0
    %v1039 = vadd.f32 0.0, %v1038
    %1040 = vmatprep.mubr.bf16.mxu0 0
    %1041 = vmatmul.mubr.bf16.gmra.mxu0 %v385
    %v1042 = vpop.f32.mrf.mxu0
    %v1043 = vadd.f32 0.0, %v1042
    %v1044 = vpop.f32.mrf.mxu0
    %v1045 = vadd.f32 0.0, %v1044
    %v1046 = vpop.f32.mrf.mxu0
    %v1047 = vadd.f32 0.0, %v1046
    %v1048 = vpop.f32.mrf.mxu0
    %v1049 = vadd.f32 0.0, %v1048
    %1050 = vmatprep.mubr.bf16.mxu0 0
    %1051 = vmatmul.mubr.bf16.gmra.mxu0 %v388
    %v1052 = vpop.f32.mrf.mxu0
    %v1053 = vadd.f32 0.0, %v1052
    %v1054 = vpop.f32.mrf.mxu0
    %v1055 = vadd.f32 0.0, %v1054
    %v1056 = vpop.f32.mrf.mxu0
    %v1057 = vadd.f32 0.0, %v1056
    %v1058 = vpop.f32.mrf.mxu0
    %v1059 = vadd.f32 0.0, %v1058
    %1060 = vmatprep.mubr.bf16.mxu0 0
    %1061 = vmatmul.mubr.bf16.gmra.mxu0 %v391
    %v1062 = vpop.f32.mrf.mxu0
    %v1063 = vadd.f32 0.0, %v1062
    %v1064 = vpop.f32.mrf.mxu0
    %v1065 = vadd.f32 0.0, %v1064
    %v1066 = vpop.f32.mrf.mxu0
    %v1067 = vadd.f32 0.0, %v1066
    %v1068 = vpop.f32.mrf.mxu0
    %v1069 = vadd.f32 0.0, %v1068
    %1070 = vmatprep.mubr.bf16.mxu0 0
    %1071 = vmatmul.mubr.bf16.gmra.mxu0 %v394
    %v1072 = vpop.f32.mrf.mxu0
    %v1073 = vadd.f32 0.0, %v1072
    %v1074 = vpop.f32.mrf.mxu0
    %v1075 = vadd.f32 0.0, %v1074
    %v1076 = vpop.f32.mrf.mxu0
    %v1077 = vadd.f32 0.0, %v1076
    %v1078 = vpop.f32.mrf.mxu0
    %v1079 = vadd.f32 0.0, %v1078
    %1080 = vmatprep.mubr.bf16.mxu0 0
    %1081 = vmatmul.mubr.bf16.gmra.mxu0 %v397
    %v1082 = vpop.f32.mrf.mxu0
    %v1083 = vadd.f32 0.0, %v1082
    %v1084 = vpop.f32.mrf.mxu0
    %v1085 = vadd.f32 0.0, %v1084
    %v1086 = vpop.f32.mrf.mxu0
    %v1087 = vadd.f32 0.0, %v1086
    %v1088 = vpop.f32.mrf.mxu0
    %v1089 = vadd.f32 0.0, %v1088
    %1090 = vmatprep.mubr.bf16.mxu0 0
    %1091 = vmatmul.mubr.bf16.gmra.mxu0 %v400
    %v1092 = vpop.f32.mrf.mxu0
    %v1093 = vadd.f32 0.0, %v1092
    %v1094 = vpop.f32.mrf.mxu0
    %v1095 = vadd.f32 0.0, %v1094
    %v1096 = vpop.f32.mrf.mxu0
    %v1097 = vadd.f32 0.0, %v1096
    %v1098 = vpop.f32.mrf.mxu0
    %v1099 = vadd.f32 0.0, %v1098
    %1100 = vmatprep.mubr.bf16.mxu0 0
    %1101 = vmatmul.mubr.bf16.gmra.mxu0 %v403
    %v1102 = vpop.f32.mrf.mxu0
    %v1103 = vadd.f32 0.0, %v1102
    %v1104 = vpop.f32.mrf.mxu0
    %v1105 = vadd.f32 0.0, %v1104
    %v1106 = vpop.f32.mrf.mxu0
    %v1107 = vadd.f32 0.0, %v1106
    %v1108 = vpop.f32.mrf.mxu0
    %v1109 = vadd.f32 0.0, %v1108
    %1110 = vdwg.mxu0
    %v1111 = vld [vmem:[%s2] sm:$0xff]
    %v1112 = vld [vmem:[%s2 + $0x8] sm:$0xff]
    %v1113 = vld [vmem:[%s2 + $0x10] sm:$0xff]
    %v1114 = vld [vmem:[%s2 + $0x18] sm:$0xff]
    %v1115 = vld [vmem:[%s2 + $0x20] sm:$0xff]
    %v1116 = vld [vmem:[%s2 + $0x28] sm:$0xff]
    %v1117 = vld [vmem:[%s2 + $0x30] sm:$0xff]
    %v1118 = vld [vmem:[%s2 + $0x38] sm:$0xff]
    %v1119 = vld [vmem:[%s2 + $0x40] sm:$0xff]
    %v1120 = vld [vmem:[%s2 + $0x48] sm:$0xff]
    %v1121 = vld [vmem:[%s2 + $0x50] sm:$0xff]
    %v1122 = vld [vmem:[%s2 + $0x58] sm:$0xff]
    %v1123 = vld [vmem:[%s2 + $0x60] sm:$0xff]
    %v1124 = vld [vmem:[%s2 + $0x68] sm:$0xff]
    %v1125 = vld [vmem:[%s2 + $0x70] sm:$0xff]
    %v1126 = vld [vmem:[%s2 + $0x78] sm:$0xff]
    %v1127 = vld [vmem:[%s2 + $0x80] sm:$0xff]
    %v1128 = vld [vmem:[%s2 + $0x88] sm:$0xff]
    %v1129 = vld [vmem:[%s2 + $0x90] sm:$0xff]
    %v1130 = vld [vmem:[%s2 + $0x98] sm:$0xff]
    %v1131 = vld [vmem:[%s2 + $0xa0] sm:$0xff]
    %v1132 = vld [vmem:[%s2 + $0xa8] sm:$0xff]
    %v1133 = vld [vmem:[%s2 + $0xb0] sm:$0xff]
    %v1134 = vld [vmem:[%s2 + $0xb8] sm:$0xff]
    %v1135 = vld [vmem:[%s2 + $0xc0] sm:$0xff]
    %v1136 = vld [vmem:[%s2 + $0xc8] sm:$0xff]
    %v1137 = vld [vmem:[%s2 + $0xd0] sm:$0xff]
    %v1138 = vld [vmem:[%s2 + $0xd8] sm:$0xff]
    %v1139 = vld [vmem:[%s2 + $0xe0] sm:$0xff]
    %v1140 = vld [vmem:[%s2 + $0xe8] sm:$0xff]
    %v1141 = vld [vmem:[%s2 + $0xf0] sm:$0xff]
    %v1142 = vld [vmem:[%s2 + $0xf8] sm:$0xff]
    %v1143 = vld [vmem:[%s2 + $0x100] sm:$0xff]
    %v1144 = vld [vmem:[%s2 + $0x108] sm:$0xff]
    %v1145 = vld [vmem:[%s2 + $0x110] sm:$0xff]
    %v1146 = vld [vmem:[%s2 + $0x118] sm:$0xff]
    %v1147 = vld [vmem:[%s2 + $0x120] sm:$0xff]
    %v1148 = vld [vmem:[%s2 + $0x128] sm:$0xff]
    %v1149 = vld [vmem:[%s2 + $0x130] sm:$0xff]
    %v1150 = vld [vmem:[%s2 + $0x138] sm:$0xff]
    %v1151 = vld [vmem:[%s2 + $0x140] sm:$0xff]
    %v1152 = vld [vmem:[%s2 + $0x148] sm:$0xff]
    %v1153 = vld [vmem:[%s2 + $0x150] sm:$0xff]
    %v1154 = vld [vmem:[%s2 + $0x158] sm:$0xff]
    %v1155 = vld [vmem:[%s2 + $0x160] sm:$0xff]
    %v1156 = vld [vmem:[%s2 + $0x168] sm:$0xff]
    %v1157 = vld [vmem:[%s2 + $0x170] sm:$0xff]
    %v1158 = vld [vmem:[%s2 + $0x178] sm:$0xff]
    %v1159 = vld [vmem:[%s2 + $0x180] sm:$0xff]
    %v1160 = vld [vmem:[%s2 + $0x188] sm:$0xff]
    %v1161 = vld [vmem:[%s2 + $0x190] sm:$0xff]
    %v1162 = vld [vmem:[%s2 + $0x198] sm:$0xff]
    %v1163 = vld [vmem:[%s2 + $0x1a0] sm:$0xff]
    %v1164 = vld [vmem:[%s2 + $0x1a8] sm:$0xff]
    %v1165 = vld [vmem:[%s2 + $0x1b0] sm:$0xff]
    %v1166 = vld [vmem:[%s2 + $0x1b8] sm:$0xff]
    %v1167 = vld [vmem:[%s2 + $0x1c0] sm:$0xff]
    %v1168 = vld [vmem:[%s2 + $0x1c8] sm:$0xff]
    %v1169 = vld [vmem:[%s2 + $0x1d0] sm:$0xff]
    %v1170 = vld [vmem:[%s2 + $0x1d8] sm:$0xff]
    %v1171 = vld [vmem:[%s2 + $0x1e0] sm:$0xff]
    %v1172 = vld [vmem:[%s2 + $0x1e8] sm:$0xff]
    %v1173 = vld [vmem:[%s2 + $0x1f0] sm:$0xff]
    %v1174 = vld [vmem:[%s2 + $0x1f8] sm:$0xff]
    %1176 = vset.pattern.permute.xlu0 0
    %1177 = vperm.xlu0 %1176, %v1111
    %v1178 = vpop.permute.xlu0 %1177
    %1181 = vset.pattern.permute.xlu0 0
    %1182 = vperm.xlu0 %1181, %v1112
    %v1183 = vpop.permute.xlu0 %1182
    %1186 = vset.pattern.permute.xlu0 0
    %1187 = vperm.xlu0 %1186, %v1113
    %v1188 = vpop.permute.xlu0 %1187
    %1191 = vset.pattern.permute.xlu0 0
    %1192 = vperm.xlu0 %1191, %v1114
    %v1193 = vpop.permute.xlu0 %1192
    %1196 = vset.pattern.permute.xlu0 0
    %1197 = vperm.xlu0 %1196, %v1115
    %v1198 = vpop.permute.xlu0 %1197
    %1201 = vset.pattern.permute.xlu0 0
    %1202 = vperm.xlu0 %1201, %v1116
    %v1203 = vpop.permute.xlu0 %1202
    %1206 = vset.pattern.permute.xlu0 0
    %1207 = vperm.xlu0 %1206, %v1117
    %v1208 = vpop.permute.xlu0 %1207
    %1211 = vset.pattern.permute.xlu0 0
    %1212 = vperm.xlu0 %1211, %v1118
    %v1213 = vpop.permute.xlu0 %1212
    %1216 = vset.pattern.permute.xlu0 0
    %1217 = vperm.xlu0 %1216, %v1119
    %v1218 = vpop.permute.xlu0 %1217
    %1221 = vset.pattern.permute.xlu0 0
    %1222 = vperm.xlu0 %1221, %v1120
    %v1223 = vpop.permute.xlu0 %1222
    %1226 = vset.pattern.permute.xlu0 0
    %1227 = vperm.xlu0 %1226, %v1121
    %v1228 = vpop.permute.xlu0 %1227
    %1231 = vset.pattern.permute.xlu0 0
    %1232 = vperm.xlu0 %1231, %v1122
    %v1233 = vpop.permute.xlu0 %1232
    %1236 = vset.pattern.permute.xlu0 0
    %1237 = vperm.xlu0 %1236, %v1123
    %v1238 = vpop.permute.xlu0 %1237
    %1241 = vset.pattern.permute.xlu0 0
    %1242 = vperm.xlu0 %1241, %v1124
    %v1243 = vpop.permute.xlu0 %1242
    %1246 = vset.pattern.permute.xlu0 0
    %1247 = vperm.xlu0 %1246, %v1125
    %v1248 = vpop.permute.xlu0 %1247
    %1251 = vset.pattern.permute.xlu0 0
    %1252 = vperm.xlu0 %1251, %v1126
    %v1253 = vpop.permute.xlu0 %1252
    %1256 = vset.pattern.permute.xlu0 0
    %1257 = vperm.xlu0 %1256, %v1127
    %v1258 = vpop.permute.xlu0 %1257
    %1261 = vset.pattern.permute.xlu0 0
    %1262 = vperm.xlu0 %1261, %v1128
    %v1263 = vpop.permute.xlu0 %1262
    %1266 = vset.pattern.permute.xlu0 0
    %1267 = vperm.xlu0 %1266, %v1129
    %v1268 = vpop.permute.xlu0 %1267
    %1271 = vset.pattern.permute.xlu0 0
    %1272 = vperm.xlu0 %1271, %v1130
    %v1273 = vpop.permute.xlu0 %1272
    %1276 = vset.pattern.permute.xlu0 0
    %1277 = vperm.xlu0 %1276, %v1131
    %v1278 = vpop.permute.xlu0 %1277
    %1281 = vset.pattern.permute.xlu0 0
    %1282 = vperm.xlu0 %1281, %v1132
    %v1283 = vpop.permute.xlu0 %1282
    %1286 = vset.pattern.permute.xlu0 0
    %1287 = vperm.xlu0 %1286, %v1133
    %v1288 = vpop.permute.xlu0 %1287
    %1291 = vset.pattern.permute.xlu0 0
    %1292 = vperm.xlu0 %1291, %v1134
    %v1293 = vpop.permute.xlu0 %1292
    %1296 = vset.pattern.permute.xlu0 0
    %1297 = vperm.xlu0 %1296, %v1135
    %v1298 = vpop.permute.xlu0 %1297
    %1301 = vset.pattern.permute.xlu0 0
    %1302 = vperm.xlu0 %1301, %v1136
    %v1303 = vpop.permute.xlu0 %1302
    %1306 = vset.pattern.permute.xlu0 0
    %1307 = vperm.xlu0 %1306, %v1137
    %v1308 = vpop.permute.xlu0 %1307
    %1311 = vset.pattern.permute.xlu0 0
    %1312 = vperm.xlu0 %1311, %v1138
    %v1313 = vpop.permute.xlu0 %1312
    %1316 = vset.pattern.permute.xlu0 0
    %1317 = vperm.xlu0 %1316, %v1139
    %v1318 = vpop.permute.xlu0 %1317
    %1321 = vset.pattern.permute.xlu0 0
    %1322 = vperm.xlu0 %1321, %v1140
    %v1323 = vpop.permute.xlu0 %1322
    %1326 = vset.pattern.permute.xlu0 0
    %1327 = vperm.xlu0 %1326, %v1141
    %v1328 = vpop.permute.xlu0 %1327
    %1331 = vset.pattern.permute.xlu0 0
    %1332 = vperm.xlu0 %1331, %v1142
    %v1333 = vpop.permute.xlu0 %1332
    %1336 = vset.pattern.permute.xlu0 0
    %1337 = vperm.xlu0 %1336, %v1143
    %v1338 = vpop.permute.xlu0 %1337
    %1341 = vset.pattern.permute.xlu0 0
    %1342 = vperm.xlu0 %1341, %v1144
    %v1343 = vpop.permute.xlu0 %1342
    %1346 = vset.pattern.permute.xlu0 0
    %1347 = vperm.xlu0 %1346, %v1145
    %v1348 = vpop.permute.xlu0 %1347
    %1351 = vset.pattern.permute.xlu0 0
    %1352 = vperm.xlu0 %1351, %v1146
    %v1353 = vpop.permute.xlu0 %1352
    %1356 = vset.pattern.permute.xlu0 0
    %1357 = vperm.xlu0 %1356, %v1147
    %v1358 = vpop.permute.xlu0 %1357
    %1361 = vset.pattern.permute.xlu0 0
    %1362 = vperm.xlu0 %1361, %v1148
    %v1363 = vpop.permute.xlu0 %1362
    %1366 = vset.pattern.permute.xlu0 0
    %1367 = vperm.xlu0 %1366, %v1149
    %v1368 = vpop.permute.xlu0 %1367
    %1371 = vset.pattern.permute.xlu0 0
    %1372 = vperm.xlu0 %1371, %v1150
    %v1373 = vpop.permute.xlu0 %1372
    %1376 = vset.pattern.permute.xlu0 0
    %1377 = vperm.xlu0 %1376, %v1151
    %v1378 = vpop.permute.xlu0 %1377
    %1381 = vset.pattern.permute.xlu0 0
    %1382 = vperm.xlu0 %1381, %v1152
    %v1383 = vpop.permute.xlu0 %1382
    %1386 = vset.pattern.permute.xlu0 0
    %1387 = vperm.xlu0 %1386, %v1153
    %v1388 = vpop.permute.xlu0 %1387
    %1391 = vset.pattern.permute.xlu0 0
    %1392 = vperm.xlu0 %1391, %v1154
    %v1393 = vpop.permute.xlu0 %1392
    %1396 = vset.pattern.permute.xlu0 0
    %1397 = vperm.xlu0 %1396, %v1155
    %v1398 = vpop.permute.xlu0 %1397
    %1401 = vset.pattern.permute.xlu0 0
    %1402 = vperm.xlu0 %1401, %v1156
    %v1403 = vpop.permute.xlu0 %1402
    %1406 = vset.pattern.permute.xlu0 0
    %1407 = vperm.xlu0 %1406, %v1157
    %v1408 = vpop.permute.xlu0 %1407
    %1411 = vset.pattern.permute.xlu0 0
    %1412 = vperm.xlu0 %1411, %v1158
    %v1413 = vpop.permute.xlu0 %1412
    %1416 = vset.pattern.permute.xlu0 0
    %1417 = vperm.xlu0 %1416, %v1159
    %v1418 = vpop.permute.xlu0 %1417
    %1421 = vset.pattern.permute.xlu0 0
    %1422 = vperm.xlu0 %1421, %v1160
    %v1423 = vpop.permute.xlu0 %1422
    %1426 = vset.pattern.permute.xlu0 0
    %1427 = vperm.xlu0 %1426, %v1161
    %v1428 = vpop.permute.xlu0 %1427
    %1431 = vset.pattern.permute.xlu0 0
    %1432 = vperm.xlu0 %1431, %v1162
    %v1433 = vpop.permute.xlu0 %1432
    %1436 = vset.pattern.permute.xlu0 0
    %1437 = vperm.xlu0 %1436, %v1163
    %v1438 = vpop.permute.xlu0 %1437
    %1441 = vset.pattern.permute.xlu0 0
    %1442 = vperm.xlu0 %1441, %v1164
    %v1443 = vpop.permute.xlu0 %1442
    %1446 = vset.pattern.permute.xlu0 0
    %1447 = vperm.xlu0 %1446, %v1165
    %v1448 = vpop.permute.xlu0 %1447
    %1451 = vset.pattern.permute.xlu0 0
    %1452 = vperm.xlu0 %1451, %v1166
    %v1453 = vpop.permute.xlu0 %1452
    %1456 = vset.pattern.permute.xlu0 0
    %1457 = vperm.xlu0 %1456, %v1167
    %v1458 = vpop.permute.xlu0 %1457
    %1461 = vset.pattern.permute.xlu0 0
    %1462 = vperm.xlu0 %1461, %v1168
    %v1463 = vpop.permute.xlu0 %1462
    %1466 = vset.pattern.permute.xlu0 0
    %1467 = vperm.xlu0 %1466, %v1169
    %v1468 = vpop.permute.xlu0 %1467
    %1471 = vset.pattern.permute.xlu0 0
    %1472 = vperm.xlu0 %1471, %v1170
    %v1473 = vpop.permute.xlu0 %1472
    %1476 = vset.pattern.permute.xlu0 0
    %1477 = vperm.xlu0 %1476, %v1171
    %v1478 = vpop.permute.xlu0 %1477
    %1481 = vset.pattern.permute.xlu0 0
    %1482 = vperm.xlu0 %1481, %v1172
    %v1483 = vpop.permute.xlu0 %1482
    %1486 = vset.pattern.permute.xlu0 0
    %1487 = vperm.xlu0 %1486, %v1173
    %v1488 = vpop.permute.xlu0 %1487
    %1491 = vset.pattern.permute.xlu0 0
    %1492 = vperm.xlu0 %1491, %v1174
    %v1493 = vpop.permute.xlu0 %1492
    %v1495 = vmul.f32 %v440, %v1178
    %v1496 = vmul.f32 %v442, %v1178
    %v1497 = vmul.f32 %v793, %v1178
    %v1498 = vmul.f32 %v795, %v1178
    %v1499 = vmul.f32 %v444, %v1183
    %v1500 = vmul.f32 %v446, %v1183
    %v1501 = vmul.f32 %v797, %v1183
    %v1502 = vmul.f32 %v799, %v1183
    %v1503 = vmul.f32 %v450, %v1188
    %v1504 = vmul.f32 %v452, %v1188
    %v1505 = vmul.f32 %v803, %v1188
    %v1506 = vmul.f32 %v805, %v1188
    %v1507 = vmul.f32 %v454, %v1193
    %v1508 = vmul.f32 %v456, %v1193
    %v1509 = vmul.f32 %v807, %v1193
    %v1510 = vmul.f32 %v809, %v1193
    %v1511 = vmul.f32 %v460, %v1198
    %v1512 = vmul.f32 %v462, %v1198
    %v1513 = vmul.f32 %v813, %v1198
    %v1514 = vmul.f32 %v815, %v1198
    %v1515 = vmul.f32 %v464, %v1203
    %v1516 = vmul.f32 %v466, %v1203
    %v1517 = vmul.f32 %v817, %v1203
    %v1518 = vmul.f32 %v819, %v1203
    %v1519 = vmul.f32 %v470, %v1208
    %v1520 = vmul.f32 %v472, %v1208
    %v1521 = vmul.f32 %v823, %v1208
    %v1522 = vmul.f32 %v825, %v1208
    %v1523 = vmul.f32 %v474, %v1213
    %v1524 = vmul.f32 %v476, %v1213
    %v1525 = vmul.f32 %v827, %v1213
    %v1526 = vmul.f32 %v829, %v1213
    %v1527 = vmul.f32 %v480, %v1218
    %v1528 = vmul.f32 %v482, %v1218
    %v1529 = vmul.f32 %v833, %v1218
    %v1530 = vmul.f32 %v835, %v1218
    %v1531 = vmul.f32 %v484, %v1223
    %v1532 = vmul.f32 %v486, %v1223
    %v1533 = vmul.f32 %v837, %v1223
    %v1534 = vmul.f32 %v839, %v1223
    %v1535 = vmul.f32 %v490, %v1228
    %v1536 = vmul.f32 %v492, %v1228
    %v1537 = vmul.f32 %v843, %v1228
    %v1538 = vmul.f32 %v845, %v1228
    %v1539 = vmul.f32 %v494, %v1233
    %v1540 = vmul.f32 %v496, %v1233
    %v1541 = vmul.f32 %v847, %v1233
    %v1542 = vmul.f32 %v849, %v1233
    %v1543 = vmul.f32 %v500, %v1238
    %v1544 = vmul.f32 %v502, %v1238
    %v1545 = vmul.f32 %v853, %v1238
    %v1546 = vmul.f32 %v855, %v1238
    %v1547 = vmul.f32 %v504, %v1243
    %v1548 = vmul.f32 %v506, %v1243
    %v1549 = vmul.f32 %v857, %v1243
    %v1550 = vmul.f32 %v859, %v1243
    %v1551 = vmul.f32 %v510, %v1248
    %v1552 = vmul.f32 %v512, %v1248
    %v1553 = vmul.f32 %v863, %v1248
    %v1554 = vmul.f32 %v865, %v1248
    %v1555 = vmul.f32 %v514, %v1253
    %v1556 = vmul.f32 %v516, %v1253
    %v1557 = vmul.f32 %v867, %v1253
    %v1558 = vmul.f32 %v869, %v1253
    %v1559 = vmul.f32 %v520, %v1258
    %v1560 = vmul.f32 %v522, %v1258
    %v1561 = vmul.f32 %v873, %v1258
    %v1562 = vmul.f32 %v875, %v1258
    %v1563 = vmul.f32 %v524, %v1263
    %v1564 = vmul.f32 %v526, %v1263
    %v1565 = vmul.f32 %v877, %v1263
    %v1566 = vmul.f32 %v879, %v1263
    %v1567 = vmul.f32 %v530, %v1268
    %v1568 = vmul.f32 %v532, %v1268
    %v1569 = vmul.f32 %v883, %v1268
    %v1570 = vmul.f32 %v885, %v1268
    %v1571 = vmul.f32 %v534, %v1273
    %v1572 = vmul.f32 %v536, %v1273
    %v1573 = vmul.f32 %v887, %v1273
    %v1574 = vmul.f32 %v889, %v1273
    %v1575 = vmul.f32 %v540, %v1278
    %v1576 = vmul.f32 %v542, %v1278
    %v1577 = vmul.f32 %v893, %v1278
    %v1578 = vmul.f32 %v895, %v1278
    %v1579 = vmul.f32 %v544, %v1283
    %v1580 = vmul.f32 %v546, %v1283
    %v1581 = vmul.f32 %v897, %v1283
    %v1582 = vmul.f32 %v899, %v1283
    %v1583 = vmul.f32 %v550, %v1288
    %v1584 = vmul.f32 %v552, %v1288
    %v1585 = vmul.f32 %v903, %v1288
    %v1586 = vmul.f32 %v905, %v1288
    %v1587 = vmul.f32 %v554, %v1293
    %v1588 = vmul.f32 %v556, %v1293
    %v1589 = vmul.f32 %v907, %v1293
    %v1590 = vmul.f32 %v909, %v1293
    %v1591 = vmul.f32 %v560, %v1298
    %v1592 = vmul.f32 %v562, %v1298
    %v1593 = vmul.f32 %v913, %v1298
    %v1594 = vmul.f32 %v915, %v1298
    %v1595 = vmul.f32 %v564, %v1303
    %v1596 = vmul.f32 %v566, %v1303
    %v1597 = vmul.f32 %v917, %v1303
    %v1598 = vmul.f32 %v919, %v1303
    %v1599 = vmul.f32 %v570, %v1308
    %v1600 = vmul.f32 %v572, %v1308
    %v1601 = vmul.f32 %v923, %v1308
    %v1602 = vmul.f32 %v925, %v1308
    %v1603 = vmul.f32 %v574, %v1313
    %v1604 = vmul.f32 %v576, %v1313
    %v1605 = vmul.f32 %v927, %v1313
    %v1606 = vmul.f32 %v929, %v1313
    %v1607 = vmul.f32 %v580, %v1318
    %v1608 = vmul.f32 %v582, %v1318
    %v1609 = vmul.f32 %v933, %v1318
    %v1610 = vmul.f32 %v935, %v1318
    %v1611 = vmul.f32 %v584, %v1323
    %v1612 = vmul.f32 %v586, %v1323
    %v1613 = vmul.f32 %v937, %v1323
    %v1614 = vmul.f32 %v939, %v1323
    %v1615 = vmul.f32 %v590, %v1328
    %v1616 = vmul.f32 %v592, %v1328
    %v1617 = vmul.f32 %v943, %v1328
    %v1618 = vmul.f32 %v945, %v1328
    %v1619 = vmul.f32 %v594, %v1333
    %v1620 = vmul.f32 %v596, %v1333
    %v1621 = vmul.f32 %v947, %v1333
    %v1622 = vmul.f32 %v949, %v1333
    %v1623 = vmul.f32 %v600, %v1338
    %v1624 = vmul.f32 %v602, %v1338
    %v1625 = vmul.f32 %v953, %v1338
    %v1626 = vmul.f32 %v955, %v1338
    %v1627 = vmul.f32 %v604, %v1343
    %v1628 = vmul.f32 %v606, %v1343
    %v1629 = vmul.f32 %v957, %v1343
    %v1630 = vmul.f32 %v959, %v1343
    %v1631 = vmul.f32 %v610, %v1348
    %v1632 = vmul.f32 %v612, %v1348
    %v1633 = vmul.f32 %v963, %v1348
    %v1634 = vmul.f32 %v965, %v1348
    %v1635 = vmul.f32 %v614, %v1353
    %v1636 = vmul.f32 %v616, %v1353
    %v1637 = vmul.f32 %v967, %v1353
    %v1638 = vmul.f32 %v969, %v1353
    %v1639 = vmul.f32 %v620, %v1358
    %v1640 = vmul.f32 %v622, %v1358
    %v1641 = vmul.f32 %v973, %v1358
    %v1642 = vmul.f32 %v975, %v1358
    %v1643 = vmul.f32 %v624, %v1363
    %v1644 = vmul.f32 %v626, %v1363
    %v1645 = vmul.f32 %v977, %v1363
    %v1646 = vmul.f32 %v979, %v1363
    %v1647 = vmul.f32 %v630, %v1368
    %v1648 = vmul.f32 %v632, %v1368
    %v1649 = vmul.f32 %v983, %v1368
    %v1650 = vmul.f32 %v985, %v1368
    %v1651 = vmul.f32 %v634, %v1373
    %v1652 = vmul.f32 %v636, %v1373
    %v1653 = vmul.f32 %v987, %v1373
    %v1654 = vmul.f32 %v989, %v1373
    %v1655 = vmul.f32 %v640, %v1378
    %v1656 = vmul.f32 %v642, %v1378
    %v1657 = vmul.f32 %v993, %v1378
    %v1658 = vmul.f32 %v995, %v1378
    %v1659 = vmul.f32 %v644, %v1383
    %v1660 = vmul.f32 %v646, %v1383
    %v1661 = vmul.f32 %v997, %v1383
    %v1662 = vmul.f32 %v999, %v1383
    %v1663 = vmul.f32 %v650, %v1388
    %v1664 = vmul.f32 %v652, %v1388
    %v1665 = vmul.f32 %v1003, %v1388
    %v1666 = vmul.f32 %v1005, %v1388
    %v1667 = vmul.f32 %v654, %v1393
    %v1668 = vmul.f32 %v656, %v1393
    %v1669 = vmul.f32 %v1007, %v1393
    %v1670 = vmul.f32 %v1009, %v1393
    %v1671 = vmul.f32 %v660, %v1398
    %v1672 = vmul.f32 %v662, %v1398
    %v1673 = vmul.f32 %v1013, %v1398
    %v1674 = vmul.f32 %v1015, %v1398
    %v1675 = vmul.f32 %v664, %v1403
    %v1676 = vmul.f32 %v666, %v1403
    %v1677 = vmul.f32 %v1017, %v1403
    %v1678 = vmul.f32 %v1019, %v1403
    %v1679 = vmul.f32 %v670, %v1408
    %v1680 = vmul.f32 %v672, %v1408
    %v1681 = vmul.f32 %v1023, %v1408
    %v1682 = vmul.f32 %v1025, %v1408
    %v1683 = vmul.f32 %v674, %v1413
    %v1684 = vmul.f32 %v676, %v1413
    %v1685 = vmul.f32 %v1027, %v1413
    %v1686 = vmul.f32 %v1029, %v1413
    %v1687 = vmul.f32 %v680, %v1418
    %v1688 = vmul.f32 %v682, %v1418
    %v1689 = vmul.f32 %v1033, %v1418
    %v1690 = vmul.f32 %v1035, %v1418
    %v1691 = vmul.f32 %v684, %v1423
    %v1692 = vmul.f32 %v686, %v1423
    %v1693 = vmul.f32 %v1037, %v1423
    %v1694 = vmul.f32 %v1039, %v1423
    %v1695 = vmul.f32 %v690, %v1428
    %v1696 = vmul.f32 %v692, %v1428
    %v1697 = vmul.f32 %v1043, %v1428
    %v1698 = vmul.f32 %v1045, %v1428
    %v1699 = vmul.f32 %v694, %v1433
    %v1700 = vmul.f32 %v696, %v1433
    %v1701 = vmul.f32 %v1047, %v1433
    %v1702 = vmul.f32 %v1049, %v1433
    %v1703 = vmul.f32 %v700, %v1438
    %v1704 = vmul.f32 %v702, %v1438
    %v1705 = vmul.f32 %v1053, %v1438
    %v1706 = vmul.f32 %v1055, %v1438
    %v1707 = vmul.f32 %v704, %v1443
    %v1708 = vmul.f32 %v706, %v1443
    %v1709 = vmul.f32 %v1057, %v1443
    %v1710 = vmul.f32 %v1059, %v1443
    %v1711 = vmul.f32 %v710, %v1448
    %v1712 = vmul.f32 %v712, %v1448
    %v1713 = vmul.f32 %v1063, %v1448
    %v1714 = vmul.f32 %v1065, %v1448
    %v1715 = vmul.f32 %v714, %v1453
    %v1716 = vmul.f32 %v716, %v1453
    %v1717 = vmul.f32 %v1067, %v1453
    %v1718 = vmul.f32 %v1069, %v1453
    %v1719 = vmul.f32 %v720, %v1458
    %v1720 = vmul.f32 %v722, %v1458
    %v1721 = vmul.f32 %v1073, %v1458
    %v1722 = vmul.f32 %v1075, %v1458
    %v1723 = vmul.f32 %v724, %v1463
    %v1724 = vmul.f32 %v726, %v1463
    %v1725 = vmul.f32 %v1077, %v1463
    %v1726 = vmul.f32 %v1079, %v1463
    %v1727 = vmul.f32 %v730, %v1468
    %v1728 = vmul.f32 %v732, %v1468
    %v1729 = vmul.f32 %v1083, %v1468
    %v1730 = vmul.f32 %v1085, %v1468
    %v1731 = vmul.f32 %v734, %v1473
    %v1732 = vmul.f32 %v736, %v1473
    %v1733 = vmul.f32 %v1087, %v1473
    %v1734 = vmul.f32 %v1089, %v1473
    %v1735 = vmul.f32 %v740, %v1478
    %v1736 = vmul.f32 %v742, %v1478
    %v1737 = vmul.f32 %v1093, %v1478
    %v1738 = vmul.f32 %v1095, %v1478
    %v1739 = vmul.f32 %v744, %v1483
    %v1740 = vmul.f32 %v746, %v1483
    %v1741 = vmul.f32 %v1097, %v1483
    %v1742 = vmul.f32 %v1099, %v1483
    %v1743 = vmul.f32 %v750, %v1488
    %v1744 = vmul.f32 %v752, %v1488
    %v1745 = vmul.f32 %v1103, %v1488
    %v1746 = vmul.f32 %v1105, %v1488
    %v1747 = vmul.f32 %v754, %v1493
    %v1748 = vmul.f32 %v756, %v1493
    %v1749 = vmul.f32 %v1107, %v1493
    %v1750 = vmul.f32 %v1109, %v1493
    %v1751 = vld [vmem:[%s3] sm:$0xff]
    %v1752 = vld [vmem:[%s3 + $0x8] sm:$0xff]
    %v1753 = vld [vmem:[%s3 + $0x10] sm:$0xff]
    %v1754 = vld [vmem:[%s3 + $0x18] sm:$0xff]
    %v1755 = vld [vmem:[%s3 + $0x20] sm:$0xff]
    %v1756 = vld [vmem:[%s3 + $0x28] sm:$0xff]
    %v1757 = vld [vmem:[%s3 + $0x30] sm:$0xff]
    %v1758 = vld [vmem:[%s3 + $0x38] sm:$0xff]
    %v1759 = vld [vmem:[%s3 + $0x40] sm:$0xff]
    %v1760 = vld [vmem:[%s3 + $0x48] sm:$0xff]
    %v1761 = vld [vmem:[%s3 + $0x50] sm:$0xff]
    %v1762 = vld [vmem:[%s3 + $0x58] sm:$0xff]
    %v1763 = vld [vmem:[%s3 + $0x60] sm:$0xff]
    %v1764 = vld [vmem:[%s3 + $0x68] sm:$0xff]
    %v1765 = vld [vmem:[%s3 + $0x70] sm:$0xff]
    %v1766 = vld [vmem:[%s3 + $0x78] sm:$0xff]
    %v1767 = vld [vmem:[%s3 + $0x80] sm:$0xff]
    %v1768 = vld [vmem:[%s3 + $0x88] sm:$0xff]
    %v1769 = vld [vmem:[%s3 + $0x90] sm:$0xff]
    %v1770 = vld [vmem:[%s3 + $0x98] sm:$0xff]
    %v1771 = vld [vmem:[%s3 + $0xa0] sm:$0xff]
    %v1772 = vld [vmem:[%s3 + $0xa8] sm:$0xff]
    %v1773 = vld [vmem:[%s3 + $0xb0] sm:$0xff]
    %v1774 = vld [vmem:[%s3 + $0xb8] sm:$0xff]
    %v1775 = vld [vmem:[%s3 + $0xc0] sm:$0xff]
    %v1776 = vld [vmem:[%s3 + $0xc8] sm:$0xff]
    %v1777 = vld [vmem:[%s3 + $0xd0] sm:$0xff]
    %v1778 = vld [vmem:[%s3 + $0xd8] sm:$0xff]
    %v1779 = vld [vmem:[%s3 + $0xe0] sm:$0xff]
    %v1780 = vld [vmem:[%s3 + $0xe8] sm:$0xff]
    %v1781 = vld [vmem:[%s3 + $0xf0] sm:$0xff]
    %v1782 = vld [vmem:[%s3 + $0xf8] sm:$0xff]
    %v1783 = vld [vmem:[%s3 + $0x100] sm:$0xff]
    %v1784 = vld [vmem:[%s3 + $0x108] sm:$0xff]
    %v1785 = vld [vmem:[%s3 + $0x110] sm:$0xff]
    %v1786 = vld [vmem:[%s3 + $0x118] sm:$0xff]
    %v1787 = vld [vmem:[%s3 + $0x120] sm:$0xff]
    %v1788 = vld [vmem:[%s3 + $0x128] sm:$0xff]
    %v1789 = vld [vmem:[%s3 + $0x130] sm:$0xff]
    %v1790 = vld [vmem:[%s3 + $0x138] sm:$0xff]
    %v1791 = vld [vmem:[%s3 + $0x140] sm:$0xff]
    %v1792 = vld [vmem:[%s3 + $0x148] sm:$0xff]
    %v1793 = vld [vmem:[%s3 + $0x150] sm:$0xff]
    %v1794 = vld [vmem:[%s3 + $0x158] sm:$0xff]
    %v1795 = vld [vmem:[%s3 + $0x160] sm:$0xff]
    %v1796 = vld [vmem:[%s3 + $0x168] sm:$0xff]
    %v1797 = vld [vmem:[%s3 + $0x170] sm:$0xff]
    %v1798 = vld [vmem:[%s3 + $0x178] sm:$0xff]
    %v1799 = vld [vmem:[%s3 + $0x180] sm:$0xff]
    %v1800 = vld [vmem:[%s3 + $0x188] sm:$0xff]
    %v1801 = vld [vmem:[%s3 + $0x190] sm:$0xff]
    %v1802 = vld [vmem:[%s3 + $0x198] sm:$0xff]
    %v1803 = vld [vmem:[%s3 + $0x1a0] sm:$0xff]
    %v1804 = vld [vmem:[%s3 + $0x1a8] sm:$0xff]
    %v1805 = vld [vmem:[%s3 + $0x1b0] sm:$0xff]
    %v1806 = vld [vmem:[%s3 + $0x1b8] sm:$0xff]
    %v1807 = vld [vmem:[%s3 + $0x1c0] sm:$0xff]
    %v1808 = vld [vmem:[%s3 + $0x1c8] sm:$0xff]
    %v1809 = vld [vmem:[%s3 + $0x1d0] sm:$0xff]
    %v1810 = vld [vmem:[%s3 + $0x1d8] sm:$0xff]
    %v1811 = vld [vmem:[%s3 + $0x1e0] sm:$0xff]
    %v1812 = vld [vmem:[%s3 + $0x1e8] sm:$0xff]
    %v1813 = vld [vmem:[%s3 + $0x1f0] sm:$0xff]
    %v1814 = vld [vmem:[%s3 + $0x1f8] sm:$0xff]
    %1816 = vset.pattern.permute.xlu0 0
    %1817 = vperm.xlu0 %1816, %v1751
    %v1818 = vpop.permute.xlu0 %1817
    %1821 = vset.pattern.permute.xlu0 0
    %1822 = vperm.xlu0 %1821, %v1752
    %v1823 = vpop.permute.xlu0 %1822
    %1826 = vset.pattern.permute.xlu0 0
    %1827 = vperm.xlu0 %1826, %v1753
    %v1828 = vpop.permute.xlu0 %1827
    %1831 = vset.pattern.permute.xlu0 0
    %1832 = vperm.xlu0 %1831, %v1754
    %v1833 = vpop.permute.xlu0 %1832
    %1836 = vset.pattern.permute.xlu0 0
    %1837 = vperm.xlu0 %1836, %v1755
    %v1838 = vpop.permute.xlu0 %1837
    %1841 = vset.pattern.permute.xlu0 0
    %1842 = vperm.xlu0 %1841, %v1756
    %v1843 = vpop.permute.xlu0 %1842
    %1846 = vset.pattern.permute.xlu0 0
    %1847 = vperm.xlu0 %1846, %v1757
    %v1848 = vpop.permute.xlu0 %1847
    %1851 = vset.pattern.permute.xlu0 0
    %1852 = vperm.xlu0 %1851, %v1758
    %v1853 = vpop.permute.xlu0 %1852
    %1856 = vset.pattern.permute.xlu0 0
    %1857 = vperm.xlu0 %1856, %v1759
    %v1858 = vpop.permute.xlu0 %1857
    %1861 = vset.pattern.permute.xlu0 0
    %1862 = vperm.xlu0 %1861, %v1760
    %v1863 = vpop.permute.xlu0 %1862
    %1866 = vset.pattern.permute.xlu0 0
    %1867 = vperm.xlu0 %1866, %v1761
    %v1868 = vpop.permute.xlu0 %1867
    %1871 = vset.pattern.permute.xlu0 0
    %1872 = vperm.xlu0 %1871, %v1762
    %v1873 = vpop.permute.xlu0 %1872
    %1876 = vset.pattern.permute.xlu0 0
    %1877 = vperm.xlu0 %1876, %v1763
    %v1878 = vpop.permute.xlu0 %1877
    %1881 = vset.pattern.permute.xlu0 0
    %1882 = vperm.xlu0 %1881, %v1764
    %v1883 = vpop.permute.xlu0 %1882
    %1886 = vset.pattern.permute.xlu0 0
    %1887 = vperm.xlu0 %1886, %v1765
    %v1888 = vpop.permute.xlu0 %1887
    %1891 = vset.pattern.permute.xlu0 0
    %1892 = vperm.xlu0 %1891, %v1766
    %v1893 = vpop.permute.xlu0 %1892
    %1896 = vset.pattern.permute.xlu0 0
    %1897 = vperm.xlu0 %1896, %v1767
    %v1898 = vpop.permute.xlu0 %1897
    %1901 = vset.pattern.permute.xlu0 0
    %1902 = vperm.xlu0 %1901, %v1768
    %v1903 = vpop.permute.xlu0 %1902
    %1906 = vset.pattern.permute.xlu0 0
    %1907 = vperm.xlu0 %1906, %v1769
    %v1908 = vpop.permute.xlu0 %1907
    %1911 = vset.pattern.permute.xlu0 0
    %1912 = vperm.xlu0 %1911, %v1770
    %v1913 = vpop.permute.xlu0 %1912
    %1916 = vset.pattern.permute.xlu0 0
    %1917 = vperm.xlu0 %1916, %v1771
    %v1918 = vpop.permute.xlu0 %1917
    %1921 = vset.pattern.permute.xlu0 0
    %1922 = vperm.xlu0 %1921, %v1772
    %v1923 = vpop.permute.xlu0 %1922
    %1926 = vset.pattern.permute.xlu0 0
    %1927 = vperm.xlu0 %1926, %v1773
    %v1928 = vpop.permute.xlu0 %1927
    %1931 = vset.pattern.permute.xlu0 0
    %1932 = vperm.xlu0 %1931, %v1774
    %v1933 = vpop.permute.xlu0 %1932
    %1936 = vset.pattern.permute.xlu0 0
    %1937 = vperm.xlu0 %1936, %v1775
    %v1938 = vpop.permute.xlu0 %1937
    %1941 = vset.pattern.permute.xlu0 0
    %1942 = vperm.xlu0 %1941, %v1776
    %v1943 = vpop.permute.xlu0 %1942
    %1946 = vset.pattern.permute.xlu0 0
    %1947 = vperm.xlu0 %1946, %v1777
    %v1948 = vpop.permute.xlu0 %1947
    %1951 = vset.pattern.permute.xlu0 0
    %1952 = vperm.xlu0 %1951, %v1778
    %v1953 = vpop.permute.xlu0 %1952
    %1956 = vset.pattern.permute.xlu0 0
    %1957 = vperm.xlu0 %1956, %v1779
    %v1958 = vpop.permute.xlu0 %1957
    %1961 = vset.pattern.permute.xlu0 0
    %1962 = vperm.xlu0 %1961, %v1780
    %v1963 = vpop.permute.xlu0 %1962
    %1966 = vset.pattern.permute.xlu0 0
    %1967 = vperm.xlu0 %1966, %v1781
    %v1968 = vpop.permute.xlu0 %1967
    %1971 = vset.pattern.permute.xlu0 0
    %1972 = vperm.xlu0 %1971, %v1782
    %v1973 = vpop.permute.xlu0 %1972
    %1976 = vset.pattern.permute.xlu0 0
    %1977 = vperm.xlu0 %1976, %v1783
    %v1978 = vpop.permute.xlu0 %1977
    %1981 = vset.pattern.permute.xlu0 0
    %1982 = vperm.xlu0 %1981, %v1784
    %v1983 = vpop.permute.xlu0 %1982
    %1986 = vset.pattern.permute.xlu0 0
    %1987 = vperm.xlu0 %1986, %v1785
    %v1988 = vpop.permute.xlu0 %1987
    %1991 = vset.pattern.permute.xlu0 0
    %1992 = vperm.xlu0 %1991, %v1786
    %v1993 = vpop.permute.xlu0 %1992
    %1996 = vset.pattern.permute.xlu0 0
    %1997 = vperm.xlu0 %1996, %v1787
    %v1998 = vpop.permute.xlu0 %1997
    %2001 = vset.pattern.permute.xlu0 0
    %2002 = vperm.xlu0 %2001, %v1788
    %v2003 = vpop.permute.xlu0 %2002
    %2006 = vset.pattern.permute.xlu0 0
    %2007 = vperm.xlu0 %2006, %v1789
    %v2008 = vpop.permute.xlu0 %2007
    %2011 = vset.pattern.permute.xlu0 0
    %2012 = vperm.xlu0 %2011, %v1790
    %v2013 = vpop.permute.xlu0 %2012
    %2016 = vset.pattern.permute.xlu0 0
    %2017 = vperm.xlu0 %2016, %v1791
    %v2018 = vpop.permute.xlu0 %2017
    %2021 = vset.pattern.permute.xlu0 0
    %2022 = vperm.xlu0 %2021, %v1792
    %v2023 = vpop.permute.xlu0 %2022
    %2026 = vset.pattern.permute.xlu0 0
    %2027 = vperm.xlu0 %2026, %v1793
    %v2028 = vpop.permute.xlu0 %2027
    %2031 = vset.pattern.permute.xlu0 0
    %2032 = vperm.xlu0 %2031, %v1794
    %v2033 = vpop.permute.xlu0 %2032
    %2036 = vset.pattern.permute.xlu0 0
    %2037 = vperm.xlu0 %2036, %v1795
    %v2038 = vpop.permute.xlu0 %2037
    %2041 = vset.pattern.permute.xlu0 0
    %2042 = vperm.xlu0 %2041, %v1796
    %v2043 = vpop.permute.xlu0 %2042
    %2046 = vset.pattern.permute.xlu0 0
    %2047 = vperm.xlu0 %2046, %v1797
    %v2048 = vpop.permute.xlu0 %2047
    %2051 = vset.pattern.permute.xlu0 0
    %2052 = vperm.xlu0 %2051, %v1798
    %v2053 = vpop.permute.xlu0 %2052
    %2056 = vset.pattern.permute.xlu0 0
    %2057 = vperm.xlu0 %2056, %v1799
    %v2058 = vpop.permute.xlu0 %2057
    %2061 = vset.pattern.permute.xlu0 0
    %2062 = vperm.xlu0 %2061, %v1800
    %v2063 = vpop.permute.xlu0 %2062
    %2066 = vset.pattern.permute.xlu0 0
    %2067 = vperm.xlu0 %2066, %v1801
    %v2068 = vpop.permute.xlu0 %2067
    %2071 = vset.pattern.permute.xlu0 0
    %2072 = vperm.xlu0 %2071, %v1802
    %v2073 = vpop.permute.xlu0 %2072
    %2076 = vset.pattern.permute.xlu0 0
    %2077 = vperm.xlu0 %2076, %v1803
    %v2078 = vpop.permute.xlu0 %2077
    %2081 = vset.pattern.permute.xlu0 0
    %2082 = vperm.xlu0 %2081, %v1804
    %v2083 = vpop.permute.xlu0 %2082
    %2086 = vset.pattern.permute.xlu0 0
    %2087 = vperm.xlu0 %2086, %v1805
    %v2088 = vpop.permute.xlu0 %2087
    %2091 = vset.pattern.permute.xlu0 0
    %2092 = vperm.xlu0 %2091, %v1806
    %v2093 = vpop.permute.xlu0 %2092
    %2096 = vset.pattern.permute.xlu0 0
    %2097 = vperm.xlu0 %2096, %v1807
    %v2098 = vpop.permute.xlu0 %2097
    %2101 = vset.pattern.permute.xlu0 0
    %2102 = vperm.xlu0 %2101, %v1808
    %v2103 = vpop.permute.xlu0 %2102
    %2106 = vset.pattern.permute.xlu0 0
    %2107 = vperm.xlu0 %2106, %v1809
    %v2108 = vpop.permute.xlu0 %2107
    %2111 = vset.pattern.permute.xlu0 0
    %2112 = vperm.xlu0 %2111, %v1810
    %v2113 = vpop.permute.xlu0 %2112
    %2116 = vset.pattern.permute.xlu0 0
    %2117 = vperm.xlu0 %2116, %v1811
    %v2118 = vpop.permute.xlu0 %2117
    %2121 = vset.pattern.permute.xlu0 0
    %2122 = vperm.xlu0 %2121, %v1812
    %v2123 = vpop.permute.xlu0 %2122
    %2126 = vset.pattern.permute.xlu0 0
    %2127 = vperm.xlu0 %2126, %v1813
    %v2128 = vpop.permute.xlu0 %2127
    %2131 = vset.pattern.permute.xlu0 0
    %2132 = vperm.xlu0 %2131, %v1814
    %v2133 = vpop.permute.xlu0 %2132
    %v2135 = vadd.f32 %v1495, %v1818
    %v2136 = vadd.f32 %v1496, %v1818
    %v2137 = vadd.f32 %v1497, %v1818
    %v2138 = vadd.f32 %v1498, %v1818
    %v2139 = vadd.f32 %v1499, %v1823
    %v2140 = vadd.f32 %v1500, %v1823
    %v2141 = vadd.f32 %v1501, %v1823
    %v2142 = vadd.f32 %v1502, %v1823
    %v2143 = vadd.f32 %v1503, %v1828
    %v2144 = vadd.f32 %v1504, %v1828
    %v2145 = vadd.f32 %v1505, %v1828
    %v2146 = vadd.f32 %v1506, %v1828
    %v2147 = vadd.f32 %v1507, %v1833
    %v2148 = vadd.f32 %v1508, %v1833
    %v2149 = vadd.f32 %v1509, %v1833
    %v2150 = vadd.f32 %v1510, %v1833
    %v2151 = vadd.f32 %v1511, %v1838
    %v2152 = vadd.f32 %v1512, %v1838
    %v2153 = vadd.f32 %v1513, %v1838
    %v2154 = vadd.f32 %v1514, %v1838
    %v2155 = vadd.f32 %v1515, %v1843
    %v2156 = vadd.f32 %v1516, %v1843
    %v2157 = vadd.f32 %v1517, %v1843
    %v2158 = vadd.f32 %v1518, %v1843
    %v2159 = vadd.f32 %v1519, %v1848
    %v2160 = vadd.f32 %v1520, %v1848
    %v2161 = vadd.f32 %v1521, %v1848
    %v2162 = vadd.f32 %v1522, %v1848
    %v2163 = vadd.f32 %v1523, %v1853
    %v2164 = vadd.f32 %v1524, %v1853
    %v2165 = vadd.f32 %v1525, %v1853
    %v2166 = vadd.f32 %v1526, %v1853
    %v2167 = vadd.f32 %v1527, %v1858
    %v2168 = vadd.f32 %v1528, %v1858
    %v2169 = vadd.f32 %v1529, %v1858
    %v2170 = vadd.f32 %v1530, %v1858
    %v2171 = vadd.f32 %v1531, %v1863
    %v2172 = vadd.f32 %v1532, %v1863
    %v2173 = vadd.f32 %v1533, %v1863
    %v2174 = vadd.f32 %v1534, %v1863
    %v2175 = vadd.f32 %v1535, %v1868
    %v2176 = vadd.f32 %v1536, %v1868
    %v2177 = vadd.f32 %v1537, %v1868
    %v2178 = vadd.f32 %v1538, %v1868
    %v2179 = vadd.f32 %v1539, %v1873
    %v2180 = vadd.f32 %v1540, %v1873
    %v2181 = vadd.f32 %v1541, %v1873
    %v2182 = vadd.f32 %v1542, %v1873
    %v2183 = vadd.f32 %v1543, %v1878
    %v2184 = vadd.f32 %v1544, %v1878
    %v2185 = vadd.f32 %v1545, %v1878
    %v2186 = vadd.f32 %v1546, %v1878
    %v2187 = vadd.f32 %v1547, %v1883
    %v2188 = vadd.f32 %v1548, %v1883
    %v2189 = vadd.f32 %v1549, %v1883
    %v2190 = vadd.f32 %v1550, %v1883
    %v2191 = vadd.f32 %v1551, %v1888
    %v2192 = vadd.f32 %v1552, %v1888
    %v2193 = vadd.f32 %v1553, %v1888
    %v2194 = vadd.f32 %v1554, %v1888
    %v2195 = vadd.f32 %v1555, %v1893
    %v2196 = vadd.f32 %v1556, %v1893
    %v2197 = vadd.f32 %v1557, %v1893
    %v2198 = vadd.f32 %v1558, %v1893
    %v2199 = vadd.f32 %v1559, %v1898
    %v2200 = vadd.f32 %v1560, %v1898
    %v2201 = vadd.f32 %v1561, %v1898
    %v2202 = vadd.f32 %v1562, %v1898
    %v2203 = vadd.f32 %v1563, %v1903
    %v2204 = vadd.f32 %v1564, %v1903
    %v2205 = vadd.f32 %v1565, %v1903
    %v2206 = vadd.f32 %v1566, %v1903
    %v2207 = vadd.f32 %v1567, %v1908
    %v2208 = vadd.f32 %v1568, %v1908
    %v2209 = vadd.f32 %v1569, %v1908
    %v2210 = vadd.f32 %v1570, %v1908
    %v2211 = vadd.f32 %v1571, %v1913
    %v2212 = vadd.f32 %v1572, %v1913
    %v2213 = vadd.f32 %v1573, %v1913
    %v2214 = vadd.f32 %v1574, %v1913
    %v2215 = vadd.f32 %v1575, %v1918
    %v2216 = vadd.f32 %v1576, %v1918
    %v2217 = vadd.f32 %v1577, %v1918
    %v2218 = vadd.f32 %v1578, %v1918
    %v2219 = vadd.f32 %v1579, %v1923
    %v2220 = vadd.f32 %v1580, %v1923
    %v2221 = vadd.f32 %v1581, %v1923
    %v2222 = vadd.f32 %v1582, %v1923
    %v2223 = vadd.f32 %v1583, %v1928
    %v2224 = vadd.f32 %v1584, %v1928
    %v2225 = vadd.f32 %v1585, %v1928
    %v2226 = vadd.f32 %v1586, %v1928
    %v2227 = vadd.f32 %v1587, %v1933
    %v2228 = vadd.f32 %v1588, %v1933
    %v2229 = vadd.f32 %v1589, %v1933
    %v2230 = vadd.f32 %v1590, %v1933
    %v2231 = vadd.f32 %v1591, %v1938
    %v2232 = vadd.f32 %v1592, %v1938
    %v2233 = vadd.f32 %v1593, %v1938
    %v2234 = vadd.f32 %v1594, %v1938
    %v2235 = vadd.f32 %v1595, %v1943
    %v2236 = vadd.f32 %v1596, %v1943
    %v2237 = vadd.f32 %v1597, %v1943
    %v2238 = vadd.f32 %v1598, %v1943
    %v2239 = vadd.f32 %v1599, %v1948
    %v2240 = vadd.f32 %v1600, %v1948
    %v2241 = vadd.f32 %v1601, %v1948
    %v2242 = vadd.f32 %v1602, %v1948
    %v2243 = vadd.f32 %v1603, %v1953
    %v2244 = vadd.f32 %v1604, %v1953
    %v2245 = vadd.f32 %v1605, %v1953
    %v2246 = vadd.f32 %v1606, %v1953
    %v2247 = vadd.f32 %v1607, %v1958
    %v2248 = vadd.f32 %v1608, %v1958
    %v2249 = vadd.f32 %v1609, %v1958
    %v2250 = vadd.f32 %v1610, %v1958
    %v2251 = vadd.f32 %v1611, %v1963
    %v2252 = vadd.f32 %v1612, %v1963
    %v2253 = vadd.f32 %v1613, %v1963
    %v2254 = vadd.f32 %v1614, %v1963
    %v2255 = vadd.f32 %v1615, %v1968
    %v2256 = vadd.f32 %v1616, %v1968
    %v2257 = vadd.f32 %v1617, %v1968
    %v2258 = vadd.f32 %v1618, %v1968
    %v2259 = vadd.f32 %v1619, %v1973
    %v2260 = vadd.f32 %v1620, %v1973
    %v2261 = vadd.f32 %v1621, %v1973
    %v2262 = vadd.f32 %v1622, %v1973
    %v2263 = vadd.f32 %v1623, %v1978
    %v2264 = vadd.f32 %v1624, %v1978
    %v2265 = vadd.f32 %v1625, %v1978
    %v2266 = vadd.f32 %v1626, %v1978
    %v2267 = vadd.f32 %v1627, %v1983
    %v2268 = vadd.f32 %v1628, %v1983
    %v2269 = vadd.f32 %v1629, %v1983
    %v2270 = vadd.f32 %v1630, %v1983
    %v2271 = vadd.f32 %v1631, %v1988
    %v2272 = vadd.f32 %v1632, %v1988
    %v2273 = vadd.f32 %v1633, %v1988
    %v2274 = vadd.f32 %v1634, %v1988
    %v2275 = vadd.f32 %v1635, %v1993
    %v2276 = vadd.f32 %v1636, %v1993
    %v2277 = vadd.f32 %v1637, %v1993
    %v2278 = vadd.f32 %v1638, %v1993
    %v2279 = vadd.f32 %v1639, %v1998
    %v2280 = vadd.f32 %v1640, %v1998
    %v2281 = vadd.f32 %v1641, %v1998
    %v2282 = vadd.f32 %v1642, %v1998
    %v2283 = vadd.f32 %v1643, %v2003
    %v2284 = vadd.f32 %v1644, %v2003
    %v2285 = vadd.f32 %v1645, %v2003
    %v2286 = vadd.f32 %v1646, %v2003
    %v2287 = vadd.f32 %v1647, %v2008
    %v2288 = vadd.f32 %v1648, %v2008
    %v2289 = vadd.f32 %v1649, %v2008
    %v2290 = vadd.f32 %v1650, %v2008
    %v2291 = vadd.f32 %v1651, %v2013
    %v2292 = vadd.f32 %v1652, %v2013
    %v2293 = vadd.f32 %v1653, %v2013
    %v2294 = vadd.f32 %v1654, %v2013
    %v2295 = vadd.f32 %v1655, %v2018
    %v2296 = vadd.f32 %v1656, %v2018
    %v2297 = vadd.f32 %v1657, %v2018
    %v2298 = vadd.f32 %v1658, %v2018
    %v2299 = vadd.f32 %v1659, %v2023
    %v2300 = vadd.f32 %v1660, %v2023
    %v2301 = vadd.f32 %v1661, %v2023
    %v2302 = vadd.f32 %v1662, %v2023
    %v2303 = vadd.f32 %v1663, %v2028
    %v2304 = vadd.f32 %v1664, %v2028
    %v2305 = vadd.f32 %v1665, %v2028
    %v2306 = vadd.f32 %v1666, %v2028
    %v2307 = vadd.f32 %v1667, %v2033
    %v2308 = vadd.f32 %v1668, %v2033
    %v2309 = vadd.f32 %v1669, %v2033
    %v2310 = vadd.f32 %v1670, %v2033
    %v2311 = vadd.f32 %v1671, %v2038
    %v2312 = vadd.f32 %v1672, %v2038
    %v2313 = vadd.f32 %v1673, %v2038
    %v2314 = vadd.f32 %v1674, %v2038
    %v2315 = vadd.f32 %v1675, %v2043
    %v2316 = vadd.f32 %v1676, %v2043
    %v2317 = vadd.f32 %v1677, %v2043
    %v2318 = vadd.f32 %v1678, %v2043
    %v2319 = vadd.f32 %v1679, %v2048
    %v2320 = vadd.f32 %v1680, %v2048
    %v2321 = vadd.f32 %v1681, %v2048
    %v2322 = vadd.f32 %v1682, %v2048
    %v2323 = vadd.f32 %v1683, %v2053
    %v2324 = vadd.f32 %v1684, %v2053
    %v2325 = vadd.f32 %v1685, %v2053
    %v2326 = vadd.f32 %v1686, %v2053
    %v2327 = vadd.f32 %v1687, %v2058
    %v2328 = vadd.f32 %v1688, %v2058
    %v2329 = vadd.f32 %v1689, %v2058
    %v2330 = vadd.f32 %v1690, %v2058
    %v2331 = vadd.f32 %v1691, %v2063
    %v2332 = vadd.f32 %v1692, %v2063
    %v2333 = vadd.f32 %v1693, %v2063
    %v2334 = vadd.f32 %v1694, %v2063
    %v2335 = vadd.f32 %v1695, %v2068
    %v2336 = vadd.f32 %v1696, %v2068
    %v2337 = vadd.f32 %v1697, %v2068
    %v2338 = vadd.f32 %v1698, %v2068
    %v2339 = vadd.f32 %v1699, %v2073
    %v2340 = vadd.f32 %v1700, %v2073
    %v2341 = vadd.f32 %v1701, %v2073
    %v2342 = vadd.f32 %v1702, %v2073
    %v2343 = vadd.f32 %v1703, %v2078
    %v2344 = vadd.f32 %v1704, %v2078
    %v2345 = vadd.f32 %v1705, %v2078
    %v2346 = vadd.f32 %v1706, %v2078
    %v2347 = vadd.f32 %v1707, %v2083
    %v2348 = vadd.f32 %v1708, %v2083
    %v2349 = vadd.f32 %v1709, %v2083
    %v2350 = vadd.f32 %v1710, %v2083
    %v2351 = vadd.f32 %v1711, %v2088
    %v2352 = vadd.f32 %v1712, %v2088
    %v2353 = vadd.f32 %v1713, %v2088
    %v2354 = vadd.f32 %v1714, %v2088
    %v2355 = vadd.f32 %v1715, %v2093
    %v2356 = vadd.f32 %v1716, %v2093
    %v2357 = vadd.f32 %v1717, %v2093
    %v2358 = vadd.f32 %v1718, %v2093
    %v2359 = vadd.f32 %v1719, %v2098
    %v2360 = vadd.f32 %v1720, %v2098
    %v2361 = vadd.f32 %v1721, %v2098
    %v2362 = vadd.f32 %v1722, %v2098
    %v2363 = vadd.f32 %v1723, %v2103
    %v2364 = vadd.f32 %v1724, %v2103
    %v2365 = vadd.f32 %v1725, %v2103
    %v2366 = vadd.f32 %v1726, %v2103
    %v2367 = vadd.f32 %v1727, %v2108
    %v2368 = vadd.f32 %v1728, %v2108
    %v2369 = vadd.f32 %v1729, %v2108
    %v2370 = vadd.f32 %v1730, %v2108
    %v2371 = vadd.f32 %v1731, %v2113
    %v2372 = vadd.f32 %v1732, %v2113
    %v2373 = vadd.f32 %v1733, %v2113
    %v2374 = vadd.f32 %v1734, %v2113
    %v2375 = vadd.f32 %v1735, %v2118
    %v2376 = vadd.f32 %v1736, %v2118
    %v2377 = vadd.f32 %v1737, %v2118
    %v2378 = vadd.f32 %v1738, %v2118
    %v2379 = vadd.f32 %v1739, %v2123
    %v2380 = vadd.f32 %v1740, %v2123
    %v2381 = vadd.f32 %v1741, %v2123
    %v2382 = vadd.f32 %v1742, %v2123
    %v2383 = vadd.f32 %v1743, %v2128
    %v2384 = vadd.f32 %v1744, %v2128
    %v2385 = vadd.f32 %v1745, %v2128
    %v2386 = vadd.f32 %v1746, %v2128
    %v2387 = vadd.f32 %v1747, %v2133
    %v2388 = vadd.f32 %v1748, %v2133
    %v2389 = vadd.f32 %v1749, %v2133
    %v2390 = vadd.f32 %v1750, %v2133
    %v2391 = vmax.f32 %v2135, 0.0
    %v2392 = vmax.f32 %v2136, 0.0
    %v2393 = vmax.f32 %v2137, 0.0
    %v2394 = vmax.f32 %v2138, 0.0
    %v2395 = vmax.f32 %v2139, 0.0
    %v2396 = vmax.f32 %v2140, 0.0
    %v2397 = vmax.f32 %v2141, 0.0
    %v2398 = vmax.f32 %v2142, 0.0
    %v2399 = vmax.f32 %v2143, 0.0
    %v2400 = vmax.f32 %v2144, 0.0
    %v2401 = vmax.f32 %v2145, 0.0
    %v2402 = vmax.f32 %v2146, 0.0
    %v2403 = vmax.f32 %v2147, 0.0
    %v2404 = vmax.f32 %v2148, 0.0
    %v2405 = vmax.f32 %v2149, 0.0
    %v2406 = vmax.f32 %v2150, 0.0
    %v2407 = vmax.f32 %v2151, 0.0
    %v2408 = vmax.f32 %v2152, 0.0
    %v2409 = vmax.f32 %v2153, 0.0
    %v2410 = vmax.f32 %v2154, 0.0
    %v2411 = vmax.f32 %v2155, 0.0
    %v2412 = vmax.f32 %v2156, 0.0
    %v2413 = vmax.f32 %v2157, 0.0
    %v2414 = vmax.f32 %v2158, 0.0
    %v2415 = vmax.f32 %v2159, 0.0
    %v2416 = vmax.f32 %v2160, 0.0
    %v2417 = vmax.f32 %v2161, 0.0
    %v2418 = vmax.f32 %v2162, 0.0
    %v2419 = vmax.f32 %v2163, 0.0
    %v2420 = vmax.f32 %v2164, 0.0
    %v2421 = vmax.f32 %v2165, 0.0
    %v2422 = vmax.f32 %v2166, 0.0
    %v2423 = vmax.f32 %v2167, 0.0
    %v2424 = vmax.f32 %v2168, 0.0
    %v2425 = vmax.f32 %v2169, 0.0
    %v2426 = vmax.f32 %v2170, 0.0
    %v2427 = vmax.f32 %v2171, 0.0
    %v2428 = vmax.f32 %v2172, 0.0
    %v2429 = vmax.f32 %v2173, 0.0
    %v2430 = vmax.f32 %v2174, 0.0
    %v2431 = vmax.f32 %v2175, 0.0
    %v2432 = vmax.f32 %v2176, 0.0
    %v2433 = vmax.f32 %v2177, 0.0
    %v2434 = vmax.f32 %v2178, 0.0
    %v2435 = vmax.f32 %v2179, 0.0
    %v2436 = vmax.f32 %v2180, 0.0
    %v2437 = vmax.f32 %v2181, 0.0
    %v2438 = vmax.f32 %v2182, 0.0
    %v2439 = vmax.f32 %v2183, 0.0
    %v2440 = vmax.f32 %v2184, 0.0
    %v2441 = vmax.f32 %v2185, 0.0
    %v2442 = vmax.f32 %v2186, 0.0
    %v2443 = vmax.f32 %v2187, 0.0
    %v2444 = vmax.f32 %v2188, 0.0
    %v2445 = vmax.f32 %v2189, 0.0
    %v2446 = vmax.f32 %v2190, 0.0
    %v2447 = vmax.f32 %v2191, 0.0
    %v2448 = vmax.f32 %v2192, 0.0
    %v2449 = vmax.f32 %v2193, 0.0
    %v2450 = vmax.f32 %v2194, 0.0
    %v2451 = vmax.f32 %v2195, 0.0
    %v2452 = vmax.f32 %v2196, 0.0
    %v2453 = vmax.f32 %v2197, 0.0
    %v2454 = vmax.f32 %v2198, 0.0
    %v2455 = vmax.f32 %v2199, 0.0
    %v2456 = vmax.f32 %v2200, 0.0
    %v2457 = vmax.f32 %v2201, 0.0
    %v2458 = vmax.f32 %v2202, 0.0
    %v2459 = vmax.f32 %v2203, 0.0
    %v2460 = vmax.f32 %v2204, 0.0
    %v2461 = vmax.f32 %v2205, 0.0
    %v2462 = vmax.f32 %v2206, 0.0
    %v2463 = vmax.f32 %v2207, 0.0
    %v2464 = vmax.f32 %v2208, 0.0
    %v2465 = vmax.f32 %v2209, 0.0
    %v2466 = vmax.f32 %v2210, 0.0
    %v2467 = vmax.f32 %v2211, 0.0
    %v2468 = vmax.f32 %v2212, 0.0
    %v2469 = vmax.f32 %v2213, 0.0
    %v2470 = vmax.f32 %v2214, 0.0
    %v2471 = vmax.f32 %v2215, 0.0
    %v2472 = vmax.f32 %v2216, 0.0
    %v2473 = vmax.f32 %v2217, 0.0
    %v2474 = vmax.f32 %v2218, 0.0
    %v2475 = vmax.f32 %v2219, 0.0
    %v2476 = vmax.f32 %v2220, 0.0
    %v2477 = vmax.f32 %v2221, 0.0
    %v2478 = vmax.f32 %v2222, 0.0
    %v2479 = vmax.f32 %v2223, 0.0
    %v2480 = vmax.f32 %v2224, 0.0
    %v2481 = vmax.f32 %v2225, 0.0
    %v2482 = vmax.f32 %v2226, 0.0
    %v2483 = vmax.f32 %v2227, 0.0
    %v2484 = vmax.f32 %v2228, 0.0
    %v2485 = vmax.f32 %v2229, 0.0
    %v2486 = vmax.f32 %v2230, 0.0
    %v2487 = vmax.f32 %v2231, 0.0
    %v2488 = vmax.f32 %v2232, 0.0
    %v2489 = vmax.f32 %v2233, 0.0
    %v2490 = vmax.f32 %v2234, 0.0
    %v2491 = vmax.f32 %v2235, 0.0
    %v2492 = vmax.f32 %v2236, 0.0
    %v2493 = vmax.f32 %v2237, 0.0
    %v2494 = vmax.f32 %v2238, 0.0
    %v2495 = vmax.f32 %v2239, 0.0
    %v2496 = vmax.f32 %v2240, 0.0
    %v2497 = vmax.f32 %v2241, 0.0
    %v2498 = vmax.f32 %v2242, 0.0
    %v2499 = vmax.f32 %v2243, 0.0
    %v2500 = vmax.f32 %v2244, 0.0
    %v2501 = vmax.f32 %v2245, 0.0
    %v2502 = vmax.f32 %v2246, 0.0
    %v2503 = vmax.f32 %v2247, 0.0
    %v2504 = vmax.f32 %v2248, 0.0
    %v2505 = vmax.f32 %v2249, 0.0
    %v2506 = vmax.f32 %v2250, 0.0
    %v2507 = vmax.f32 %v2251, 0.0
    %v2508 = vmax.f32 %v2252, 0.0
    %v2509 = vmax.f32 %v2253, 0.0
    %v2510 = vmax.f32 %v2254, 0.0
    %v2511 = vmax.f32 %v2255, 0.0
    %v2512 = vmax.f32 %v2256, 0.0
    %v2513 = vmax.f32 %v2257, 0.0
    %v2514 = vmax.f32 %v2258, 0.0
    %v2515 = vmax.f32 %v2259, 0.0
    %v2516 = vmax.f32 %v2260, 0.0
    %v2517 = vmax.f32 %v2261, 0.0
    %v2518 = vmax.f32 %v2262, 0.0
    %v2519 = vmax.f32 %v2263, 0.0
    %v2520 = vmax.f32 %v2264, 0.0
    %v2521 = vmax.f32 %v2265, 0.0
    %v2522 = vmax.f32 %v2266, 0.0
    %v2523 = vmax.f32 %v2267, 0.0
    %v2524 = vmax.f32 %v2268, 0.0
    %v2525 = vmax.f32 %v2269, 0.0
    %v2526 = vmax.f32 %v2270, 0.0
    %v2527 = vmax.f32 %v2271, 0.0
    %v2528 = vmax.f32 %v2272, 0.0
    %v2529 = vmax.f32 %v2273, 0.0
    %v2530 = vmax.f32 %v2274, 0.0
    %v2531 = vmax.f32 %v2275, 0.0
    %v2532 = vmax.f32 %v2276, 0.0
    %v2533 = vmax.f32 %v2277, 0.0
    %v2534 = vmax.f32 %v2278, 0.0
    %v2535 = vmax.f32 %v2279, 0.0
    %v2536 = vmax.f32 %v2280, 0.0
    %v2537 = vmax.f32 %v2281, 0.0
    %v2538 = vmax.f32 %v2282, 0.0
    %v2539 = vmax.f32 %v2283, 0.0
    %v2540 = vmax.f32 %v2284, 0.0
    %v2541 = vmax.f32 %v2285, 0.0
    %v2542 = vmax.f32 %v2286, 0.0
    %v2543 = vmax.f32 %v2287, 0.0
    %v2544 = vmax.f32 %v2288, 0.0
    %v2545 = vmax.f32 %v2289, 0.0
    %v2546 = vmax.f32 %v2290, 0.0
    %v2547 = vmax.f32 %v2291, 0.0
    %v2548 = vmax.f32 %v2292, 0.0
    %v2549 = vmax.f32 %v2293, 0.0
    %v2550 = vmax.f32 %v2294, 0.0
    %v2551 = vmax.f32 %v2295, 0.0
    %v2552 = vmax.f32 %v2296, 0.0
    %v2553 = vmax.f32 %v2297, 0.0
    %v2554 = vmax.f32 %v2298, 0.0
    %v2555 = vmax.f32 %v2299, 0.0
    %v2556 = vmax.f32 %v2300, 0.0
    %v2557 = vmax.f32 %v2301, 0.0
    %v2558 = vmax.f32 %v2302, 0.0
    %v2559 = vmax.f32 %v2303, 0.0
    %v2560 = vmax.f32 %v2304, 0.0
    %v2561 = vmax.f32 %v2305, 0.0
    %v2562 = vmax.f32 %v2306, 0.0
    %v2563 = vmax.f32 %v2307, 0.0
    %v2564 = vmax.f32 %v2308, 0.0
    %v2565 = vmax.f32 %v2309, 0.0
    %v2566 = vmax.f32 %v2310, 0.0
    %v2567 = vmax.f32 %v2311, 0.0
    %v2568 = vmax.f32 %v2312, 0.0
    %v2569 = vmax.f32 %v2313, 0.0
    %v2570 = vmax.f32 %v2314, 0.0
    %v2571 = vmax.f32 %v2315, 0.0
    %v2572 = vmax.f32 %v2316, 0.0
    %v2573 = vmax.f32 %v2317, 0.0
    %v2574 = vmax.f32 %v2318, 0.0
    %v2575 = vmax.f32 %v2319, 0.0
    %v2576 = vmax.f32 %v2320, 0.0
    %v2577 = vmax.f32 %v2321, 0.0
    %v2578 = vmax.f32 %v2322, 0.0
    %v2579 = vmax.f32 %v2323, 0.0
    %v2580 = vmax.f32 %v2324, 0.0
    %v2581 = vmax.f32 %v2325, 0.0
    %v2582 = vmax.f32 %v2326, 0.0
    %v2583 = vmax.f32 %v2327, 0.0
    %v2584 = vmax.f32 %v2328, 0.0
    %v2585 = vmax.f32 %v2329, 0.0
    %v2586 = vmax.f32 %v2330, 0.0
    %v2587 = vmax.f32 %v2331, 0.0
    %v2588 = vmax.f32 %v2332, 0.0
    %v2589 = vmax.f32 %v2333, 0.0
    %v2590 = vmax.f32 %v2334, 0.0
    %v2591 = vmax.f32 %v2335, 0.0
    %v2592 = vmax.f32 %v2336, 0.0
    %v2593 = vmax.f32 %v2337, 0.0
    %v2594 = vmax.f32 %v2338, 0.0
    %v2595 = vmax.f32 %v2339, 0.0
    %v2596 = vmax.f32 %v2340, 0.0
    %v2597 = vmax.f32 %v2341, 0.0
    %v2598 = vmax.f32 %v2342, 0.0
    %v2599 = vmax.f32 %v2343, 0.0
    %v2600 = vmax.f32 %v2344, 0.0
    %v2601 = vmax.f32 %v2345, 0.0
    %v2602 = vmax.f32 %v2346, 0.0
    %v2603 = vmax.f32 %v2347, 0.0
    %v2604 = vmax.f32 %v2348, 0.0
    %v2605 = vmax.f32 %v2349, 0.0
    %v2606 = vmax.f32 %v2350, 0.0
    %v2607 = vmax.f32 %v2351, 0.0
    %v2608 = vmax.f32 %v2352, 0.0
    %v2609 = vmax.f32 %v2353, 0.0
    %v2610 = vmax.f32 %v2354, 0.0
    %v2611 = vmax.f32 %v2355, 0.0
    %v2612 = vmax.f32 %v2356, 0.0
    %v2613 = vmax.f32 %v2357, 0.0
    %v2614 = vmax.f32 %v2358, 0.0
    %v2615 = vmax.f32 %v2359, 0.0
    %v2616 = vmax.f32 %v2360, 0.0
    %v2617 = vmax.f32 %v2361, 0.0
    %v2618 = vmax.f32 %v2362, 0.0
    %v2619 = vmax.f32 %v2363, 0.0
    %v2620 = vmax.f32 %v2364, 0.0
    %v2621 = vmax.f32 %v2365, 0.0
    %v2622 = vmax.f32 %v2366, 0.0
    %v2623 = vmax.f32 %v2367, 0.0
    %v2624 = vmax.f32 %v2368, 0.0
    %v2625 = vmax.f32 %v2369, 0.0
    %v2626 = vmax.f32 %v2370, 0.0
    %v2627 = vmax.f32 %v2371, 0.0
    %v2628 = vmax.f32 %v2372, 0.0
    %v2629 = vmax.f32 %v2373, 0.0
    %v2630 = vmax.f32 %v2374, 0.0
    %v2631 = vmax.f32 %v2375, 0.0
    %v2632 = vmax.f32 %v2376, 0.0
    %v2633 = vmax.f32 %v2377, 0.0
    %v2634 = vmax.f32 %v2378, 0.0
    %v2635 = vmax.f32 %v2379, 0.0
    %v2636 = vmax.f32 %v2380, 0.0
    %v2637 = vmax.f32 %v2381, 0.0
    %v2638 = vmax.f32 %v2382, 0.0
    %v2639 = vmax.f32 %v2383, 0.0
    %v2640 = vmax.f32 %v2384, 0.0
    %v2641 = vmax.f32 %v2385, 0.0
    %v2642 = vmax.f32 %v2386, 0.0
    %v2643 = vmax.f32 %v2387, 0.0
    %v2644 = vmax.f32 %v2388, 0.0
    %v2645 = vmax.f32 %v2389, 0.0
    %v2646 = vmax.f32 %v2390, 0.0
    %v2647 = vld [vmem:[%s4] sm:$0xff]
    %v2648 = vld [vmem:[%s4 + $0x8] sm:$0xff]
    %v2649 = vld [vmem:[%s4 + $0x10] sm:$0xff]
    %v2650 = vld [vmem:[%s4 + $0x18] sm:$0xff]
    %v2651 = vld [vmem:[%s4 + $0x20] sm:$0xff]
    %v2652 = vld [vmem:[%s4 + $0x28] sm:$0xff]
    %v2653 = vld [vmem:[%s4 + $0x30] sm:$0xff]
    %v2654 = vld [vmem:[%s4 + $0x38] sm:$0xff]
    %v2655 = vld [vmem:[%s4 + $0x40] sm:$0xff]
    %v2656 = vld [vmem:[%s4 + $0x48] sm:$0xff]
    %v2657 = vld [vmem:[%s4 + $0x50] sm:$0xff]
    %v2658 = vld [vmem:[%s4 + $0x58] sm:$0xff]
    %v2659 = vld [vmem:[%s4 + $0x60] sm:$0xff]
    %v2660 = vld [vmem:[%s4 + $0x68] sm:$0xff]
    %v2661 = vld [vmem:[%s4 + $0x70] sm:$0xff]
    %v2662 = vld [vmem:[%s4 + $0x78] sm:$0xff]
    %v2663 = vpack.c.bf16 %v2395, %v2391
    %v2664 = vpack.c.bf16 %v2396, %v2392
    %v2665 = vpack.c.bf16 %v2397, %v2393
    %v2666 = vpack.c.bf16 %v2398, %v2394
    %v2667 = vpack.c.bf16 %v2403, %v2399
    %v2668 = vpack.c.bf16 %v2404, %v2400
    %v2669 = vpack.c.bf16 %v2405, %v2401
    %v2670 = vpack.c.bf16 %v2406, %v2402
    %v2671 = vpack.c.bf16 %v2411, %v2407
    %v2672 = vpack.c.bf16 %v2412, %v2408
    %v2673 = vpack.c.bf16 %v2413, %v2409
    %v2674 = vpack.c.bf16 %v2414, %v2410
    %v2675 = vpack.c.bf16 %v2419, %v2415
    %v2676 = vpack.c.bf16 %v2420, %v2416
    %v2677 = vpack.c.bf16 %v2421, %v2417
    %v2678 = vpack.c.bf16 %v2422, %v2418
    %v2679 = vpack.c.bf16 %v2427, %v2423
    %v2680 = vpack.c.bf16 %v2428, %v2424
    %v2681 = vpack.c.bf16 %v2429, %v2425
    %v2682 = vpack.c.bf16 %v2430, %v2426
    %v2683 = vpack.c.bf16 %v2435, %v2431
    %v2684 = vpack.c.bf16 %v2436, %v2432
    %v2685 = vpack.c.bf16 %v2437, %v2433
    %v2686 = vpack.c.bf16 %v2438, %v2434
    %v2687 = vpack.c.bf16 %v2443, %v2439
    %v2688 = vpack.c.bf16 %v2444, %v2440
    %v2689 = vpack.c.bf16 %v2445, %v2441
    %v2690 = vpack.c.bf16 %v2446, %v2442
    %v2691 = vpack.c.bf16 %v2451, %v2447
    %v2692 = vpack.c.bf16 %v2452, %v2448
    %v2693 = vpack.c.bf16 %v2453, %v2449
    %v2694 = vpack.c.bf16 %v2454, %v2450
    %v2695 = vpack.c.bf16 %v2459, %v2455
    %v2696 = vpack.c.bf16 %v2460, %v2456
    %v2697 = vpack.c.bf16 %v2461, %v2457
    %v2698 = vpack.c.bf16 %v2462, %v2458
    %v2699 = vpack.c.bf16 %v2467, %v2463
    %v2700 = vpack.c.bf16 %v2468, %v2464
    %v2701 = vpack.c.bf16 %v2469, %v2465
    %v2702 = vpack.c.bf16 %v2470, %v2466
    %v2703 = vpack.c.bf16 %v2475, %v2471
    %v2704 = vpack.c.bf16 %v2476, %v2472
    %v2705 = vpack.c.bf16 %v2477, %v2473
    %v2706 = vpack.c.bf16 %v2478, %v2474
    %v2707 = vpack.c.bf16 %v2483, %v2479
    %v2708 = vpack.c.bf16 %v2484, %v2480
    %v2709 = vpack.c.bf16 %v2485, %v2481
    %v2710 = vpack.c.bf16 %v2486, %v2482
    %v2711 = vpack.c.bf16 %v2491, %v2487
    %v2712 = vpack.c.bf16 %v2492, %v2488
    %v2713 = vpack.c.bf16 %v2493, %v2489
    %v2714 = vpack.c.bf16 %v2494, %v2490
    %v2715 = vpack.c.bf16 %v2499, %v2495
    %v2716 = vpack.c.bf16 %v2500, %v2496
    %v2717 = vpack.c.bf16 %v2501, %v2497
    %v2718 = vpack.c.bf16 %v2502, %v2498
    %v2719 = vpack.c.bf16 %v2507, %v2503
    %v2720 = vpack.c.bf16 %v2508, %v2504
    %v2721 = vpack.c.bf16 %v2509, %v2505
    %v2722 = vpack.c.bf16 %v2510, %v2506
    %v2723 = vpack.c.bf16 %v2515, %v2511
    %v2724 = vpack.c.bf16 %v2516, %v2512
    %v2725 = vpack.c.bf16 %v2517, %v2513
    %v2726 = vpack.c.bf16 %v2518, %v2514
    %v2727 = vpack.c.bf16 %v2523, %v2519
    %v2728 = vpack.c.bf16 %v2524, %v2520
    %v2729 = vpack.c.bf16 %v2525, %v2521
    %v2730 = vpack.c.bf16 %v2526, %v2522
    %v2731 = vpack.c.bf16 %v2531, %v2527
    %v2732 = vpack.c.bf16 %v2532, %v2528
    %v2733 = vpack.c.bf16 %v2533, %v2529
    %v2734 = vpack.c.bf16 %v2534, %v2530
    %v2735 = vpack.c.bf16 %v2539, %v2535
    %v2736 = vpack.c.bf16 %v2540, %v2536
    %v2737 = vpack.c.bf16 %v2541, %v2537
    %v2738 = vpack.c.bf16 %v2542, %v2538
    %v2739 = vpack.c.bf16 %v2547, %v2543
    %v2740 = vpack.c.bf16 %v2548, %v2544
    %v2741 = vpack.c.bf16 %v2549, %v2545
    %v2742 = vpack.c.bf16 %v2550, %v2546
    %v2743 = vpack.c.bf16 %v2555, %v2551
    %v2744 = vpack.c.bf16 %v2556, %v2552
    %v2745 = vpack.c.bf16 %v2557, %v2553
    %v2746 = vpack.c.bf16 %v2558, %v2554
    %v2747 = vpack.c.bf16 %v2563, %v2559
    %v2748 = vpack.c.bf16 %v2564, %v2560
    %v2749 = vpack.c.bf16 %v2565, %v2561
    %v2750 = vpack.c.bf16 %v2566, %v2562
    %v2751 = vpack.c.bf16 %v2571, %v2567
    %v2752 = vpack.c.bf16 %v2572, %v2568
    %v2753 = vpack.c.bf16 %v2573, %v2569
    %v2754 = vpack.c.bf16 %v2574, %v2570
    %v2755 = vpack.c.bf16 %v2579, %v2575
    %v2756 = vpack.c.bf16 %v2580, %v2576
    %v2757 = vpack.c.bf16 %v2581, %v2577
    %v2758 = vpack.c.bf16 %v2582, %v2578
    %v2759 = vpack.c.bf16 %v2587, %v2583
    %v2760 = vpack.c.bf16 %v2588, %v2584
    %v2761 = vpack.c.bf16 %v2589, %v2585
    %v2762 = vpack.c.bf16 %v2590, %v2586
    %v2763 = vpack.c.bf16 %v2595, %v2591
    %v2764 = vpack.c.bf16 %v2596, %v2592
    %v2765 = vpack.c.bf16 %v2597, %v2593
    %v2766 = vpack.c.bf16 %v2598, %v2594
    %v2767 = vpack.c.bf16 %v2603, %v2599
    %v2768 = vpack.c.bf16 %v2604, %v2600
    %v2769 = vpack.c.bf16 %v2605, %v2601
    %v2770 = vpack.c.bf16 %v2606, %v2602
    %v2771 = vpack.c.bf16 %v2611, %v2607
    %v2772 = vpack.c.bf16 %v2612, %v2608
    %v2773 = vpack.c.bf16 %v2613, %v2609
    %v2774 = vpack.c.bf16 %v2614, %v2610
    %v2775 = vpack.c.bf16 %v2619, %v2615
    %v2776 = vpack.c.bf16 %v2620, %v2616
    %v2777 = vpack.c.bf16 %v2621, %v2617
    %v2778 = vpack.c.bf16 %v2622, %v2618
    %v2779 = vpack.c.bf16 %v2627, %v2623
    %v2780 = vpack.c.bf16 %v2628, %v2624
    %v2781 = vpack.c.bf16 %v2629, %v2625
    %v2782 = vpack.c.bf16 %v2630, %v2626
    %v2783 = vpack.c.bf16 %v2635, %v2631
    %v2784 = vpack.c.bf16 %v2636, %v2632
    %v2785 = vpack.c.bf16 %v2637, %v2633
    %v2786 = vpack.c.bf16 %v2638, %v2634
    %v2787 = vpack.c.bf16 %v2643, %v2639
    %v2788 = vpack.c.bf16 %v2644, %v2640
    %v2789 = vpack.c.bf16 %v2645, %v2641
    %v2790 = vpack.c.bf16 %v2646, %v2642
    %v2807 = vunpack.c.l.b16 %v2647
    %v2808 = vunpack.c.h.b16 %v2647
    %v2809 = vunpack.c.l.b16 %v2648
    %v2810 = vunpack.c.h.b16 %v2648
    %v2811 = vunpack.c.l.b16 %v2649
    %v2812 = vunpack.c.h.b16 %v2649
    %v2813 = vunpack.c.l.b16 %v2650
    %v2814 = vunpack.c.h.b16 %v2650
    %v2815 = vunpack.c.l.b16 %v2651
    %v2816 = vunpack.c.h.b16 %v2651
    %v2817 = vunpack.c.l.b16 %v2652
    %v2818 = vunpack.c.h.b16 %v2652
    %v2819 = vunpack.c.l.b16 %v2653
    %v2820 = vunpack.c.h.b16 %v2653
    %v2821 = vunpack.c.l.b16 %v2654
    %v2822 = vunpack.c.h.b16 %v2654
    %v2823 = vunpack.c.l.b16 %v2655
    %v2824 = vunpack.c.h.b16 %v2655
    %v2825 = vunpack.c.l.b16 %v2656
    %v2826 = vunpack.c.h.b16 %v2656
    %v2827 = vunpack.c.l.b16 %v2657
    %v2828 = vunpack.c.h.b16 %v2657
    %v2829 = vunpack.c.l.b16 %v2658
    %v2830 = vunpack.c.h.b16 %v2658
    %v2831 = vunpack.c.l.b16 %v2659
    %v2832 = vunpack.c.h.b16 %v2659
    %v2833 = vunpack.c.l.b16 %v2660
    %v2834 = vunpack.c.h.b16 %v2660
    %v2835 = vunpack.c.l.b16 %v2661
    %v2836 = vunpack.c.h.b16 %v2661
    %v2837 = vunpack.c.l.b16 %v2662
    %v2838 = vunpack.c.h.b16 %v2662
    %v2839 = vpack.c.b16 %v2811, %v2807
    %v2840 = vpack.c.b16 %v2812, %v2808
    %v2841 = vpack.c.b16 %v2813, %v2809
    %v2842 = vpack.c.b16 %v2814, %v2810
    %v2843 = vpack.c.b16 %v2819, %v2815
    %v2844 = vpack.c.b16 %v2820, %v2816
    %v2845 = vpack.c.b16 %v2821, %v2817
    %v2846 = vpack.c.b16 %v2822, %v2818
    %v2847 = vpack.c.b16 %v2827, %v2823
    %v2848 = vpack.c.b16 %v2828, %v2824
    %v2849 = vpack.c.b16 %v2829, %v2825
    %v2850 = vpack.c.b16 %v2830, %v2826
    %v2851 = vpack.c.b16 %v2835, %v2831
    %v2852 = vpack.c.b16 %v2836, %v2832
    %v2853 = vpack.c.b16 %v2837, %v2833
    %v2854 = vpack.c.b16 %v2838, %v2834
    %2871 = vmatprep.subr.bf16.mxu0 %v2692
    %2872 = vmatpush1.bf16.msra.mxu0 %v2691
    %2873 = vmatprep.subr.bf16.mxu0 %v2688
    %2874 = vmatpush1.bf16.msra.mxu0 %v2687
    %2875 = vmatprep.subr.bf16.mxu0 %v2684
    %2876 = vmatpush1.bf16.msra.mxu0 %v2683
    %2877 = vmatprep.subr.bf16.mxu0 %v2680
    %2878 = vmatpush1.bf16.msra.mxu0 %v2679
    %2879 = vmatprep.subr.bf16.mxu0 %v2676
    %2880 = vmatpush1.bf16.msra.mxu0 %v2675
    %2881 = vmatprep.subr.bf16.mxu0 %v2672
    %2882 = vmatpush1.bf16.msra.mxu0 %v2671
    %2883 = vmatprep.subr.bf16.mxu0 %v2668
    %2884 = vmatpush1.bf16.msra.mxu0 %v2667
    %2885 = vmatprep.subr.bf16.mxu0 %v2664
    %2886 = vmatpush1.bf16.msra.mxu0 %v2663
    %2887 = vmatprep.subr.bf16.mxu0 %v2724
    %2888 = vmatpush2.bf16.msra.mxu0 %v2723
    %2889 = vmatprep.subr.bf16.mxu0 %v2720
    %2890 = vmatpush2.bf16.msra.mxu0 %v2719
    %2891 = vmatprep.subr.bf16.mxu0 %v2716
    %2892 = vmatpush2.bf16.msra.mxu0 %v2715
    %2893 = vmatprep.subr.bf16.mxu0 %v2712
    %2894 = vmatpush2.bf16.msra.mxu0 %v2711
    %2895 = vmatprep.subr.bf16.mxu0 %v2708
    %2896 = vmatpush2.bf16.msra.mxu0 %v2707
    %2897 = vmatprep.subr.bf16.mxu0 %v2704
    %2898 = vmatpush2.bf16.msra.mxu0 %v2703
    %2899 = vmatprep.subr.bf16.mxu0 %v2700
    %2900 = vmatpush2.bf16.msra.mxu0 %v2699
    %2901 = vmatprep.subr.bf16.mxu0 %v2696
    %2902 = vmatpush2.bf16.msra.mxu0 %v2695
    %2903 = vmatprep.mubr.bf16.mxu0 %v2840
    %2904 = vmatmul.mubr.bf16.gmra.mxu0 %v2839
    %v2905 = vpop.f32.mrf.mxu0
    %v2906 = vadd.f32 0.0, %v2905
    %v2907 = vpop.f32.mrf.mxu0
    %v2908 = vadd.f32 0.0, %v2907
    %v2909 = vpop.f32.mrf.mxu0
    %v2910 = vadd.f32 0.0, %v2909
    %v2911 = vpop.f32.mrf.mxu0
    %v2912 = vadd.f32 0.0, %v2911
    %2913 = vmatprep.mubr.bf16.mxu0 %v2844
    %2914 = vmatmul.mubr.bf16.gmra.mxu0 %v2843
    %v2915 = vpop.f32.mrf.mxu0
    %v2916 = vadd.f32 0.0, %v2915
    %v2917 = vpop.f32.mrf.mxu0
    %v2918 = vadd.f32 0.0, %v2917
    %v2919 = vpop.f32.mrf.mxu0
    %v2920 = vadd.f32 0.0, %v2919
    %v2921 = vpop.f32.mrf.mxu0
    %v2922 = vadd.f32 0.0, %v2921
    %2923 = vmatprep.mubr.bf16.mxu0 %v2848
    %2924 = vmatmul.mubr.bf16.gmra.mxu0 %v2847
    %v2925 = vpop.f32.mrf.mxu0
    %v2926 = vadd.f32 0.0, %v2925
    %v2927 = vpop.f32.mrf.mxu0
    %v2928 = vadd.f32 0.0, %v2927
    %v2929 = vpop.f32.mrf.mxu0
    %v2930 = vadd.f32 0.0, %v2929
    %v2931 = vpop.f32.mrf.mxu0
    %v2932 = vadd.f32 0.0, %v2931
    %2933 = vmatprep.mubr.bf16.mxu0 %v2852
    %2934 = vmatmul.mubr.bf16.gmra.mxu0 %v2851
    %v2935 = vpop.f32.mrf.mxu0
    %v2936 = vadd.f32 0.0, %v2935
    %v2937 = vpop.f32.mrf.mxu0
    %v2938 = vadd.f32 0.0, %v2937
    %v2939 = vpop.f32.mrf.mxu0
    %v2940 = vadd.f32 0.0, %v2939
    %v2941 = vpop.f32.mrf.mxu0
    %v2942 = vadd.f32 0.0, %v2941
    %2943 = vdwg.mxu0
    %2944 = vmatprep.subr.bf16.mxu0 %v2756
    %2945 = vmatpush1.bf16.msra.mxu0 %v2755
    %2946 = vmatprep.subr.bf16.mxu0 %v2752
    %2947 = vmatpush1.bf16.msra.mxu0 %v2751
    %2948 = vmatprep.subr.bf16.mxu0 %v2748
    %2949 = vmatpush1.bf16.msra.mxu0 %v2747
    %2950 = vmatprep.subr.bf16.mxu0 %v2744
    %2951 = vmatpush1.bf16.msra.mxu0 %v2743
    %2952 = vmatprep.subr.bf16.mxu0 %v2740
    %2953 = vmatpush1.bf16.msra.mxu0 %v2739
    %2954 = vmatprep.subr.bf16.mxu0 %v2736
    %2955 = vmatpush1.bf16.msra.mxu0 %v2735
    %2956 = vmatprep.subr.bf16.mxu0 %v2732
    %2957 = vmatpush1.bf16.msra.mxu0 %v2731
    %2958 = vmatprep.subr.bf16.mxu0 %v2728
    %2959 = vmatpush1.bf16.msra.mxu0 %v2727
    %2960 = vmatprep.subr.bf16.mxu0 %v2788
    %2961 = vmatpush2.bf16.msra.mxu0 %v2787
    %2962 = vmatprep.subr.bf16.mxu0 %v2784
    %2963 = vmatpush2.bf16.msra.mxu0 %v2783
    %2964 = vmatprep.subr.bf16.mxu0 %v2780
    %2965 = vmatpush2.bf16.msra.mxu0 %v2779
    %2966 = vmatprep.subr.bf16.mxu0 %v2776
    %2967 = vmatpush2.bf16.msra.mxu0 %v2775
    %2968 = vmatprep.subr.bf16.mxu0 %v2772
    %2969 = vmatpush2.bf16.msra.mxu0 %v2771
    %2970 = vmatprep.subr.bf16.mxu0 %v2768
    %2971 = vmatpush2.bf16.msra.mxu0 %v2767
    %2972 = vmatprep.subr.bf16.mxu0 %v2764
    %2973 = vmatpush2.bf16.msra.mxu0 %v2763
    %2974 = vmatprep.subr.bf16.mxu0 %v2760
    %2975 = vmatpush2.bf16.msra.mxu0 %v2759
    %2976 = vmatprep.mubr.bf16.mxu0 %v2842
    %2977 = vmatmul.mubr.bf16.gmra.mxu0 %v2841
    %v2978 = vpop.f32.mrf.mxu0
    %v2979 = vadd.f32 %v2906, %v2978
    %v2980 = vpop.f32.mrf.mxu0
    %v2981 = vadd.f32 %v2908, %v2980
    %v2982 = vpop.f32.mrf.mxu0
    %v2983 = vadd.f32 %v2910, %v2982
    %v2984 = vpop.f32.mrf.mxu0
    %v2985 = vadd.f32 %v2912, %v2984
    %2986 = vmatprep.mubr.bf16.mxu0 %v2846
    %2987 = vmatmul.mubr.bf16.gmra.mxu0 %v2845
    %v2988 = vpop.f32.mrf.mxu0
    %v2989 = vadd.f32 %v2916, %v2988
    %v2990 = vpop.f32.mrf.mxu0
    %v2991 = vadd.f32 %v2918, %v2990
    %v2992 = vpop.f32.mrf.mxu0
    %v2993 = vadd.f32 %v2920, %v2992
    %v2994 = vpop.f32.mrf.mxu0
    %v2995 = vadd.f32 %v2922, %v2994
    %2996 = vmatprep.mubr.bf16.mxu0 %v2850
    %2997 = vmatmul.mubr.bf16.gmra.mxu0 %v2849
    %v2998 = vpop.f32.mrf.mxu0
    %v2999 = vadd.f32 %v2926, %v2998
    %v3000 = vpop.f32.mrf.mxu0
    %v3001 = vadd.f32 %v2928, %v3000
    %v3002 = vpop.f32.mrf.mxu0
    %v3003 = vadd.f32 %v2930, %v3002
    %v3004 = vpop.f32.mrf.mxu0
    %v3005 = vadd.f32 %v2932, %v3004
    %3006 = vmatprep.mubr.bf16.mxu0 %v2854
    %3007 = vmatmul.mubr.bf16.gmra.mxu0 %v2853
    %v3008 = vpop.f32.mrf.mxu0
    %v3009 = vadd.f32 %v2936, %v3008
    %v3010 = vpop.f32.mrf.mxu0
    %v3011 = vadd.f32 %v2938, %v3010
    %v3012 = vpop.f32.mrf.mxu0
    %v3013 = vadd.f32 %v2940, %v3012
    %v3014 = vpop.f32.mrf.mxu0
    %v3015 = vadd.f32 %v2942, %v3014
    %3016 = vdwg.mxu0
    %3017 = vmatprep.subr.bf16.mxu0 %v2694
    %3018 = vmatpush1.bf16.msra.mxu0 %v2693
    %3019 = vmatprep.subr.bf16.mxu0 %v2690
    %3020 = vmatpush1.bf16.msra.mxu0 %v2689
    %3021 = vmatprep.subr.bf16.mxu0 %v2686
    %3022 = vmatpush1.bf16.msra.mxu0 %v2685
    %3023 = vmatprep.subr.bf16.mxu0 %v2682
    %3024 = vmatpush1.bf16.msra.mxu0 %v2681
    %3025 = vmatprep.subr.bf16.mxu0 %v2678
    %3026 = vmatpush1.bf16.msra.mxu0 %v2677
    %3027 = vmatprep.subr.bf16.mxu0 %v2674
    %3028 = vmatpush1.bf16.msra.mxu0 %v2673
    %3029 = vmatprep.subr.bf16.mxu0 %v2670
    %3030 = vmatpush1.bf16.msra.mxu0 %v2669
    %3031 = vmatprep.subr.bf16.mxu0 %v2666
    %3032 = vmatpush1.bf16.msra.mxu0 %v2665
    %3033 = vmatprep.subr.bf16.mxu0 %v2726
    %3034 = vmatpush2.bf16.msra.mxu0 %v2725
    %3035 = vmatprep.subr.bf16.mxu0 %v2722
    %3036 = vmatpush2.bf16.msra.mxu0 %v2721
    %3037 = vmatprep.subr.bf16.mxu0 %v2718
    %3038 = vmatpush2.bf16.msra.mxu0 %v2717
    %3039 = vmatprep.subr.bf16.mxu0 %v2714
    %3040 = vmatpush2.bf16.msra.mxu0 %v2713
    %3041 = vmatprep.subr.bf16.mxu0 %v2710
    %3042 = vmatpush2.bf16.msra.mxu0 %v2709
    %3043 = vmatprep.subr.bf16.mxu0 %v2706
    %3044 = vmatpush2.bf16.msra.mxu0 %v2705
    %3045 = vmatprep.subr.bf16.mxu0 %v2702
    %3046 = vmatpush2.bf16.msra.mxu0 %v2701
    %3047 = vmatprep.subr.bf16.mxu0 %v2698
    %3048 = vmatpush2.bf16.msra.mxu0 %v2697
    %3049 = vmatprep.mubr.bf16.mxu0 %v2840
    %3050 = vmatmul.mubr.bf16.gmra.mxu0 %v2839
    %v3051 = vpop.f32.mrf.mxu0
    %v3052 = vadd.f32 0.0, %v3051
    %v3053 = vpop.f32.mrf.mxu0
    %v3054 = vadd.f32 0.0, %v3053
    %v3055 = vpop.f32.mrf.mxu0
    %v3056 = vadd.f32 0.0, %v3055
    %v3057 = vpop.f32.mrf.mxu0
    %v3058 = vadd.f32 0.0, %v3057
    %3059 = vmatprep.mubr.bf16.mxu0 %v2844
    %3060 = vmatmul.mubr.bf16.gmra.mxu0 %v2843
    %v3061 = vpop.f32.mrf.mxu0
    %v3062 = vadd.f32 0.0, %v3061
    %v3063 = vpop.f32.mrf.mxu0
    %v3064 = vadd.f32 0.0, %v3063
    %v3065 = vpop.f32.mrf.mxu0
    %v3066 = vadd.f32 0.0, %v3065
    %v3067 = vpop.f32.mrf.mxu0
    %v3068 = vadd.f32 0.0, %v3067
    %3069 = vmatprep.mubr.bf16.mxu0 %v2848
    %3070 = vmatmul.mubr.bf16.gmra.mxu0 %v2847
    %v3071 = vpop.f32.mrf.mxu0
    %v3072 = vadd.f32 0.0, %v3071
    %v3073 = vpop.f32.mrf.mxu0
    %v3074 = vadd.f32 0.0, %v3073
    %v3075 = vpop.f32.mrf.mxu0
    %v3076 = vadd.f32 0.0, %v3075
    %v3077 = vpop.f32.mrf.mxu0
    %v3078 = vadd.f32 0.0, %v3077
    %3079 = vmatprep.mubr.bf16.mxu0 %v2852
    %3080 = vmatmul.mubr.bf16.gmra.mxu0 %v2851
    %v3081 = vpop.f32.mrf.mxu0
    %v3082 = vadd.f32 0.0, %v3081
    %v3083 = vpop.f32.mrf.mxu0
    %v3084 = vadd.f32 0.0, %v3083
    %v3085 = vpop.f32.mrf.mxu0
    %v3086 = vadd.f32 0.0, %v3085
    %v3087 = vpop.f32.mrf.mxu0
    %v3088 = vadd.f32 0.0, %v3087
    %3089 = vdwg.mxu0
    %3090 = vmatprep.subr.bf16.mxu0 %v2758
    %3091 = vmatpush1.bf16.msra.mxu0 %v2757
    %3092 = vmatprep.subr.bf16.mxu0 %v2754
    %3093 = vmatpush1.bf16.msra.mxu0 %v2753
    %3094 = vmatprep.subr.bf16.mxu0 %v2750
    %3095 = vmatpush1.bf16.msra.mxu0 %v2749
    %3096 = vmatprep.subr.bf16.mxu0 %v2746
    %3097 = vmatpush1.bf16.msra.mxu0 %v2745
    %3098 = vmatprep.subr.bf16.mxu0 %v2742
    %3099 = vmatpush1.bf16.msra.mxu0 %v2741
    %3100 = vmatprep.subr.bf16.mxu0 %v2738
    %3101 = vmatpush1.bf16.msra.mxu0 %v2737
    %3102 = vmatprep.subr.bf16.mxu0 %v2734
    %3103 = vmatpush1.bf16.msra.mxu0 %v2733
    %3104 = vmatprep.subr.bf16.mxu0 %v2730
    %3105 = vmatpush1.bf16.msra.mxu0 %v2729
    %3106 = vmatprep.subr.bf16.mxu0 %v2790
    %3107 = vmatpush2.bf16.msra.mxu0 %v2789
    %3108 = vmatprep.subr.bf16.mxu0 %v2786
    %3109 = vmatpush2.bf16.msra.mxu0 %v2785
    %3110 = vmatprep.subr.bf16.mxu0 %v2782
    %3111 = vmatpush2.bf16.msra.mxu0 %v2781
    %3112 = vmatprep.subr.bf16.mxu0 %v2778
    %3113 = vmatpush2.bf16.msra.mxu0 %v2777
    %3114 = vmatprep.subr.bf16.mxu0 %v2774
    %3115 = vmatpush2.bf16.msra.mxu0 %v2773
    %3116 = vmatprep.subr.bf16.mxu0 %v2770
    %3117 = vmatpush2.bf16.msra.mxu0 %v2769
    %3118 = vmatprep.subr.bf16.mxu0 %v2766
    %3119 = vmatpush2.bf16.msra.mxu0 %v2765
    %3120 = vmatprep.subr.bf16.mxu0 %v2762
    %3121 = vmatpush2.bf16.msra.mxu0 %v2761
    %3122 = vmatprep.mubr.bf16.mxu0 %v2842
    %3123 = vmatmul.mubr.bf16.gmra.mxu0 %v2841
    %v3124 = vpop.f32.mrf.mxu0
    %v3125 = vadd.f32 %v3052, %v3124
    %v3126 = vpop.f32.mrf.mxu0
    %v3127 = vadd.f32 %v3054, %v3126
    %v3128 = vpop.f32.mrf.mxu0
    %v3129 = vadd.f32 %v3056, %v3128
    %v3130 = vpop.f32.mrf.mxu0
    %v3131 = vadd.f32 %v3058, %v3130
    %3132 = vmatprep.mubr.bf16.mxu0 %v2846
    %3133 = vmatmul.mubr.bf16.gmra.mxu0 %v2845
    %v3134 = vpop.f32.mrf.mxu0
    %v3135 = vadd.f32 %v3062, %v3134
    %v3136 = vpop.f32.mrf.mxu0
    %v3137 = vadd.f32 %v3064, %v3136
    %v3138 = vpop.f32.mrf.mxu0
    %v3139 = vadd.f32 %v3066, %v3138
    %v3140 = vpop.f32.mrf.mxu0
    %v3141 = vadd.f32 %v3068, %v3140
    %3142 = vmatprep.mubr.bf16.mxu0 %v2850
    %3143 = vmatmul.mubr.bf16.gmra.mxu0 %v2849
    %v3144 = vpop.f32.mrf.mxu0
    %v3145 = vadd.f32 %v3072, %v3144
    %v3146 = vpop.f32.mrf.mxu0
    %v3147 = vadd.f32 %v3074, %v3146
    %v3148 = vpop.f32.mrf.mxu0
    %v3149 = vadd.f32 %v3076, %v3148
    %v3150 = vpop.f32.mrf.mxu0
    %v3151 = vadd.f32 %v3078, %v3150
    %3152 = vmatprep.mubr.bf16.mxu0 %v2854
    %3153 = vmatmul.mubr.bf16.gmra.mxu0 %v2853
    %v3154 = vpop.f32.mrf.mxu0
    %v3155 = vadd.f32 %v3082, %v3154
    %v3156 = vpop.f32.mrf.mxu0
    %v3157 = vadd.f32 %v3084, %v3156
    %v3158 = vpop.f32.mrf.mxu0
    %v3159 = vadd.f32 %v3086, %v3158
    %v3160 = vpop.f32.mrf.mxu0
    %v3161 = vadd.f32 %v3088, %v3160
    %3162 = vdwg.mxu0
    %v3163 = vld [vmem:[%s5] sm:$0xff]
    %v3164 = vld [vmem:[%s5 + $0x8] sm:$0xff]
    %v3165 = vld [vmem:[%s5 + $0x10] sm:$0xff]
    %v3166 = vld [vmem:[%s5 + $0x18] sm:$0xff]
    %v3167 = vld [vmem:[%s5 + $0x20] sm:$0xff]
    %v3168 = vld [vmem:[%s5 + $0x28] sm:$0xff]
    %v3169 = vld [vmem:[%s5 + $0x30] sm:$0xff]
    %v3170 = vld [vmem:[%s5 + $0x38] sm:$0xff]
    %3172 = vset.pattern.permute.xlu0 0
    %3173 = vperm.xlu0 %3172, %v3163
    %v3174 = vpop.permute.xlu0 %3173
    %3177 = vset.pattern.permute.xlu0 0
    %3178 = vperm.xlu0 %3177, %v3164
    %v3179 = vpop.permute.xlu0 %3178
    %3182 = vset.pattern.permute.xlu0 0
    %3183 = vperm.xlu0 %3182, %v3165
    %v3184 = vpop.permute.xlu0 %3183
    %3187 = vset.pattern.permute.xlu0 0
    %3188 = vperm.xlu0 %3187, %v3166
    %v3189 = vpop.permute.xlu0 %3188
    %3192 = vset.pattern.permute.xlu0 0
    %3193 = vperm.xlu0 %3192, %v3167
    %v3194 = vpop.permute.xlu0 %3193
    %3197 = vset.pattern.permute.xlu0 0
    %3198 = vperm.xlu0 %3197, %v3168
    %v3199 = vpop.permute.xlu0 %3198
    %3202 = vset.pattern.permute.xlu0 0
    %3203 = vperm.xlu0 %3202, %v3169
    %v3204 = vpop.permute.xlu0 %3203
    %3207 = vset.pattern.permute.xlu0 0
    %3208 = vperm.xlu0 %3207, %v3170
    %v3209 = vpop.permute.xlu0 %3208
    %v3211 = vmul.f32 %v2979, %v3174
    %v3212 = vmul.f32 %v2981, %v3174
    %v3213 = vmul.f32 %v3125, %v3174
    %v3214 = vmul.f32 %v3127, %v3174
    %v3215 = vmul.f32 %v2983, %v3179
    %v3216 = vmul.f32 %v2985, %v3179
    %v3217 = vmul.f32 %v3129, %v3179
    %v3218 = vmul.f32 %v3131, %v3179
    %v3219 = vmul.f32 %v2989, %v3184
    %v3220 = vmul.f32 %v2991, %v3184
    %v3221 = vmul.f32 %v3135, %v3184
    %v3222 = vmul.f32 %v3137, %v3184
    %v3223 = vmul.f32 %v2993, %v3189
    %v3224 = vmul.f32 %v2995, %v3189
    %v3225 = vmul.f32 %v3139, %v3189
    %v3226 = vmul.f32 %v3141, %v3189
    %v3227 = vmul.f32 %v2999, %v3194
    %v3228 = vmul.f32 %v3001, %v3194
    %v3229 = vmul.f32 %v3145, %v3194
    %v3230 = vmul.f32 %v3147, %v3194
    %v3231 = vmul.f32 %v3003, %v3199
    %v3232 = vmul.f32 %v3005, %v3199
    %v3233 = vmul.f32 %v3149, %v3199
    %v3234 = vmul.f32 %v3151, %v3199
    %v3235 = vmul.f32 %v3009, %v3204
    %v3236 = vmul.f32 %v3011, %v3204
    %v3237 = vmul.f32 %v3155, %v3204
    %v3238 = vmul.f32 %v3157, %v3204
    %v3239 = vmul.f32 %v3013, %v3209
    %v3240 = vmul.f32 %v3015, %v3209
    %v3241 = vmul.f32 %v3159, %v3209
    %v3242 = vmul.f32 %v3161, %v3209
    %v3243 = vld [vmem:[%s6] sm:$0xff]
    %v3244 = vld [vmem:[%s6 + $0x8] sm:$0xff]
    %v3245 = vld [vmem:[%s6 + $0x10] sm:$0xff]
    %v3246 = vld [vmem:[%s6 + $0x18] sm:$0xff]
    %v3247 = vld [vmem:[%s6 + $0x20] sm:$0xff]
    %v3248 = vld [vmem:[%s6 + $0x28] sm:$0xff]
    %v3249 = vld [vmem:[%s6 + $0x30] sm:$0xff]
    %v3250 = vld [vmem:[%s6 + $0x38] sm:$0xff]
    %3252 = vset.pattern.permute.xlu0 0
    %3253 = vperm.xlu0 %3252, %v3243
    %v3254 = vpop.permute.xlu0 %3253
    %3257 = vset.pattern.permute.xlu0 0
    %3258 = vperm.xlu0 %3257, %v3244
    %v3259 = vpop.permute.xlu0 %3258
    %3262 = vset.pattern.permute.xlu0 0
    %3263 = vperm.xlu0 %3262, %v3245
    %v3264 = vpop.permute.xlu0 %3263
    %3267 = vset.pattern.permute.xlu0 0
    %3268 = vperm.xlu0 %3267, %v3246
    %v3269 = vpop.permute.xlu0 %3268
    %3272 = vset.pattern.permute.xlu0 0
    %3273 = vperm.xlu0 %3272, %v3247
    %v3274 = vpop.permute.xlu0 %3273
    %3277 = vset.pattern.permute.xlu0 0
    %3278 = vperm.xlu0 %3277, %v3248
    %v3279 = vpop.permute.xlu0 %3278
    %3282 = vset.pattern.permute.xlu0 0
    %3283 = vperm.xlu0 %3282, %v3249
    %v3284 = vpop.permute.xlu0 %3283
    %3287 = vset.pattern.permute.xlu0 0
    %3288 = vperm.xlu0 %3287, %v3250
    %v3289 = vpop.permute.xlu0 %3288
    %v3291 = vadd.f32 %v3211, %v3254
    %v3292 = vadd.f32 %v3212, %v3254
    %v3293 = vadd.f32 %v3213, %v3254
    %v3294 = vadd.f32 %v3214, %v3254
    %v3295 = vadd.f32 %v3215, %v3259
    %v3296 = vadd.f32 %v3216, %v3259
    %v3297 = vadd.f32 %v3217, %v3259
    %v3298 = vadd.f32 %v3218, %v3259
    %v3299 = vadd.f32 %v3219, %v3264
    %v3300 = vadd.f32 %v3220, %v3264
    %v3301 = vadd.f32 %v3221, %v3264
    %v3302 = vadd.f32 %v3222, %v3264
    %v3303 = vadd.f32 %v3223, %v3269
    %v3304 = vadd.f32 %v3224, %v3269
    %v3305 = vadd.f32 %v3225, %v3269
    %v3306 = vadd.f32 %v3226, %v3269
    %v3307 = vadd.f32 %v3227, %v3274
    %v3308 = vadd.f32 %v3228, %v3274
    %v3309 = vadd.f32 %v3229, %v3274
    %v3310 = vadd.f32 %v3230, %v3274
    %v3311 = vadd.f32 %v3231, %v3279
    %v3312 = vadd.f32 %v3232, %v3279
    %v3313 = vadd.f32 %v3233, %v3279
    %v3314 = vadd.f32 %v3234, %v3279
    %v3315 = vadd.f32 %v3235, %v3284
    %v3316 = vadd.f32 %v3236, %v3284
    %v3317 = vadd.f32 %v3237, %v3284
    %v3318 = vadd.f32 %v3238, %v3284
    %v3319 = vadd.f32 %v3239, %v3289
    %v3320 = vadd.f32 %v3240, %v3289
    %v3321 = vadd.f32 %v3241, %v3289
    %v3322 = vadd.f32 %v3242, %v3289
    %v3323 = vmax.f32 %v3291, 0.0
    %v3324 = vmax.f32 %v3292, 0.0
    %v3325 = vmax.f32 %v3293, 0.0
    %v3326 = vmax.f32 %v3294, 0.0
    %v3327 = vmax.f32 %v3295, 0.0
    %v3328 = vmax.f32 %v3296, 0.0
    %v3329 = vmax.f32 %v3297, 0.0
    %v3330 = vmax.f32 %v3298, 0.0
    %v3331 = vmax.f32 %v3299, 0.0
    %v3332 = vmax.f32 %v3300, 0.0
    %v3333 = vmax.f32 %v3301, 0.0
    %v3334 = vmax.f32 %v3302, 0.0
    %v3335 = vmax.f32 %v3303, 0.0
    %v3336 = vmax.f32 %v3304, 0.0
    %v3337 = vmax.f32 %v3305, 0.0
    %v3338 = vmax.f32 %v3306, 0.0
    %v3339 = vmax.f32 %v3307, 0.0
    %v3340 = vmax.f32 %v3308, 0.0
    %v3341 = vmax.f32 %v3309, 0.0
    %v3342 = vmax.f32 %v3310, 0.0
    %v3343 = vmax.f32 %v3311, 0.0
    %v3344 = vmax.f32 %v3312, 0.0
    %v3345 = vmax.f32 %v3313, 0.0
    %v3346 = vmax.f32 %v3314, 0.0
    %v3347 = vmax.f32 %v3315, 0.0
    %v3348 = vmax.f32 %v3316, 0.0
    %v3349 = vmax.f32 %v3317, 0.0
    %v3350 = vmax.f32 %v3318, 0.0
    %v3351 = vmax.f32 %v3319, 0.0
    %v3352 = vmax.f32 %v3320, 0.0
    %v3353 = vmax.f32 %v3321, 0.0
    %v3354 = vmax.f32 %v3322, 0.0
    %v3355 = vld [vmem:[%s7] sm:$0xff]
    %v3356 = vld [vmem:[%s7 + $0x8] sm:$0xff]
    %v3357 = vld [vmem:[%s7 + $0x10] sm:$0xff]
    %v3358 = vld [vmem:[%s7 + $0x18] sm:$0xff]
    %v3359 = vld [vmem:[%s7 + $0x20] sm:$0xff]
    %v3360 = vld [vmem:[%s7 + $0x28] sm:$0xff]
    %v3361 = vld [vmem:[%s7 + $0x30] sm:$0xff]
    %v3362 = vld [vmem:[%s7 + $0x38] sm:$0xff]
    %3364 = vset.pattern.permute.xlu0 0
    %3365 = vperm.xlu0 %3364, %v3355
    %v3366 = vpop.permute.xlu0 %3365
    %3369 = vset.pattern.permute.xlu0 0
    %3370 = vperm.xlu0 %3369, %v3356
    %v3371 = vpop.permute.xlu0 %3370
    %3374 = vset.pattern.permute.xlu0 0
    %3375 = vperm.xlu0 %3374, %v3357
    %v3376 = vpop.permute.xlu0 %3375
    %3379 = vset.pattern.permute.xlu0 0
    %3380 = vperm.xlu0 %3379, %v3358
    %v3381 = vpop.permute.xlu0 %3380
    %3384 = vset.pattern.permute.xlu0 0
    %3385 = vperm.xlu0 %3384, %v3359
    %v3386 = vpop.permute.xlu0 %3385
    %3389 = vset.pattern.permute.xlu0 0
    %3390 = vperm.xlu0 %3389, %v3360
    %v3391 = vpop.permute.xlu0 %3390
    %3394 = vset.pattern.permute.xlu0 0
    %3395 = vperm.xlu0 %3394, %v3361
    %v3396 = vpop.permute.xlu0 %3395
    %3399 = vset.pattern.permute.xlu0 0
    %3400 = vperm.xlu0 %3399, %v3362
    %v3401 = vpop.permute.xlu0 %3400
    %v3403 = vmul.f32 %v3323, %v3366
    %v3404 = vmul.f32 %v3324, %v3366
    %v3405 = vmul.f32 %v3325, %v3366
    %v3406 = vmul.f32 %v3326, %v3366
    %v3407 = vmul.f32 %v3327, %v3371
    %v3408 = vmul.f32 %v3328, %v3371
    %v3409 = vmul.f32 %v3329, %v3371
    %v3410 = vmul.f32 %v3330, %v3371
    %v3411 = vmul.f32 %v3331, %v3376
    %v3412 = vmul.f32 %v3332, %v3376
    %v3413 = vmul.f32 %v3333, %v3376
    %v3414 = vmul.f32 %v3334, %v3376
    %v3415 = vmul.f32 %v3335, %v3381
    %v3416 = vmul.f32 %v3336, %v3381
    %v3417 = vmul.f32 %v3337, %v3381
    %v3418 = vmul.f32 %v3338, %v3381
    %v3419 = vmul.f32 %v3339, %v3386
    %v3420 = vmul.f32 %v3340, %v3386
    %v3421 = vmul.f32 %v3341, %v3386
    %v3422 = vmul.f32 %v3342, %v3386
    %v3423 = vmul.f32 %v3343, %v3391
    %v3424 = vmul.f32 %v3344, %v3391
    %v3425 = vmul.f32 %v3345, %v3391
    %v3426 = vmul.f32 %v3346, %v3391
    %v3427 = vmul.f32 %v3347, %v3396
    %v3428 = vmul.f32 %v3348, %v3396
    %v3429 = vmul.f32 %v3349, %v3396
    %v3430 = vmul.f32 %v3350, %v3396
    %v3431 = vmul.f32 %v3351, %v3401
    %v3432 = vmul.f32 %v3352, %v3401
    %v3433 = vmul.f32 %v3353, %v3401
    %v3434 = vmul.f32 %v3354, %v3401
    %v3435 = vadd.f32 %v3403, %v3407
    %v3436 = vadd.f32 %v3435, %v3411
    %v3437 = vadd.f32 %v3436, %v3415
    %v3438 = vadd.f32 %v3437, %v3419
    %v3439 = vadd.f32 %v3438, %v3423
    %v3440 = vadd.f32 %v3439, %v3427
    %v3441 = vadd.f32 %v3440, %v3431
    %v3442 = vrot.slane %v3441, 4
    %v3443 = vadd.f32 %v3441, %v3442
    %v3444 = vrot.slane %v3443, 2
    %v3445 = vadd.f32 %v3443, %v3444
    %v3446 = vrot.slane %v3445, 1
    %v3447 = vadd.f32 %v3445, %v3446
    %v3448 = vadd.f32 %v3404, %v3408
    %v3449 = vadd.f32 %v3448, %v3412
    %v3450 = vadd.f32 %v3449, %v3416
    %v3451 = vadd.f32 %v3450, %v3420
    %v3452 = vadd.f32 %v3451, %v3424
    %v3453 = vadd.f32 %v3452, %v3428
    %v3454 = vadd.f32 %v3453, %v3432
    %v3455 = vrot.slane %v3454, 4
    %v3456 = vadd.f32 %v3454, %v3455
    %v3457 = vrot.slane %v3456, 2
    %v3458 = vadd.f32 %v3456, %v3457
    %v3459 = vrot.slane %v3458, 1
    %v3460 = vadd.f32 %v3458, %v3459
    %v3461 = vadd.f32 %v3405, %v3409
    %v3462 = vadd.f32 %v3461, %v3413
    %v3463 = vadd.f32 %v3462, %v3417
    %v3464 = vadd.f32 %v3463, %v3421
    %v3465 = vadd.f32 %v3464, %v3425
    %v3466 = vadd.f32 %v3465, %v3429
    %v3467 = vadd.f32 %v3466, %v3433
    %v3468 = vrot.slane %v3467, 4
    %v3469 = vadd.f32 %v3467, %v3468
    %v3470 = vrot.slane %v3469, 2
    %v3471 = vadd.f32 %v3469, %v3470
    %v3472 = vrot.slane %v3471, 1
    %v3473 = vadd.f32 %v3471, %v3472
    %v3474 = vadd.f32 %v3406, %v3410
    %v3475 = vadd.f32 %v3474, %v3414
    %v3476 = vadd.f32 %v3475, %v3418
    %v3477 = vadd.f32 %v3476, %v3422
    %v3478 = vadd.f32 %v3477, %v3426
    %v3479 = vadd.f32 %v3478, %v3430
    %v3480 = vadd.f32 %v3479, %v3434
    %v3481 = vrot.slane %v3480, 4
    %v3482 = vadd.f32 %v3480, %v3481
    %v3483 = vrot.slane %v3482, 2
    %v3484 = vadd.f32 %v3482, %v3483
    %v3485 = vrot.slane %v3484, 1
    %v3486 = vadd.f32 %v3484, %v3485
    %v3487 = vld [vmem:[#allocation2] sm:$0x1]
    %3489 = vset.pattern.permute.xlu0 0
    %3490 = vperm.xlu0 %3489, %v3487
    %v3491 = vpop.permute.xlu0 %3490
    %v3493 = vlaneseq
    %v3494 = vshrl.u32 %v3493, 7
    %v3495 = vsub.s32 0, %v3494
    %v3496 = vrot.slane %v3491, %v3495
    %v3497 = vadd.f32 %v3447, %v3496
    %v3498 = vadd.f32 %v3460, %v3496
    %v3499 = vadd.f32 %v3473, %v3496
    %v3500 = vadd.f32 %v3486, %v3496
    %v3501 = vmax.f32 %v3497, 0.0
    %v3502 = vmax.f32 %v3498, 0.0
    %v3503 = vmax.f32 %v3499, 0.0
    %v3504 = vmax.f32 %v3500, 0.0
    %v3505 = vadd.f32 %v3501, 1e-06
    %v3506 = vadd.f32 %v3502, 1e-06
    %v3507 = vadd.f32 %v3503, 1e-06
    %v3508 = vadd.f32 %v3504, 1e-06
    %v3513 = vcombine.low %v3505, %v3506
    %v3514 = vcombine.low %v3507, %v3508
    %v3516 = vunpack.c.l.s4 1966171168
    %v3517 = vunpack.c.0.s8 %v3516
    %v3518 = vlaneseq
    %v3519 = vshrl.u32 %v3518, 7
    %v3520 = vsub.s32 %v3517, %v3519
    %v3521 = vrot.slane %v3513, %v3520
    %v3523 = vunpack.c.l.s4 1966171168
    %v3524 = vunpack.c.0.s8 %v3523
    %v3525 = vlaneseq
    %v3526 = vshrl.u32 %v3525, 7
    %v3527 = vsub.s32 %v3524, %v3526
    %v3528 = vrot.slane %v3514, %v3527
    %v3529 = vcombine.low %v3521, %v3528
    %v3531 = vunpack.c.l.s4 1966171168
    %v3532 = vunpack.c.0.s8 %v3531
    %v3533 = vlaneseq
    %v3534 = vshrl.u32 %v3533, 7
    %v3535 = vsub.s32 %v3532, %v3534
    %v3536 = vrot.slane %v3529, %v3535
    %v3538 = vlaneseq
    %vm3539 = vcmp.ge.s32.totalorder %v3538, 0
    %vm3540 = vcmp.lt.s32.totalorder %v3538, 512
    %vm3541 = vmand %vm3539, %vm3540
    %3542 = vst.msk [vmem:[#allocation3] sm:$0xf] %vm3541, %v3536
    // Predicated region
    $region38: #{tpu_custom_call.1} parent=1 // pred_check
      _
    $region39: #{tpu_custom_call.1} parent=1 // pred_check_branch
      %3544 = sbr.rel (0) target = $region41
    $region40: #{tpu_custom_call.1} parent=1 // pred_region
      %s3546 = ssub.s32 64, 64
      %3547 = vsyncadd [#allocation4], %s3546
      %s3549 = sshll.u32 [#allocation3], 4
      %s3550 = int_to_ptr.vmem [resolvable:$true] %s3549
      %3552 = dma.vmem_to_hbm [thread:$0]  %s3550, 64, %s9, [#allocation4]
    $region41: #{tpu_custom_call.1} parent=1 // pred_fallthru
      _
    // Predicated region
    $region42: #{tpu_custom_call.1} parent=1 // pred_check
      _
    $region43: #{tpu_custom_call.1} parent=1 // pred_check_branch
      %3554 = sbr.rel (0) target = $region45
    $region44: #{tpu_custom_call.1} parent=1 // pred_region
      %3555 = dma.done [#allocation4], 64
    $region45: #{tpu_custom_call.1} parent=1 // pred_fallthru
      _
    %3556 = vsyncpa [#allocation4], 1

</llo_original>
